<compile_context>
chip_gen: v6e
topology: v6e:2x2x1
jax: 0.10.0
libtpu: 0.0.40
codegen_flags: <defaults>
</compile_context>

<pallas_src>
import functools

import jax
import jax.numpy as jnp
from jax.experimental import pallas as pl
from jax.experimental.pallas import tpu as pltpu

# Explicit scoped-VMEM limit: leaves headroom under v7x's 64 MiB physical VMEM
# and is far below v5e/v6e's 128 MiB (review item on per-generation sizing).
_VMEM_LIMIT_BYTES = 48 * 1024 * 1024


# -----------------------------------------------------------------------------
# Kernel 1: random-walk normalization, computed ONCE per forward step.
#   adj_t[b] = (D^{-1} (A_b + I))^T ,   D = rowsum(A_b + I)
# -----------------------------------------------------------------------------
def _rw_norm_kernel(adj_ref, out_ref):
    a = adj_ref[...]                                          # (B, N, N)
    n = a.shape[-1]
    # rowsum(A + I) without materializing the identity matrix.
    d = jnp.sum(a, axis=2, keepdims=True) + 1.0               # (B, N, 1)
    d_inv = jnp.where(d != 0.0, 1.0 / d, jnp.zeros_like(d))   # exact division
    rows = jax.lax.broadcasted_iota(jnp.int32, (n, n), 0)
    cols = jax.lax.broadcasted_iota(jnp.int32, (n, n), 1)
    diag = jnp.where((rows == cols)[None], d_inv, 0.0)        # D^{-1} I
    m = d_inv * a + diag                                      # D^{-1}(A + I)
    out_ref[...] = jnp.swapaxes(m, 1, 2)                      # reference's .t()


def normalize_adj(adj):
    B, N, _ = adj.shape
    vmem = pl.BlockSpec(memory_space=pltpu.MemorySpace.VMEM)
    return pl.pallas_call(
        _rw_norm_kernel,
        out_shape=jax.ShapeDtypeStruct((B, N, N), jnp.float32),
        in_specs=[vmem],
        out_specs=vmem,
        compiler_params=pltpu.CompilerParams(
            vmem_limit_bytes=_VMEM_LIMIT_BYTES),
    )(adj)


# -----------------------------------------------------------------------------
# Kernel 2: fused DCGRU cell, one pallas_call per layer, grid over the batch.
# -----------------------------------------------------------------------------
def _dcgru_layer_kernel(adj_ref, adj_last_ref, inp_ref, hx_ref, state_ref,
                        wgi_ref, wgs_ref, bg_ref, wci_ref, wcs_ref, bc_ref,
                        out_ref, *, num_matrices):
    f32 = jnp.float32
    K = num_matrices
    _, N, _ = inp_ref.shape
    U = hx_ref.shape[2]

    adj_b = adj_ref[0]            # (N, N)    this sample's (D^{-1}(A+I))^T
    adj_last = adj_last_ref[...]  # (N, N)    LAST sample's matrix (ref quirk)
    inp_b = inp_ref[0]            # (N, Di)
    hx_b = hx_ref[0]              # (N, U)
    state_full = state_ref[...]   # (N, B*U)  full-batch hidden view (ref quirk)

    def gconv_acc(adj, x0, w_ref, acc):
        """acc += sum_k T_k(adj) x0 @ w_ref[k]; only 2 diffusion terms live."""
        acc = acc + jnp.dot(x0, w_ref[0], preferred_element_type=f32)
        if K > 1:
            x1 = jnp.dot(adj, x0, preferred_element_type=f32)
            acc = acc + jnp.dot(x1, w_ref[1], preferred_element_type=f32)
            x_prev, x_cur = x0, x1
            for k in range(2, K):
                x_next = (2.0 * jnp.dot(adj, x_cur, preferred_element_type=f32)
                          - x_prev)
                acc = acc + jnp.dot(x_next, w_ref[k], preferred_element_type=f32)
                x_prev, x_cur = x_cur, x_next
        return acc

    # ---- reset / update gates: fused single 2U-wide accumulator -------------
    g = gconv_acc(adj_b, inp_b, wgi_ref, jnp.zeros((N, 2 * U), f32))
    g = gconv_acc(adj_b, state_full, wgs_ref, g)
    gates = jax.nn.sigmoid(g + bg_ref[...])                   # (N, 2U)
    r = gates[:, :U]
    u = gates[:, U:]

    # ---- candidate state: reference reuses the LAST sample's adjacency ------
    c = gconv_acc(adj_last, inp_b, wci_ref, jnp.zeros((N, U), f32))
    c = gconv_acc(adj_last, r * hx_b, wcs_ref, c)
    c = jnp.tanh(c + bc_ref[...])                             # (N, U)

    # ---- fused GRU update ----------------------------------------------------
    out_ref[0] = u * hx_b + (1.0 - u) * c


def dcgru_cell(lp, inputs, hx, adj_t, adj_t_last, *, num_nodes, rnn_units,
               max_diffusion_step):
    """One DCGRU cell step. inputs (B, N*Di), hx (B, N*U), adj_t (B, N, N)."""
    B = inputs.shape[0]
    N, U = num_nodes, rnn_units
    K = max_diffusion_step + 1
    Di = inputs.shape[1] // N

    # Metadata-only reshapes in the wrapper (no O(B^2) broadcast materialized).
    inp3 = inputs.reshape(B, N, Di)
    hx3 = hx.reshape(B, N, U)
    # Reference quirk: gate gconv of every sample sees the full-batch hidden
    # state via a flat-order regroup (B, N*U) -> (N, B*U) (torch.reshape).
    state_full = hx.reshape(N, B * U)

    per_sample_3d = lambda b: (b, 0, 0)
    shared_2d = lambda b: (0, 0)
    shared_3d = lambda b: (0, 0, 0)

    out3 = pl.pallas_call(
        functools.partial(_dcgru_layer_kernel, num_matrices=K),
        grid=(B,),
        in_specs=[
            pl.BlockSpec((1, N, N), per_sample_3d),        # per-sample adj_t
            pl.BlockSpec((N, N), shared_2d),               # last sample's adj_t
            pl.BlockSpec((1, N, Di), per_sample_3d),       # per-sample inputs
            pl.BlockSpec((1, N, U), per_sample_3d),        # per-sample hidden
            pl.BlockSpec((N, B * U), shared_2d),           # shared full-batch state
            pl.BlockSpec(lp["wg_in"].shape, shared_3d),    # gate W, input rows
            pl.BlockSpec(lp["wg_st"].shape, shared_3d),    # gate W, state rows
            pl.BlockSpec((1, 2 * U), shared_2d),           # gate bias (1.0)
            pl.BlockSpec(lp["wc_in"].shape, shared_3d),    # cand W, input rows
            pl.BlockSpec(lp["wc_st"].shape, shared_3d),    # cand W, state rows
            pl.BlockSpec((1, U), shared_2d),               # cand bias (0.0)
        ],
        out_specs=pl.BlockSpec((1, N, U), per_sample_3d),
        out_shape=jax.ShapeDtypeStruct((B, N, U), jnp.float32),
        compiler_params=pltpu.CompilerParams(
            dimension_semantics=("parallel",),
            vmem_limit_bytes=_VMEM_LIMIT_BYTES),
    )(adj_t, adj_t_last, inp3, hx3, state_full,
      lp["wg_in"], lp["wg_st"], lp["bg"], lp["wc_in"], lp["wc_st"], lp["bc"])
    return out3.reshape(B, N * U)


# -----------------------------------------------------------------------------
# EncoderModel forward
# -----------------------------------------------------------------------------
def encoder_forward(params, inputs, adj, hidden_state=None, *, num_nodes,
                    rnn_units, max_diffusion_step):
    B = inputs.shape[0]
    num_layers = len(params["layers"])
    if hidden_state is None:
        hidden_state = jnp.zeros((num_layers, B, num_nodes * rnn_units),
                                 jnp.float32)
    # Hoisted: normalized/transposed adjacency is computed ONCE per forward
    # step and shared by every layer (review item 1).
    adj_t = normalize_adj(adj.astype(jnp.float32))
    adj_t_last = adj_t[B - 1]    # reference leaks the last sample's matrix

    output = inputs
    hidden_states = []
    for l, lp in enumerate(params["layers"]):
        nh = dcgru_cell(lp, output, hidden_state[l], adj_t, adj_t_last,
                        num_nodes=num_nodes, rnn_units=rnn_units,
                        max_diffusion_step=max_diffusion_step)
        hidden_states.append(nh)
        output = nh
    return output, jnp.stack(hidden_states)


# -----------------------------------------------------------------------------
# Deterministic parameter init (xavier-normal weights, constant biases), with a
# ONE-TIME re-layout into (K, D, O) slabs split by feature block so the kernel
# never permutes activations:  W_ref[(d*K + k), o]  ->  W[k, d, o].
# r/u outputs stay fused as 2U columns (review item 5).
# -----------------------------------------------------------------------------
def xavier_normal(key, shape):
    fan_in, fan_out = shape
    std = (2.0 / (fan_in + fan_out)) ** 0.5
    return std * jax.random.normal(key, shape, dtype=jnp.float32)


def init_encoder_params(key, *, num_rnn_layers, num_nodes, rnn_units, input_dim,
                        max_diffusion_step, batch_size):
    K = max_diffusion_step + 1
    U = rnn_units
    layers = []
    for l in range(num_rnn_layers):
        Di = input_dim if l == 0 else rnn_units
        Dg = Di + batch_size * U      # gate gconv folds the full-batch hidden in
        Dc = Di + U
        key, k1, k2 = jax.random.split(key, 3)
        # Reference parameter layout: rows indexed (d*K + k).
        W_gate = xavier_normal(k1, (Dg * K, 2 * U))
        W_cand = xavier_normal(k2, (Dc * K, U))
        Wg = W_gate.reshape(Dg, K, 2 * U).transpose(1, 0, 2)   # (K, Dg, 2U)
        Wc = W_cand.reshape(Dc, K, U).transpose(1, 0, 2)       # (K, Dc, U)
        layers.append(dict(
            wg_in=Wg[:, :Di, :],                 # (K, Di,   2U)
            wg_st=Wg[:, Di:, :],                 # (K, B*U,  2U)
            bg=jnp.full((1, 2 * U), 1.0, jnp.float32),   # bias_start = 1.0
            wc_in=Wc[:, :Di, :],                 # (K, Di,   U)
            wc_st=Wc[:, Di:, :],                 # (K, U,    U)
            bc=jnp.zeros((1, U), jnp.float32),           # bias_start = 0.0
        ))
    return dict(layers=layers)


if __name__ == "__main__":
    # Small, module-consistent shapes.
    B = 2
    NUM_NODES = 8
    RNN_UNITS = 16
    INPUT_DIM = 2
    MAX_DIFFUSION_STEP = 2
    NUM_RNN_LAYERS = 2

    key = jax.random.PRNGKey(0)
    k_in, k_adj, k_hid, k_par = jax.random.split(key, 4)

    inputs = jax.random.normal(k_in, (B, NUM_NODES * INPUT_DIM),
                               dtype=jnp.float32)
    adj = jax.random.uniform(k_adj, (B, NUM_NODES, NUM_NODES),
                             dtype=jnp.float32)
    hidden = 0.1 * jax.random.normal(
        k_hid, (NUM_RNN_LAYERS, B, NUM_NODES * RNN_UNITS), dtype=jnp.float32)

    params = init_encoder_params(
        k_par, num_rnn_layers=NUM_RNN_LAYERS, num_nodes=NUM_NODES,
        rnn_units=RNN_UNITS, input_dim=INPUT_DIM,
        max_diffusion_step=MAX_DIFFUSION_STEP, batch_size=B)

    fwd = jax.jit(functools.partial(
        encoder_forward, num_nodes=NUM_NODES, rnn_units=RNN_UNITS,
        max_diffusion_step=MAX_DIFFUSION_STEP))

    out, new_hidden = fwd(params, inputs, adj, hidden)
    jax.block_until_ready((out, new_hidden))

    assert out.shape == (B, NUM_NODES * RNN_UNITS)
    assert new_hidden.shape == (NUM_RNN_LAYERS, B, NUM_NODES * RNN_UNITS)
    assert bool(jnp.all(jnp.isfinite(out)))
    assert bool(jnp.all(jnp.isfinite(new_hidden)))
    print("KERNEL_OK")
</pallas_src>

<mosaic_0001>
module attributes {stable_mosaic.version = 11 : i64} {
  func.func @_dcgru_layer_kernel(%arg0: i32, %arg1: memref<1x8x8xf32, #tpu.memory_space<vmem>>, %arg2: memref<8x8xf32, #tpu.memory_space<vmem>>, %arg3: memref<1x8x2xf32, #tpu.memory_space<vmem>>, %arg4: memref<1x8x16xf32, #tpu.memory_space<vmem>>, %arg5: memref<8x32xf32, #tpu.memory_space<vmem>>, %arg6: memref<3x2x32xf32, #tpu.memory_space<vmem>>, %arg7: memref<3x32x32xf32, #tpu.memory_space<vmem>>, %arg8: memref<1x32xf32, #tpu.memory_space<vmem>>, %arg9: memref<3x2x16xf32, #tpu.memory_space<vmem>>, %arg10: memref<3x16x16xf32, #tpu.memory_space<vmem>>, %arg11: memref<1x16xf32, #tpu.memory_space<vmem>>, %arg12: memref<1x8x16xf32, #tpu.memory_space<vmem>>) attributes {dimension_semantics = [#tpu.dimension_semantics<parallel>], iteration_bounds = array<i64: 2>, scalar_prefetch = 0 : i64, scratch_operands = 0 : i64, tpu.core_type = #tpu.core_type<tc>, window_params = [{transform_indices = @transform_0, window_bounds = array<i64: 1, 8, 8>}, {pipeline_mode = #tpu.pipeline_mode<synchronous>, transform_indices = @transform_1, window_bounds = array<i64: 8, 8>}, {transform_indices = @transform_2, window_bounds = array<i64: 1, 8, 2>}, {transform_indices = @transform_3, window_bounds = array<i64: 1, 8, 16>}, {pipeline_mode = #tpu.pipeline_mode<synchronous>, transform_indices = @transform_4, window_bounds = array<i64: 8, 32>}, {pipeline_mode = #tpu.pipeline_mode<synchronous>, transform_indices = @transform_5, window_bounds = array<i64: 3, 2, 32>}, {pipeline_mode = #tpu.pipeline_mode<synchronous>, transform_indices = @transform_6, window_bounds = array<i64: 3, 32, 32>}, {pipeline_mode = #tpu.pipeline_mode<synchronous>, transform_indices = @transform_7, window_bounds = array<i64: 1, 32>}, {pipeline_mode = #tpu.pipeline_mode<synchronous>, transform_indices = @transform_8, window_bounds = array<i64: 3, 2, 16>}, {pipeline_mode = #tpu.pipeline_mode<synchronous>, transform_indices = @transform_9, window_bounds = array<i64: 3, 16, 16>}, {pipeline_mode = #tpu.pipeline_mode<synchronous>, transform_indices = @transform_10, window_bounds = array<i64: 1, 16>}, {transform_indices = @transform_11, window_bounds = array<i64: 1, 8, 16>}]} {
    %c0 = arith.constant 0 : index
    %c0_0 = arith.constant 0 : index
    %c0_1 = arith.constant 0 : index
    %0 = vector.load %arg1[%c0, %c0_0, %c0_1] : memref<1x8x8xf32, #tpu.memory_space<vmem>>, vector<1x8x8xf32>
    %1 = vector.shape_cast %0 : vector<1x8x8xf32> to vector<8x8xf32>
    %c0_2 = arith.constant 0 : index
    %c0_3 = arith.constant 0 : index
    %2 = vector.load %arg2[%c0_2, %c0_3] : memref<8x8xf32, #tpu.memory_space<vmem>>, vector<8x8xf32>
    %c0_4 = arith.constant 0 : index
    %c0_5 = arith.constant 0 : index
    %c0_6 = arith.constant 0 : index
    %3 = vector.load %arg3[%c0_4, %c0_5, %c0_6] : memref<1x8x2xf32, #tpu.memory_space<vmem>>, vector<1x8x2xf32>
    %4 = vector.shape_cast %3 : vector<1x8x2xf32> to vector<8x2xf32>
    %c0_7 = arith.constant 0 : index
    %c0_8 = arith.constant 0 : index
    %c0_9 = arith.constant 0 : index
    %5 = vector.load %arg4[%c0_7, %c0_8, %c0_9] : memref<1x8x16xf32, #tpu.memory_space<vmem>>, vector<1x8x16xf32>
    %6 = vector.shape_cast %5 : vector<1x8x16xf32> to vector<8x16xf32>
    %c0_10 = arith.constant 0 : index
    %c0_11 = arith.constant 0 : index
    %7 = vector.load %arg5[%c0_10, %c0_11] : memref<8x32xf32, #tpu.memory_space<vmem>>, vector<8x32xf32>
    %cst = arith.constant 0.000000e+00 : f32
    %8 = vector.broadcast %cst : f32 to vector<8x32xf32>
    %c0_12 = arith.constant 0 : index
    %c0_13 = arith.constant 0 : index
    %c0_14 = arith.constant 0 : index
    %9 = vector.load %arg6[%c0_12, %c0_13, %c0_14] : memref<3x2x32xf32, #tpu.memory_space<vmem>>, vector<1x2x32xf32>
    %10 = vector.shape_cast %9 : vector<1x2x32xf32> to vector<2x32xf32>
    %cst_15 = arith.constant dense<0.000000e+00> : vector<8x32xf32>
    %11 = tpu.matmul %4, %10, %cst_15 {dimension_numbers = #tpu.dot_dimension_numbers<[1], [0], [0], [1], [0, 0, 1, 1], [], []>} : vector<8x2xf32>, vector<2x32xf32>, vector<8x32xf32> -> vector<8x32xf32>
    %12 = arith.addf %8, %11 : vector<8x32xf32>
    %cst_16 = arith.constant dense<0.000000e+00> : vector<8x2xf32>
    %13 = tpu.matmul %1, %4, %cst_16 {dimension_numbers = #tpu.dot_dimension_numbers<[1], [0], [0], [1], [0, 0, 1, 1], [], []>} : vector<8x8xf32>, vector<8x2xf32>, vector<8x2xf32> -> vector<8x2xf32>
    %c1 = arith.constant 1 : index
    %c0_17 = arith.constant 0 : index
    %c0_18 = arith.constant 0 : index
    %14 = vector.load %arg6[%c1, %c0_17, %c0_18] : memref<3x2x32xf32, #tpu.memory_space<vmem>>, vector<1x2x32xf32>
    %15 = vector.shape_cast %14 : vector<1x2x32xf32> to vector<2x32xf32>
    %cst_19 = arith.constant dense<0.000000e+00> : vector<8x32xf32>
    %16 = tpu.matmul %13, %15, %cst_19 {dimension_numbers = #tpu.dot_dimension_numbers<[1], [0], [0], [1], [0, 0, 1, 1], [], []>} : vector<8x2xf32>, vector<2x32xf32>, vector<8x32xf32> -> vector<8x32xf32>
    %17 = arith.addf %12, %16 : vector<8x32xf32>
    %cst_20 = arith.constant dense<0.000000e+00> : vector<8x2xf32>
    %18 = tpu.matmul %1, %13, %cst_20 {dimension_numbers = #tpu.dot_dimension_numbers<[1], [0], [0], [1], [0, 0, 1, 1], [], []>} : vector<8x8xf32>, vector<8x2xf32>, vector<8x2xf32> -> vector<8x2xf32>
    %cst_21 = arith.constant 2.000000e+00 : f32
    %19 = vector.broadcast %cst_21 : f32 to vector<8x2xf32>
    %20 = arith.mulf %19, %18 : vector<8x2xf32>
    %21 = arith.subf %20, %4 : vector<8x2xf32>
    %c2 = arith.constant 2 : index
    %c0_22 = arith.constant 0 : index
    %c0_23 = arith.constant 0 : index
    %22 = vector.load %arg6[%c2, %c0_22, %c0_23] : memref<3x2x32xf32, #tpu.memory_space<vmem>>, vector<1x2x32xf32>
    %23 = vector.shape_cast %22 : vector<1x2x32xf32> to vector<2x32xf32>
    %cst_24 = arith.constant dense<0.000000e+00> : vector<8x32xf32>
    %24 = tpu.matmul %21, %23, %cst_24 {dimension_numbers = #tpu.dot_dimension_numbers<[1], [0], [0], [1], [0, 0, 1, 1], [], []>} : vector<8x2xf32>, vector<2x32xf32>, vector<8x32xf32> -> vector<8x32xf32>
    %25 = arith.addf %17, %24 : vector<8x32xf32>
    %c0_25 = arith.constant 0 : index
    %c0_26 = arith.constant 0 : index
    %c0_27 = arith.constant 0 : index
    %26 = vector.load %arg7[%c0_25, %c0_26, %c0_27] : memref<3x32x32xf32, #tpu.memory_space<vmem>>, vector<1x32x32xf32>
    %27 = vector.shape_cast %26 : vector<1x32x32xf32> to vector<32x32xf32>
    %cst_28 = arith.constant dense<0.000000e+00> : vector<8x32xf32>
    %28 = tpu.matmul %7, %27, %cst_28 {dimension_numbers = #tpu.dot_dimension_numbers<[1], [0], [0], [1], [0, 0, 1, 1], [], []>} : vector<8x32xf32>, vector<32x32xf32>, vector<8x32xf32> -> vector<8x32xf32>
    %29 = arith.addf %25, %28 : vector<8x32xf32>
    %cst_29 = arith.constant dense<0.000000e+00> : vector<8x32xf32>
    %30 = tpu.matmul %1, %7, %cst_29 {dimension_numbers = #tpu.dot_dimension_numbers<[1], [0], [0], [1], [0, 0, 1, 1], [], []>} : vector<8x8xf32>, vector<8x32xf32>, vector<8x32xf32> -> vector<8x32xf32>
    %c1_30 = arith.constant 1 : index
    %c0_31 = arith.constant 0 : index
    %c0_32 = arith.constant 0 : index
    %31 = vector.load %arg7[%c1_30, %c0_31, %c0_32] : memref<3x32x32xf32, #tpu.memory_space<vmem>>, vector<1x32x32xf32>
    %32 = vector.shape_cast %31 : vector<1x32x32xf32> to vector<32x32xf32>
    %cst_33 = arith.constant dense<0.000000e+00> : vector<8x32xf32>
    %33 = tpu.matmul %30, %32, %cst_33 {dimension_numbers = #tpu.dot_dimension_numbers<[1], [0], [0], [1], [0, 0, 1, 1], [], []>} : vector<8x32xf32>, vector<32x32xf32>, vector<8x32xf32> -> vector<8x32xf32>
    %34 = arith.addf %29, %33 : vector<8x32xf32>
    %cst_34 = arith.constant dense<0.000000e+00> : vector<8x32xf32>
    %35 = tpu.matmul %1, %30, %cst_34 {dimension_numbers = #tpu.dot_dimension_numbers<[1], [0], [0], [1], [0, 0, 1, 1], [], []>} : vector<8x8xf32>, vector<8x32xf32>, vector<8x32xf32> -> vector<8x32xf32>
    %cst_35 = arith.constant 2.000000e+00 : f32
    %36 = vector.broadcast %cst_35 : f32 to vector<8x32xf32>
    %37 = arith.mulf %36, %35 : vector<8x32xf32>
    %38 = arith.subf %37, %7 : vector<8x32xf32>
    %c2_36 = arith.constant 2 : index
    %c0_37 = arith.constant 0 : index
    %c0_38 = arith.constant 0 : index
    %39 = vector.load %arg7[%c2_36, %c0_37, %c0_38] : memref<3x32x32xf32, #tpu.memory_space<vmem>>, vector<1x32x32xf32>
    %40 = vector.shape_cast %39 : vector<1x32x32xf32> to vector<32x32xf32>
    %cst_39 = arith.constant dense<0.000000e+00> : vector<8x32xf32>
    %41 = tpu.matmul %38, %40, %cst_39 {dimension_numbers = #tpu.dot_dimension_numbers<[1], [0], [0], [1], [0, 0, 1, 1], [], []>} : vector<8x32xf32>, vector<32x32xf32>, vector<8x32xf32> -> vector<8x32xf32>
    %42 = arith.addf %34, %41 : vector<8x32xf32>
    %c0_40 = arith.constant 0 : index
    %c0_41 = arith.constant 0 : index
    %43 = vector.load %arg8[%c0_40, %c0_41] : memref<1x32xf32, #tpu.memory_space<vmem>>, vector<1x32xf32>
    %44 = vector.broadcast %43 : vector<1x32xf32> to vector<8x32xf32>
    %45 = arith.addf %42, %44 : vector<8x32xf32>
    %46 = arith.negf %45 : vector<8x32xf32>
    %47 = math.exp %46 : vector<8x32xf32>
    %cst_42 = arith.constant 1.000000e+00 : f32
    %48 = vector.broadcast %cst_42 : f32 to vector<8x32xf32>
    %49 = arith.addf %48, %47 : vector<8x32xf32>
    %50 = arith.divf %48, %49 : vector<8x32xf32>
    %51 = vector.extract_strided_slice %50 {offsets = [0, 0], sizes = [8, 16], strides = [1, 1]} : vector<8x32xf32> to vector<8x16xf32>
    %52 = vector.extract_strided_slice %50 {offsets = [0, 16], sizes = [8, 16], strides = [1, 1]} : vector<8x32xf32> to vector<8x16xf32>
    %cst_43 = arith.constant 0.000000e+00 : f32
    %53 = vector.broadcast %cst_43 : f32 to vector<8x16xf32>
    %c0_44 = arith.constant 0 : index
    %c0_45 = arith.constant 0 : index
    %c0_46 = arith.constant 0 : index
    %54 = vector.load %arg9[%c0_44, %c0_45, %c0_46] : memref<3x2x16xf32, #tpu.memory_space<vmem>>, vector<1x2x16xf32>
    %55 = vector.shape_cast %54 : vector<1x2x16xf32> to vector<2x16xf32>
    %cst_47 = arith.constant dense<0.000000e+00> : vector<8x16xf32>
    %56 = tpu.matmul %4, %55, %cst_47 {dimension_numbers = #tpu.dot_dimension_numbers<[1], [0], [0], [1], [0, 0, 1, 1], [], []>} : vector<8x2xf32>, vector<2x16xf32>, vector<8x16xf32> -> vector<8x16xf32>
    %57 = arith.addf %53, %56 : vector<8x16xf32>
    %cst_48 = arith.constant dense<0.000000e+00> : vector<8x2xf32>
    %58 = tpu.matmul %2, %4, %cst_48 {dimension_numbers = #tpu.dot_dimension_numbers<[1], [0], [0], [1], [0, 0, 1, 1], [], []>} : vector<8x8xf32>, vector<8x2xf32>, vector<8x2xf32> -> vector<8x2xf32>
    %c1_49 = arith.constant 1 : index
    %c0_50 = arith.constant 0 : index
    %c0_51 = arith.constant 0 : index
    %59 = vector.load %arg9[%c1_49, %c0_50, %c0_51] : memref<3x2x16xf32, #tpu.memory_space<vmem>>, vector<1x2x16xf32>
    %60 = vector.shape_cast %59 : vector<1x2x16xf32> to vector<2x16xf32>
    %cst_52 = arith.constant dense<0.000000e+00> : vector<8x16xf32>
    %61 = tpu.matmul %58, %60, %cst_52 {dimension_numbers = #tpu.dot_dimension_numbers<[1], [0], [0], [1], [0, 0, 1, 1], [], []>} : vector<8x2xf32>, vector<2x16xf32>, vector<8x16xf32> -> vector<8x16xf32>
    %62 = arith.addf %57, %61 : vector<8x16xf32>
    %cst_53 = arith.constant dense<0.000000e+00> : vector<8x2xf32>
    %63 = tpu.matmul %2, %58, %cst_53 {dimension_numbers = #tpu.dot_dimension_numbers<[1], [0], [0], [1], [0, 0, 1, 1], [], []>} : vector<8x8xf32>, vector<8x2xf32>, vector<8x2xf32> -> vector<8x2xf32>
    %cst_54 = arith.constant 2.000000e+00 : f32
    %64 = vector.broadcast %cst_54 : f32 to vector<8x2xf32>
    %65 = arith.mulf %64, %63 : vector<8x2xf32>
    %66 = arith.subf %65, %4 : vector<8x2xf32>
    %c2_55 = arith.constant 2 : index
    %c0_56 = arith.constant 0 : index
    %c0_57 = arith.constant 0 : index
    %67 = vector.load %arg9[%c2_55, %c0_56, %c0_57] : memref<3x2x16xf32, #tpu.memory_space<vmem>>, vector<1x2x16xf32>
    %68 = vector.shape_cast %67 : vector<1x2x16xf32> to vector<2x16xf32>
    %cst_58 = arith.constant dense<0.000000e+00> : vector<8x16xf32>
    %69 = tpu.matmul %66, %68, %cst_58 {dimension_numbers = #tpu.dot_dimension_numbers<[1], [0], [0], [1], [0, 0, 1, 1], [], []>} : vector<8x2xf32>, vector<2x16xf32>, vector<8x16xf32> -> vector<8x16xf32>
    %70 = arith.addf %62, %69 : vector<8x16xf32>
    %71 = arith.mulf %51, %6 : vector<8x16xf32>
    %c0_59 = arith.constant 0 : index
    %c0_60 = arith.constant 0 : index
    %c0_61 = arith.constant 0 : index
    %72 = vector.load %arg10[%c0_59, %c0_60, %c0_61] : memref<3x16x16xf32, #tpu.memory_space<vmem>>, vector<1x16x16xf32>
    %73 = vector.shape_cast %72 : vector<1x16x16xf32> to vector<16x16xf32>
    %cst_62 = arith.constant dense<0.000000e+00> : vector<8x16xf32>
    %74 = tpu.matmul %71, %73, %cst_62 {dimension_numbers = #tpu.dot_dimension_numbers<[1], [0], [0], [1], [0, 0, 1, 1], [], []>} : vector<8x16xf32>, vector<16x16xf32>, vector<8x16xf32> -> vector<8x16xf32>
    %75 = arith.addf %70, %74 : vector<8x16xf32>
    %cst_63 = arith.constant dense<0.000000e+00> : vector<8x16xf32>
    %76 = tpu.matmul %2, %71, %cst_63 {dimension_numbers = #tpu.dot_dimension_numbers<[1], [0], [0], [1], [0, 0, 1, 1], [], []>} : vector<8x8xf32>, vector<8x16xf32>, vector<8x16xf32> -> vector<8x16xf32>
    %c1_64 = arith.constant 1 : index
    %c0_65 = arith.constant 0 : index
    %c0_66 = arith.constant 0 : index
    %77 = vector.load %arg10[%c1_64, %c0_65, %c0_66] : memref<3x16x16xf32, #tpu.memory_space<vmem>>, vector<1x16x16xf32>
    %78 = vector.shape_cast %77 : vector<1x16x16xf32> to vector<16x16xf32>
    %cst_67 = arith.constant dense<0.000000e+00> : vector<8x16xf32>
    %79 = tpu.matmul %76, %78, %cst_67 {dimension_numbers = #tpu.dot_dimension_numbers<[1], [0], [0], [1], [0, 0, 1, 1], [], []>} : vector<8x16xf32>, vector<16x16xf32>, vector<8x16xf32> -> vector<8x16xf32>
    %80 = arith.addf %75, %79 : vector<8x16xf32>
    %cst_68 = arith.constant dense<0.000000e+00> : vector<8x16xf32>
    %81 = tpu.matmul %2, %76, %cst_68 {dimension_numbers = #tpu.dot_dimension_numbers<[1], [0], [0], [1], [0, 0, 1, 1], [], []>} : vector<8x8xf32>, vector<8x16xf32>, vector<8x16xf32> -> vector<8x16xf32>
    %cst_69 = arith.constant 2.000000e+00 : f32
    %82 = vector.broadcast %cst_69 : f32 to vector<8x16xf32>
    %83 = arith.mulf %82, %81 : vector<8x16xf32>
    %84 = arith.subf %83, %71 : vector<8x16xf32>
    %c2_70 = arith.constant 2 : index
    %c0_71 = arith.constant 0 : index
    %c0_72 = arith.constant 0 : index
    %85 = vector.load %arg10[%c2_70, %c0_71, %c0_72] : memref<3x16x16xf32, #tpu.memory_space<vmem>>, vector<1x16x16xf32>
    %86 = vector.shape_cast %85 : vector<1x16x16xf32> to vector<16x16xf32>
    %cst_73 = arith.constant dense<0.000000e+00> : vector<8x16xf32>
    %87 = tpu.matmul %84, %86, %cst_73 {dimension_numbers = #tpu.dot_dimension_numbers<[1], [0], [0], [1], [0, 0, 1, 1], [], []>} : vector<8x16xf32>, vector<16x16xf32>, vector<8x16xf32> -> vector<8x16xf32>
    %88 = arith.addf %80, %87 : vector<8x16xf32>
    %c0_74 = arith.constant 0 : index
    %c0_75 = arith.constant 0 : index
    %89 = vector.load %arg11[%c0_74, %c0_75] : memref<1x16xf32, #tpu.memory_space<vmem>>, vector<1x16xf32>
    %90 = vector.broadcast %89 : vector<1x16xf32> to vector<8x16xf32>
    %91 = arith.addf %88, %90 : vector<8x16xf32>
    %92 = math.tanh %91 : vector<8x16xf32>
    %93 = arith.mulf %52, %6 : vector<8x16xf32>
    %cst_76 = arith.constant 1.000000e+00 : f32
    %94 = vector.broadcast %cst_76 : f32 to vector<8x16xf32>
    %95 = arith.subf %94, %52 : vector<8x16xf32>
    %96 = arith.mulf %95, %92 : vector<8x16xf32>
    %97 = arith.addf %93, %96 : vector<8x16xf32>
    %c0_77 = arith.constant 0 : index
    %c0_78 = arith.constant 0 : index
    %c0_79 = arith.constant 0 : index
    %98 = vector.load %arg12[%c0_77, %c0_78, %c0_79] : memref<1x8x16xf32, #tpu.memory_space<vmem>>, vector<1x8x16xf32>
    %99 = vector.shape_cast %98 : vector<1x8x16xf32> to vector<8x16xf32>
    %100 = vector.shape_cast %97 : vector<8x16xf32> to vector<1x8x16xf32>
    tpu.vector_store %arg12[%c0_77, %c0_78, %c0_79], %100 {strides = array<i32>} : memref<1x8x16xf32, #tpu.memory_space<vmem>>, vector<1x8x16xf32>,
    return
  }
  func.func @transform_0(%arg0: i32) -> (i32, i32, i32) {
    %c0_i32 = arith.constant 0 : i32
    %c0_i32_0 = arith.constant 0 : i32
    %c0_i32_1 = arith.constant 0 : i32
    return %arg0, %c0_i32, %c0_i32_0 : i32, i32, i32
  }
  func.func @transform_1(%arg0: i32) -> (i32, i32) {
    %c0_i32 = arith.constant 0 : i32
    %c0_i32_0 = arith.constant 0 : i32
    %c0_i32_1 = arith.constant 0 : i32
    return %c0_i32, %c0_i32_0 : i32, i32
  }
  func.func @transform_2(%arg0: i32) -> (i32, i32, i32) {
    %c0_i32 = arith.constant 0 : i32
    %c0_i32_0 = arith.constant 0 : i32
    %c0_i32_1 = arith.constant 0 : i32
    return %arg0, %c0_i32, %c0_i32_0 : i32, i32, i32
  }
  func.func @transform_3(%arg0: i32) -> (i32, i32, i32) {
    %c0_i32 = arith.constant 0 : i32
    %c0_i32_0 = arith.constant 0 : i32
    %c0_i32_1 = arith.constant 0 : i32
    return %arg0, %c0_i32, %c0_i32_0 : i32, i32, i32
  }
  func.func @transform_4(%arg0: i32) -> (i32, i32) {
    %c0_i32 = arith.constant 0 : i32
    %c0_i32_0 = arith.constant 0 : i32
    %c0_i32_1 = arith.constant 0 : i32
    return %c0_i32, %c0_i32_0 : i32, i32
  }
  func.func @transform_5(%arg0: i32) -> (i32, i32, i32) {
    %c0_i32 = arith.constant 0 : i32
    %c0_i32_0 = arith.constant 0 : i32
    %c0_i32_1 = arith.constant 0 : i32
    %c0_i32_2 = arith.constant 0 : i32
    return %c0_i32, %c0_i32_0, %c0_i32_1 : i32, i32, i32
  }
  func.func @transform_6(%arg0: i32) -> (i32, i32, i32) {
    %c0_i32 = arith.constant 0 : i32
    %c0_i32_0 = arith.constant 0 : i32
    %c0_i32_1 = arith.constant 0 : i32
    %c0_i32_2 = arith.constant 0 : i32
    return %c0_i32, %c0_i32_0, %c0_i32_1 : i32, i32, i32
  }
  func.func @transform_7(%arg0: i32) -> (i32, i32) {
    %c0_i32 = arith.constant 0 : i32
    %c0_i32_0 = arith.constant 0 : i32
    %c0_i32_1 = arith.constant 0 : i32
    return %c0_i32, %c0_i32_0 : i32, i32
  }
  func.func @transform_8(%arg0: i32) -> (i32, i32, i32) {
    %c0_i32 = arith.constant 0 : i32
    %c0_i32_0 = arith.constant 0 : i32
    %c0_i32_1 = arith.constant 0 : i32
    %c0_i32_2 = arith.constant 0 : i32
    return %c0_i32, %c0_i32_0, %c0_i32_1 : i32, i32, i32
  }
  func.func @transform_9(%arg0: i32) -> (i32, i32, i32) {
    %c0_i32 = arith.constant 0 : i32
    %c0_i32_0 = arith.constant 0 : i32
    %c0_i32_1 = arith.constant 0 : i32
    %c0_i32_2 = arith.constant 0 : i32
    return %c0_i32, %c0_i32_0, %c0_i32_1 : i32, i32, i32
  }
  func.func @transform_10(%arg0: i32) -> (i32, i32) {
    %c0_i32 = arith.constant 0 : i32
    %c0_i32_0 = arith.constant 0 : i32
    %c0_i32_1 = arith.constant 0 : i32
    return %c0_i32, %c0_i32_0 : i32, i32
  }
  func.func @transform_11(%arg0: i32) -> (i32, i32, i32) {
    %c0_i32 = arith.constant 0 : i32
    %c0_i32_0 = arith.constant 0 : i32
    %c0_i32_1 = arith.constant 0 : i32
    return %arg0, %c0_i32, %c0_i32_0 : i32, i32, i32
  }
}

module attributes {stable_mosaic.version = 11 : i64} {
  func.func @_rw_norm_kernel(%arg0: memref<2x8x8xf32, #tpu.memory_space<vmem>>, %arg1: memref<2x8x8xf32, #tpu.memory_space<vmem>>) attributes {dimension_semantics = [], scalar_prefetch = 0 : i64, scratch_operands = 0 : i64, tpu.core_type = #tpu.core_type<tc>} {
    %c0 = arith.constant 0 : index
    %c0_0 = arith.constant 0 : index
    %c0_1 = arith.constant 0 : index
    %0 = vector.load %arg0[%c0, %c0_0, %c0_1] : memref<2x8x8xf32, #tpu.memory_space<vmem>>, vector<2x8x8xf32>
    %cst = arith.constant dense<0.000000e+00> : vector<2x8xf32>
    %1 = vector.multi_reduction <add>, %0, %cst [2] : vector<2x8x8xf32> to vector<2x8xf32>
    %2 = vector.shape_cast %1 : vector<2x8xf32> to vector<2x8x1xf32>
    %cst_2 = arith.constant 1.000000e+00 : f32
    %3 = vector.broadcast %cst_2 : f32 to vector<2x8x1xf32>
    %4 = arith.addf %2, %3 : vector<2x8x1xf32>
    %cst_3 = arith.constant 0.000000e+00 : f32
    %5 = vector.broadcast %cst_3 : f32 to vector<2x8x1xf32>
    %6 = arith.cmpf one, %4, %5 : vector<2x8x1xf32>
    %cst_4 = arith.constant 1.000000e+00 : f32
    %7 = vector.broadcast %cst_4 : f32 to vector<2x8x1xf32>
    %8 = arith.divf %7, %4 : vector<2x8x1xf32>
    %cst_5 = arith.constant 0.000000e+00 : f32
    %9 = vector.broadcast %cst_5 : f32 to vector<2x8x1xf32>
    %10 = arith.select %6, %8, %9 : vector<2x8x1xi1>, vector<2x8x1xf32>
    %11 = tpu.iota {dimensions = array<i32: 0>} : vector<8x8xi32>
    %12 = tpu.iota {dimensions = array<i32: 1>} : vector<8x8xi32>
    %13 = arith.cmpi eq, %11, %12 : vector<8x8xi32>
    %14 = vector.shape_cast %13 : vector<8x8xi1> to vector<1x8x8xi1>
    %cst_6 = arith.constant 0.000000e+00 : f32
    %15 = vector.shape_cast %14 : vector<1x8x8xi1> to vector<1x8x8xi1>
    %16 = vector.broadcast %15 : vector<1x8x8xi1> to vector<2x8x8xi1>
    %17 = vector.shape_cast %10 : vector<2x8x1xf32> to vector<2x8x1xf32>
    %18 = vector.broadcast %17 : vector<2x8x1xf32> to vector<2x8x8xf32>
    %19 = vector.broadcast %cst_6 : f32 to vector<2x8x8xf32>
    %20 = arith.select %16, %18, %19 : vector<2x8x8xi1>, vector<2x8x8xf32>
    %21 = vector.broadcast %10 : vector<2x8x1xf32> to vector<2x8x8xf32>
    %22 = arith.mulf %21, %0 : vector<2x8x8xf32>
    %23 = arith.addf %22, %20 : vector<2x8x8xf32>
    %24 = tpu.transpose %23, [0, 2, 1] : vector<2x8x8xf32> -> vector<2x8x8xf32>
    %c0_7 = arith.constant 0 : index
    %c0_8 = arith.constant 0 : index
    %c0_9 = arith.constant 0 : index
    %25 = vector.load %arg1[%c0_7, %c0_8, %c0_9] : memref<2x8x8xf32, #tpu.memory_space<vmem>>, vector<2x8x8xf32>
    tpu.vector_store %arg1[%c0_7, %c0_8, %c0_9], %24 {strides = array<i32>} : memref<2x8x8xf32, #tpu.memory_space<vmem>>, vector<2x8x8xf32>,
    return
  }
}

module attributes {stable_mosaic.version = 11 : i64} {
  func.func @_dcgru_layer_kernel(%arg0: i32, %arg1: memref<1x8x8xf32, #tpu.memory_space<vmem>>, %arg2: memref<8x8xf32, #tpu.memory_space<vmem>>, %arg3: memref<1x8x16xf32, #tpu.memory_space<vmem>>, %arg4: memref<1x8x16xf32, #tpu.memory_space<vmem>>, %arg5: memref<8x32xf32, #tpu.memory_space<vmem>>, %arg6: memref<3x16x32xf32, #tpu.memory_space<vmem>>, %arg7: memref<3x32x32xf32, #tpu.memory_space<vmem>>, %arg8: memref<1x32xf32, #tpu.memory_space<vmem>>, %arg9: memref<3x16x16xf32, #tpu.memory_space<vmem>>, %arg10: memref<3x16x16xf32, #tpu.memory_space<vmem>>, %arg11: memref<1x16xf32, #tpu.memory_space<vmem>>, %arg12: memref<1x8x16xf32, #tpu.memory_space<vmem>>) attributes {dimension_semantics = [#tpu.dimension_semantics<parallel>], iteration_bounds = array<i64: 2>, scalar_prefetch = 0 : i64, scratch_operands = 0 : i64, tpu.core_type = #tpu.core_type<tc>, window_params = [{transform_indices = @transform_0, window_bounds = array<i64: 1, 8, 8>}, {pipeline_mode = #tpu.pipeline_mode<synchronous>, transform_indices = @transform_1, window_bounds = array<i64: 8, 8>}, {transform_indices = @transform_2, window_bounds = array<i64: 1, 8, 16>}, {transform_indices = @transform_3, window_bounds = array<i64: 1, 8, 16>}, {pipeline_mode = #tpu.pipeline_mode<synchronous>, transform_indices = @transform_4, window_bounds = array<i64: 8, 32>}, {pipeline_mode = #tpu.pipeline_mode<synchronous>, transform_indices = @transform_5, window_bounds = array<i64: 3, 16, 32>}, {pipeline_mode = #tpu.pipeline_mode<synchronous>, transform_indices = @transform_6, window_bounds = array<i64: 3, 32, 32>}, {pipeline_mode = #tpu.pipeline_mode<synchronous>, transform_indices = @transform_7, window_bounds = array<i64: 1, 32>}, {pipeline_mode = #tpu.pipeline_mode<synchronous>, transform_indices = @transform_8, window_bounds = array<i64: 3, 16, 16>}, {pipeline_mode = #tpu.pipeline_mode<synchronous>, transform_indices = @transform_9, window_bounds = array<i64: 3, 16, 16>}, {pipeline_mode = #tpu.pipeline_mode<synchronous>, transform_indices = @transform_10, window_bounds = array<i64: 1, 16>}, {transform_indices = @transform_11, window_bounds = array<i64: 1, 8, 16>}]} {
    %c0 = arith.constant 0 : index
    %c0_0 = arith.constant 0 : index
    %c0_1 = arith.constant 0 : index
    %0 = vector.load %arg1[%c0, %c0_0, %c0_1] : memref<1x8x8xf32, #tpu.memory_space<vmem>>, vector<1x8x8xf32>
    %1 = vector.shape_cast %0 : vector<1x8x8xf32> to vector<8x8xf32>
    %c0_2 = arith.constant 0 : index
    %c0_3 = arith.constant 0 : index
    %2 = vector.load %arg2[%c0_2, %c0_3] : memref<8x8xf32, #tpu.memory_space<vmem>>, vector<8x8xf32>
    %c0_4 = arith.constant 0 : index
    %c0_5 = arith.constant 0 : index
    %c0_6 = arith.constant 0 : index
    %3 = vector.load %arg3[%c0_4, %c0_5, %c0_6] : memref<1x8x16xf32, #tpu.memory_space<vmem>>, vector<1x8x16xf32>
    %4 = vector.shape_cast %3 : vector<1x8x16xf32> to vector<8x16xf32>
    %c0_7 = arith.constant 0 : index
    %c0_8 = arith.constant 0 : index
    %c0_9 = arith.constant 0 : index
    %5 = vector.load %arg4[%c0_7, %c0_8, %c0_9] : memref<1x8x16xf32, #tpu.memory_space<vmem>>, vector<1x8x16xf32>
    %6 = vector.shape_cast %5 : vector<1x8x16xf32> to vector<8x16xf32>
    %c0_10 = arith.constant 0 : index
    %c0_11 = arith.constant 0 : index
    %7 = vector.load %arg5[%c0_10, %c0_11] : memref<8x32xf32, #tpu.memory_space<vmem>>, vector<8x32xf32>
    %cst = arith.constant 0.000000e+00 : f32
    %8 = vector.broadcast %cst : f32 to vector<8x32xf32>
    %c0_12 = arith.constant 0 : index
    %c0_13 = arith.constant 0 : index
    %c0_14 = arith.constant 0 : index
    %9 = vector.load %arg6[%c0_12, %c0_13, %c0_14] : memref<3x16x32xf32, #tpu.memory_space<vmem>>, vector<1x16x32xf32>
    %10 = vector.shape_cast %9 : vector<1x16x32xf32> to vector<16x32xf32>
    %cst_15 = arith.constant dense<0.000000e+00> : vector<8x32xf32>
    %11 = tpu.matmul %4, %10, %cst_15 {dimension_numbers = #tpu.dot_dimension_numbers<[1], [0], [0], [1], [0, 0, 1, 1], [], []>} : vector<8x16xf32>, vector<16x32xf32>, vector<8x32xf32> -> vector<8x32xf32>
    %12 = arith.addf %8, %11 : vector<8x32xf32>
    %cst_16 = arith.constant dense<0.000000e+00> : vector<8x16xf32>
    %13 = tpu.matmul %1, %4, %cst_16 {dimension_numbers = #tpu.dot_dimension_numbers<[1], [0], [0], [1], [0, 0, 1, 1], [], []>} : vector<8x8xf32>, vector<8x16xf32>, vector<8x16xf32> -> vector<8x16xf32>
    %c1 = arith.constant 1 : index
    %c0_17 = arith.constant 0 : index
    %c0_18 = arith.constant 0 : index
    %14 = vector.load %arg6[%c1, %c0_17, %c0_18] : memref<3x16x32xf32, #tpu.memory_space<vmem>>, vector<1x16x32xf32>
    %15 = vector.shape_cast %14 : vector<1x16x32xf32> to vector<16x32xf32>
    %cst_19 = arith.constant dense<0.000000e+00> : vector<8x32xf32>
    %16 = tpu.matmul %13, %15, %cst_19 {dimension_numbers = #tpu.dot_dimension_numbers<[1], [0], [0], [1], [0, 0, 1, 1], [], []>} : vector<8x16xf32>, vector<16x32xf32>, vector<8x32xf32> -> vector<8x32xf32>
    %17 = arith.addf %12, %16 : vector<8x32xf32>
    %cst_20 = arith.constant dense<0.000000e+00> : vector<8x16xf32>
    %18 = tpu.matmul %1, %13, %cst_20 {dimension_numbers = #tpu.dot_dimension_numbers<[1], [0], [0], [1], [0, 0, 1, 1], [], []>} : vector<8x8xf32>, vector<8x16xf32>, vector<8x16xf32> -> vector<8x16xf32>
    %cst_21 = arith.constant 2.000000e+00 : f32
    %19 = vector.broadcast %cst_21 : f32 to vector<8x16xf32>
    %20 = arith.mulf %19, %18 : vector<8x16xf32>
    %21 = arith.subf %20, %4 : vector<8x16xf32>
    %c2 = arith.constant 2 : index
    %c0_22 = arith.constant 0 : index
    %c0_23 = arith.constant 0 : index
    %22 = vector.load %arg6[%c2, %c0_22, %c0_23] : memref<3x16x32xf32, #tpu.memory_space<vmem>>, vector<1x16x32xf32>
    %23 = vector.shape_cast %22 : vector<1x16x32xf32> to vector<16x32xf32>
    %cst_24 = arith.constant dense<0.000000e+00> : vector<8x32xf32>
    %24 = tpu.matmul %21, %23, %cst_24 {dimension_numbers = #tpu.dot_dimension_numbers<[1], [0], [0], [1], [0, 0, 1, 1], [], []>} : vector<8x16xf32>, vector<16x32xf32>, vector<8x32xf32> -> vector<8x32xf32>
    %25 = arith.addf %17, %24 : vector<8x32xf32>
    %c0_25 = arith.constant 0 : index
    %c0_26 = arith.constant 0 : index
    %c0_27 = arith.constant 0 : index
    %26 = vector.load %arg7[%c0_25, %c0_26, %c0_27] : memref<3x32x32xf32, #tpu.memory_space<vmem>>, vector<1x32x32xf32>
    %27 = vector.shape_cast %26 : vector<1x32x32xf32> to vector<32x32xf32>
    %cst_28 = arith.constant dense<0.000000e+00> : vector<8x32xf32>
    %28 = tpu.matmul %7, %27, %cst_28 {dimension_numbers = #tpu.dot_dimension_numbers<[1], [0], [0], [1], [0, 0, 1, 1], [], []>} : vector<8x32xf32>, vector<32x32xf32>, vector<8x32xf32> -> vector<8x32xf32>
    %29 = arith.addf %25, %28 : vector<8x32xf32>
    %cst_29 = arith.constant dense<0.000000e+00> : vector<8x32xf32>
    %30 = tpu.matmul %1, %7, %cst_29 {dimension_numbers = #tpu.dot_dimension_numbers<[1], [0], [0], [1], [0, 0, 1, 1], [], []>} : vector<8x8xf32>, vector<8x32xf32>, vector<8x32xf32> -> vector<8x32xf32>
    %c1_30 = arith.constant 1 : index
    %c0_31 = arith.constant 0 : index
    %c0_32 = arith.constant 0 : index
    %31 = vector.load %arg7[%c1_30, %c0_31, %c0_32] : memref<3x32x32xf32, #tpu.memory_space<vmem>>, vector<1x32x32xf32>
    %32 = vector.shape_cast %31 : vector<1x32x32xf32> to vector<32x32xf32>
    %cst_33 = arith.constant dense<0.000000e+00> : vector<8x32xf32>
    %33 = tpu.matmul %30, %32, %cst_33 {dimension_numbers = #tpu.dot_dimension_numbers<[1], [0], [0], [1], [0, 0, 1, 1], [], []>} : vector<8x32xf32>, vector<32x32xf32>, vector<8x32xf32> -> vector<8x32xf32>
    %34 = arith.addf %29, %33 : vector<8x32xf32>
    %cst_34 = arith.constant dense<0.000000e+00> : vector<8x32xf32>
    %35 = tpu.matmul %1, %30, %cst_34 {dimension_numbers = #tpu.dot_dimension_numbers<[1], [0], [0], [1], [0, 0, 1, 1], [], []>} : vector<8x8xf32>, vector<8x32xf32>, vector<8x32xf32> -> vector<8x32xf32>
    %cst_35 = arith.constant 2.000000e+00 : f32
    %36 = vector.broadcast %cst_35 : f32 to vector<8x32xf32>
    %37 = arith.mulf %36, %35 : vector<8x32xf32>
    %38 = arith.subf %37, %7 : vector<8x32xf32>
    %c2_36 = arith.constant 2 : index
    %c0_37 = arith.constant 0 : index
    %c0_38 = arith.constant 0 : index
    %39 = vector.load %arg7[%c2_36, %c0_37, %c0_38] : memref<3x32x32xf32, #tpu.memory_space<vmem>>, vector<1x32x32xf32>
    %40 = vector.shape_cast %39 : vector<1x32x32xf32> to vector<32x32xf32>
    %cst_39 = arith.constant dense<0.000000e+00> : vector<8x32xf32>
    %41 = tpu.matmul %38, %40, %cst_39 {dimension_numbers = #tpu.dot_dimension_numbers<[1], [0], [0], [1], [0, 0, 1, 1], [], []>} : vector<8x32xf32>, vector<32x32xf32>, vector<8x32xf32> -> vector<8x32xf32>
    %42 = arith.addf %34, %41 : vector<8x32xf32>
    %c0_40 = arith.constant 0 : index
    %c0_41 = arith.constant 0 : index
    %43 = vector.load %arg8[%c0_40, %c0_41] : memref<1x32xf32, #tpu.memory_space<vmem>>, vector<1x32xf32>
    %44 = vector.broadcast %43 : vector<1x32xf32> to vector<8x32xf32>
    %45 = arith.addf %42, %44 : vector<8x32xf32>
    %46 = arith.negf %45 : vector<8x32xf32>
    %47 = math.exp %46 : vector<8x32xf32>
    %cst_42 = arith.constant 1.000000e+00 : f32
    %48 = vector.broadcast %cst_42 : f32 to vector<8x32xf32>
    %49 = arith.addf %48, %47 : vector<8x32xf32>
    %50 = arith.divf %48, %49 : vector<8x32xf32>
    %51 = vector.extract_strided_slice %50 {offsets = [0, 0], sizes = [8, 16], strides = [1, 1]} : vector<8x32xf32> to vector<8x16xf32>
    %52 = vector.extract_strided_slice %50 {offsets = [0, 16], sizes = [8, 16], strides = [1, 1]} : vector<8x32xf32> to vector<8x16xf32>
    %cst_43 = arith.constant 0.000000e+00 : f32
    %53 = vector.broadcast %cst_43 : f32 to vector<8x16xf32>
    %c0_44 = arith.constant 0 : index
    %c0_45 = arith.constant 0 : index
    %c0_46 = arith.constant 0 : index
    %54 = vector.load %arg9[%c0_44, %c0_45, %c0_46] : memref<3x16x16xf32, #tpu.memory_space<vmem>>, vector<1x16x16xf32>
    %55 = vector.shape_cast %54 : vector<1x16x16xf32> to vector<16x16xf32>
    %cst_47 = arith.constant dense<0.000000e+00> : vector<8x16xf32>
    %56 = tpu.matmul %4, %55, %cst_47 {dimension_numbers = #tpu.dot_dimension_numbers<[1], [0], [0], [1], [0, 0, 1, 1], [], []>} : vector<8x16xf32>, vector<16x16xf32>, vector<8x16xf32> -> vector<8x16xf32>
    %57 = arith.addf %53, %56 : vector<8x16xf32>
    %cst_48 = arith.constant dense<0.000000e+00> : vector<8x16xf32>
    %58 = tpu.matmul %2, %4, %cst_48 {dimension_numbers = #tpu.dot_dimension_numbers<[1], [0], [0], [1], [0, 0, 1, 1], [], []>} : vector<8x8xf32>, vector<8x16xf32>, vector<8x16xf32> -> vector<8x16xf32>
    %c1_49 = arith.constant 1 : index
    %c0_50 = arith.constant 0 : index
    %c0_51 = arith.constant 0 : index
    %59 = vector.load %arg9[%c1_49, %c0_50, %c0_51] : memref<3x16x16xf32, #tpu.memory_space<vmem>>, vector<1x16x16xf32>
    %60 = vector.shape_cast %59 : vector<1x16x16xf32> to vector<16x16xf32>
    %cst_52 = arith.constant dense<0.000000e+00> : vector<8x16xf32>
    %61 = tpu.matmul %58, %60, %cst_52 {dimension_numbers = #tpu.dot_dimension_numbers<[1], [0], [0], [1], [0, 0, 1, 1], [], []>} : vector<8x16xf32>, vector<16x16xf32>, vector<8x16xf32> -> vector<8x16xf32>
    %62 = arith.addf %57, %61 : vector<8x16xf32>
    %cst_53 = arith.constant dense<0.000000e+00> : vector<8x16xf32>
    %63 = tpu.matmul %2, %58, %cst_53 {dimension_numbers = #tpu.dot_dimension_numbers<[1], [0], [0], [1], [0, 0, 1, 1], [], []>} : vector<8x8xf32>, vector<8x16xf32>, vector<8x16xf32> -> vector<8x16xf32>
    %cst_54 = arith.constant 2.000000e+00 : f32
    %64 = vector.broadcast %cst_54 : f32 to vector<8x16xf32>
    %65 = arith.mulf %64, %63 : vector<8x16xf32>
    %66 = arith.subf %65, %4 : vector<8x16xf32>
    %c2_55 = arith.constant 2 : index
    %c0_56 = arith.constant 0 : index
    %c0_57 = arith.constant 0 : index
    %67 = vector.load %arg9[%c2_55, %c0_56, %c0_57] : memref<3x16x16xf32, #tpu.memory_space<vmem>>, vector<1x16x16xf32>
    %68 = vector.shape_cast %67 : vector<1x16x16xf32> to vector<16x16xf32>
    %cst_58 = arith.constant dense<0.000000e+00> : vector<8x16xf32>
    %69 = tpu.matmul %66, %68, %cst_58 {dimension_numbers = #tpu.dot_dimension_numbers<[1], [0], [0], [1], [0, 0, 1, 1], [], []>} : vector<8x16xf32>, vector<16x16xf32>, vector<8x16xf32> -> vector<8x16xf32>
    %70 = arith.addf %62, %69 : vector<8x16xf32>
    %71 = arith.mulf %51, %6 : vector<8x16xf32>
    %c0_59 = arith.constant 0 : index
    %c0_60 = arith.constant 0 : index
    %c0_61 = arith.constant 0 : index
    %72 = vector.load %arg10[%c0_59, %c0_60, %c0_61] : memref<3x16x16xf32, #tpu.memory_space<vmem>>, vector<1x16x16xf32>
    %73 = vector.shape_cast %72 : vector<1x16x16xf32> to vector<16x16xf32>
    %cst_62 = arith.constant dense<0.000000e+00> : vector<8x16xf32>
    %74 = tpu.matmul %71, %73, %cst_62 {dimension_numbers = #tpu.dot_dimension_numbers<[1], [0], [0], [1], [0, 0, 1, 1], [], []>} : vector<8x16xf32>, vector<16x16xf32>, vector<8x16xf32> -> vector<8x16xf32>
    %75 = arith.addf %70, %74 : vector<8x16xf32>
    %cst_63 = arith.constant dense<0.000000e+00> : vector<8x16xf32>
    %76 = tpu.matmul %2, %71, %cst_63 {dimension_numbers = #tpu.dot_dimension_numbers<[1], [0], [0], [1], [0, 0, 1, 1], [], []>} : vector<8x8xf32>, vector<8x16xf32>, vector<8x16xf32> -> vector<8x16xf32>
    %c1_64 = arith.constant 1 : index
    %c0_65 = arith.constant 0 : index
    %c0_66 = arith.constant 0 : index
    %77 = vector.load %arg10[%c1_64, %c0_65, %c0_66] : memref<3x16x16xf32, #tpu.memory_space<vmem>>, vector<1x16x16xf32>
    %78 = vector.shape_cast %77 : vector<1x16x16xf32> to vector<16x16xf32>
    %cst_67 = arith.constant dense<0.000000e+00> : vector<8x16xf32>
    %79 = tpu.matmul %76, %78, %cst_67 {dimension_numbers = #tpu.dot_dimension_numbers<[1], [0], [0], [1], [0, 0, 1, 1], [], []>} : vector<8x16xf32>, vector<16x16xf32>, vector<8x16xf32> -> vector<8x16xf32>
    %80 = arith.addf %75, %79 : vector<8x16xf32>
    %cst_68 = arith.constant dense<0.000000e+00> : vector<8x16xf32>
    %81 = tpu.matmul %2, %76, %cst_68 {dimension_numbers = #tpu.dot_dimension_numbers<[1], [0], [0], [1], [0, 0, 1, 1], [], []>} : vector<8x8xf32>, vector<8x16xf32>, vector<8x16xf32> -> vector<8x16xf32>
    %cst_69 = arith.constant 2.000000e+00 : f32
    %82 = vector.broadcast %cst_69 : f32 to vector<8x16xf32>
    %83 = arith.mulf %82, %81 : vector<8x16xf32>
    %84 = arith.subf %83, %71 : vector<8x16xf32>
    %c2_70 = arith.constant 2 : index
    %c0_71 = arith.constant 0 : index
    %c0_72 = arith.constant 0 : index
    %85 = vector.load %arg10[%c2_70, %c0_71, %c0_72] : memref<3x16x16xf32, #tpu.memory_space<vmem>>, vector<1x16x16xf32>
    %86 = vector.shape_cast %85 : vector<1x16x16xf32> to vector<16x16xf32>
    %cst_73 = arith.constant dense<0.000000e+00> : vector<8x16xf32>
    %87 = tpu.matmul %84, %86, %cst_73 {dimension_numbers = #tpu.dot_dimension_numbers<[1], [0], [0], [1], [0, 0, 1, 1], [], []>} : vector<8x16xf32>, vector<16x16xf32>, vector<8x16xf32> -> vector<8x16xf32>
    %88 = arith.addf %80, %87 : vector<8x16xf32>
    %c0_74 = arith.constant 0 : index
    %c0_75 = arith.constant 0 : index
    %89 = vector.load %arg11[%c0_74, %c0_75] : memref<1x16xf32, #tpu.memory_space<vmem>>, vector<1x16xf32>
    %90 = vector.broadcast %89 : vector<1x16xf32> to vector<8x16xf32>
    %91 = arith.addf %88, %90 : vector<8x16xf32>
    %92 = math.tanh %91 : vector<8x16xf32>
    %93 = arith.mulf %52, %6 : vector<8x16xf32>
    %cst_76 = arith.constant 1.000000e+00 : f32
    %94 = vector.broadcast %cst_76 : f32 to vector<8x16xf32>
    %95 = arith.subf %94, %52 : vector<8x16xf32>
    %96 = arith.mulf %95, %92 : vector<8x16xf32>
    %97 = arith.addf %93, %96 : vector<8x16xf32>
    %c0_77 = arith.constant 0 : index
    %c0_78 = arith.constant 0 : index
    %c0_79 = arith.constant 0 : index
    %98 = vector.load %arg12[%c0_77, %c0_78, %c0_79] : memref<1x8x16xf32, #tpu.memory_space<vmem>>, vector<1x8x16xf32>
    %99 = vector.shape_cast %98 : vector<1x8x16xf32> to vector<8x16xf32>
    %100 = vector.shape_cast %97 : vector<8x16xf32> to vector<1x8x16xf32>
    tpu.vector_store %arg12[%c0_77, %c0_78, %c0_79], %100 {strides = array<i32>} : memref<1x8x16xf32, #tpu.memory_space<vmem>>, vector<1x8x16xf32>,
    return
  }
  func.func @transform_0(%arg0: i32) -> (i32, i32, i32) {
    %c0_i32 = arith.constant 0 : i32
    %c0_i32_0 = arith.constant 0 : i32
    %c0_i32_1 = arith.constant 0 : i32
    return %arg0, %c0_i32, %c0_i32_0 : i32, i32, i32
  }
  func.func @transform_1(%arg0: i32) -> (i32, i32) {
    %c0_i32 = arith.constant 0 : i32
    %c0_i32_0 = arith.constant 0 : i32
    %c0_i32_1 = arith.constant 0 : i32
    return %c0_i32, %c0_i32_0 : i32, i32
  }
  func.func @transform_2(%arg0: i32) -> (i32, i32, i32) {
    %c0_i32 = arith.constant 0 : i32
    %c0_i32_0 = arith.constant 0 : i32
    %c0_i32_1 = arith.constant 0 : i32
    return %arg0, %c0_i32, %c0_i32_0 : i32, i32, i32
  }
  func.func @transform_3(%arg0: i32) -> (i32, i32, i32) {
    %c0_i32 = arith.constant 0 : i32
    %c0_i32_0 = arith.constant 0 : i32
    %c0_i32_1 = arith.constant 0 : i32
    return %arg0, %c0_i32, %c0_i32_0 : i32, i32, i32
  }
  func.func @transform_4(%arg0: i32) -> (i32, i32) {
    %c0_i32 = arith.constant 0 : i32
    %c0_i32_0 = arith.constant 0 : i32
    %c0_i32_1 = arith.constant 0 : i32
    return %c0_i32, %c0_i32_0 : i32, i32
  }
  func.func @transform_5(%arg0: i32) -> (i32, i32, i32) {
    %c0_i32 = arith.constant 0 : i32
    %c0_i32_0 = arith.constant 0 : i32
    %c0_i32_1 = arith.constant 0 : i32
    %c0_i32_2 = arith.constant 0 : i32
    return %c0_i32, %c0_i32_0, %c0_i32_1 : i32, i32, i32
  }
  func.func @transform_6(%arg0: i32) -> (i32, i32, i32) {
    %c0_i32 = arith.constant 0 : i32
    %c0_i32_0 = arith.constant 0 : i32
    %c0_i32_1 = arith.constant 0 : i32
    %c0_i32_2 = arith.constant 0 : i32
    return %c0_i32, %c0_i32_0, %c0_i32_1 : i32, i32, i32
  }
  func.func @transform_7(%arg0: i32) -> (i32, i32) {
    %c0_i32 = arith.constant 0 : i32
    %c0_i32_0 = arith.constant 0 : i32
    %c0_i32_1 = arith.constant 0 : i32
    return %c0_i32, %c0_i32_0 : i32, i32
  }
  func.func @transform_8(%arg0: i32) -> (i32, i32, i32) {
    %c0_i32 = arith.constant 0 : i32
    %c0_i32_0 = arith.constant 0 : i32
    %c0_i32_1 = arith.constant 0 : i32
    %c0_i32_2 = arith.constant 0 : i32
    return %c0_i32, %c0_i32_0, %c0_i32_1 : i32, i32, i32
  }
  func.func @transform_9(%arg0: i32) -> (i32, i32, i32) {
    %c0_i32 = arith.constant 0 : i32
    %c0_i32_0 = arith.constant 0 : i32
    %c0_i32_1 = arith.constant 0 : i32
    %c0_i32_2 = arith.constant 0 : i32
    return %c0_i32, %c0_i32_0, %c0_i32_1 : i32, i32, i32
  }
  func.func @transform_10(%arg0: i32) -> (i32, i32) {
    %c0_i32 = arith.constant 0 : i32
    %c0_i32_0 = arith.constant 0 : i32
    %c0_i32_1 = arith.constant 0 : i32
    return %c0_i32, %c0_i32_0 : i32, i32
  }
  func.func @transform_11(%arg0: i32) -> (i32, i32, i32) {
    %c0_i32 = arith.constant 0 : i32
    %c0_i32_0 = arith.constant 0 : i32
    %c0_i32_1 = arith.constant 0 : i32
    return %arg0, %c0_i32, %c0_i32_0 : i32, i32, i32
  }
}

</mosaic_0001>

<llo_original>
// kernel: squeeze.6
$region0: #{squeeze.6}
  %s0 = inlined_call_operand.vmem [shape: f32[1,2,128], index: 0, kind: input, shape index: {}]
  %s1 = inlined_call_operand.vmem [shape: f32[2,8,16], index: 1, kind: output, shape index: {}]
  $region1: #{squeeze.6} parent=0
    #allocation0 [shape = 'u8[4096]{0}', space=vmem, size = 0x1000, scoped, tag = 'scoped mem for input reshape']
    %s3 = sshll.u32 1, 2
    %s4 = ssub.s32 %s3, 1
    %v5 = vld [vmem:[%s0] sm:%s4]
    %6 = vst [vmem:[#allocation0] sm:%s4] %v5
    %v7 = vld [vmem:[#allocation0] sm:$0x3]
    %vm8 = vcmask 130048
    %9 = vst.msk [vmem:[%s1] ss:$8 sm:$0x3] %vm8, %v7
    %v10 = vld [vmem:[#allocation0] sm:$0x3]
    %11 = vrot.lane.b32.xlu0 %v10, 112
    %v12 = vpop.permute.xlu0 %11
    %vm13 = vcmask 130048
    %s14 = scalar_lea.vmem %s1, 1
    %15 = vst.msk [vmem:[%s14] ss:$8 sm:$0x3] %vm13, %v12
    %v16 = vld [vmem:[#allocation0] sm:$0x3]
    %17 = vrot.lane.b32.xlu0 %v16, 96
    %v18 = vpop.permute.xlu0 %17
    %vm19 = vcmask 130048
    %s20 = scalar_lea.vmem %s1, 2
    %21 = vst.msk [vmem:[%s20] ss:$8 sm:$0x3] %vm19, %v18
    %v22 = vld [vmem:[#allocation0] sm:$0x3]
    %23 = vrot.lane.b32.xlu0 %v22, 80
    %v24 = vpop.permute.xlu0 %23
    %vm25 = vcmask 130048
    %s26 = scalar_lea.vmem %s1, 3
    %27 = vst.msk [vmem:[%s26] ss:$8 sm:$0x3] %vm25, %v24
    %v28 = vld [vmem:[#allocation0] sm:$0x3]
    %29 = vrot.lane.b32.xlu0 %v28, 64
    %v30 = vpop.permute.xlu0 %29
    %vm31 = vcmask 130048
    %s32 = scalar_lea.vmem %s1, 4
    %33 = vst.msk [vmem:[%s32] ss:$8 sm:$0x3] %vm31, %v30
    %v34 = vld [vmem:[#allocation0] sm:$0x3]
    %35 = vrot.lane.b32.xlu0 %v34, 48
    %v36 = vpop.permute.xlu0 %35
    %vm37 = vcmask 130048
    %s38 = scalar_lea.vmem %s1, 5
    %39 = vst.msk [vmem:[%s38] ss:$8 sm:$0x3] %vm37, %v36
    %v40 = vld [vmem:[#allocation0] sm:$0x3]
    %41 = vrot.lane.b32.xlu0 %v40, 32
    %v42 = vpop.permute.xlu0 %41
    %vm43 = vcmask 130048
    %s44 = scalar_lea.vmem %s1, 6
    %45 = vst.msk [vmem:[%s44] ss:$8 sm:$0x3] %vm43, %v42
    %v46 = vld [vmem:[#allocation0] sm:$0x3]
    %47 = vrot.lane.b32.xlu0 %v46, 16
    %v48 = vpop.permute.xlu0 %47
    %vm49 = vcmask 130048
    %s50 = scalar_lea.vmem %s1, 7
    %51 = vst.msk [vmem:[%s50] ss:$8 sm:$0x3] %vm49, %v48

// kernel: squeeze.7
$region0: #{squeeze.7}
  %s0 = inlined_call_operand.vmem [shape: f32[1,2,128], index: 0, kind: input, shape index: {}]
  %s1 = inlined_call_operand.vmem [shape: f32[8,32], index: 1, kind: output, shape index: {}]
  $region1: #{squeeze.7} parent=0
    #allocation0 [shape = 'u8[4096]{0}', space=vmem, size = 0x1000, scoped, tag = 'scoped mem for input reshape']
    %s3 = sshll.u32 1, 2
    %s4 = ssub.s32 %s3, 1
    %v5 = vld [vmem:[%s0] sm:%s4]
    %6 = vst [vmem:[#allocation0] sm:%s4] %v5
    %v7 = vld [vmem:[#allocation0] sm:$0x3]
    %vm8 = vcmask 261120
    %9 = vst.msk [vmem:[%s1] ss:$4 sm:$0x3] %vm8, %v7
    %v10 = vld [vmem:[#allocation0] sm:$0x3]
    %11 = vrot.lane.b32.xlu0 %v10, 96
    %v12 = vpop.permute.xlu0 %11
    %vm13 = vcmask 261120
    %s14 = scalar_lea.vmem %s1, 1
    %15 = vst.msk [vmem:[%s14] ss:$4 sm:$0x3] %vm13, %v12
    %v16 = vld [vmem:[#allocation0] sm:$0x3]
    %17 = vrot.lane.b32.xlu0 %v16, 64
    %v18 = vpop.permute.xlu0 %17
    %vm19 = vcmask 261120
    %s20 = scalar_lea.vmem %s1, 2
    %21 = vst.msk [vmem:[%s20] ss:$4 sm:$0x3] %vm19, %v18
    %v22 = vld [vmem:[#allocation0] sm:$0x3]
    %23 = vrot.lane.b32.xlu0 %v22, 32
    %v24 = vpop.permute.xlu0 %23
    %vm25 = vcmask 261120
    %s26 = scalar_lea.vmem %s1, 3
    %27 = vst.msk [vmem:[%s26] ss:$4 sm:$0x3] %vm25, %v24

// kernel: encoder_forward.3
$region0: #{encoder_forward.3}
  #allocation0 [shape = 'u32[]', space=smem, size = 0x4, offset = 0x4, fixed_abs, tag = 'smem constant byte address 0x4 - core index']
  #allocation1 [shape = 'u32[144,128]{1,0:T(1,128)}', space=vmem, size = 0x12000, scoped, tag = 'internal scratch']
  %s0 = inlined_call_operand.vmem [shape: f32[2,8,8], index: 0, kind: input, shape index: {}]
  %s1 = inlined_call_operand.vmem [shape: f32[2,8,8], index: 1, kind: output, shape index: {}]
  %s2 = sld [smem:[#allocation0]]
  $region14: #{encoder_forward.3} parent=0
    _
  %s4 = ssub.s32 1, %s2
  %s5 = scalar_select 0, %s4, %s2
  // Predicated region
  $region2: #{encoder_forward.3} parent=0 // pred_check
    _
  $region3: #{encoder_forward.3} parent=0 // pred_check_branch
    %7 = sbr.rel (0) target = $region5
  $region4: #{encoder_forward.3} parent=0 // pred_region
    _
  $region5: #{encoder_forward.3} parent=0 // pred_fallthru
    _
  %v8 = vld [vmem:[%s0] sm:$0xff]
  %v9 = vld [vmem:[%s0 + $0x8] sm:$0xff]
  %vm10 = vcmask 64512
  %v11 = vsel %vm10, %v8, 0.0
  %12 = vadd.xlane.f32.xlu0 %v11
  %v13 = vpop.xlane.xlu0 %12
  %v14 = vsel %vm10, %v9, 0.0
  %15 = vadd.xlane.f32.xlu0 %v14
  %v16 = vpop.xlane.xlu0 %15
  %v17 = vadd.f32 %v13, 1.0
  %v18 = vadd.f32 %v16, 1.0
  %vm19 = vcmp.ne.f32.partialorder %v17, 0.0
  %vm20 = vcmp.ne.f32.partialorder %v18, 0.0
  %v21 = vrcp.pop %v17
  %v22 = vmul.f32 1.0, %v21
  %v23 = vrcp.pop %v18
  %v24 = vmul.f32 1.0, %v23
  %v25 = vsel %vm19, %v22, 0.0
  %v26 = vsel %vm20, %v24, 0.0
  %v27 = vlaneseq
  %v28 = vshrl.u32 %v27, 7
  %v29 = vlaneseq
  %v30 = vand.u32 %v29, 127
  %vm31 = vcmp.eq.s32.totalorder %v28, %v30
  %v32 = vsel %vm31, 1, 0
  %vm33 = vcmp.eq.s32.totalorder %v32, 1
  %v34 = vsel %vm33, %v25, 0.0
  %v35 = vsel %vm33, %v26, 0.0
  %v36 = vmul.f32 %v25, %v8
  %v37 = vmul.f32 %v26, %v9
  %v38 = vadd.f32 %v36, %v34
  %v39 = vadd.f32 %v37, %v35
  %40 = vxpose.xlu0.b32.start [1/16] %v38, 128
  %41 = vxpose.xlu0.b32.cont [2/16] 0.0, 128
  %42 = vxpose.xlu0.b32.cont [3/16] 0.0, 128
  %43 = vxpose.xlu0.b32.cont [4/16] 0.0, 128
  %44 = vxpose.xlu0.b32.cont [5/16] 0.0, 128
  %45 = vxpose.xlu0.b32.cont [6/16] 0.0, 128
  %46 = vxpose.xlu0.b32.cont [7/16] 0.0, 128
  %47 = vxpose.xlu0.b32.cont [8/16] 0.0, 128
  %48 = vxpose.xlu0.b32.cont [9/16] 0.0, 128
  %49 = vxpose.xlu0.b32.cont [10/16] 0.0, 128
  %50 = vxpose.xlu0.b32.cont [11/16] 0.0, 128
  %51 = vxpose.xlu0.b32.cont [12/16] 0.0, 128
  %52 = vxpose.xlu0.b32.cont [13/16] 0.0, 128
  %53 = vxpose.xlu0.b32.cont [14/16] 0.0, 128
  %54 = vxpose.xlu0.b32.cont [15/16] 0.0, 128
  %55 = vxpose.xlu0.b32.end [16/16] 0.0, 128
  %v56 = vpop.trf.xlu0
  %v57 = vpop.trf.xlu0
  %v58 = vpop.trf.xlu0
  %v59 = vpop.trf.xlu0
  %v60 = vpop.trf.xlu0
  %v61 = vpop.trf.xlu0
  %v62 = vpop.trf.xlu0
  %v63 = vpop.trf.xlu0
  %v64 = vpop.trf.xlu0
  %v65 = vpop.trf.xlu0
  %v66 = vpop.trf.xlu0
  %v67 = vpop.trf.xlu0
  %v68 = vpop.trf.xlu0
  %v69 = vpop.trf.xlu0
  %v70 = vpop.trf.xlu0
  %v71 = vpop.trf.xlu0
  %72 = vxpose.xlu0.b32.start [1/16] %v39, 128
  %73 = vxpose.xlu0.b32.cont [2/16] 0.0, 128
  %74 = vxpose.xlu0.b32.cont [3/16] 0.0, 128
  %75 = vxpose.xlu0.b32.cont [4/16] 0.0, 128
  %76 = vxpose.xlu0.b32.cont [5/16] 0.0, 128
  %77 = vxpose.xlu0.b32.cont [6/16] 0.0, 128
  %78 = vxpose.xlu0.b32.cont [7/16] 0.0, 128
  %79 = vxpose.xlu0.b32.cont [8/16] 0.0, 128
  %80 = vxpose.xlu0.b32.cont [9/16] 0.0, 128
  %81 = vxpose.xlu0.b32.cont [10/16] 0.0, 128
  %82 = vxpose.xlu0.b32.cont [11/16] 0.0, 128
  %83 = vxpose.xlu0.b32.cont [12/16] 0.0, 128
  %84 = vxpose.xlu0.b32.cont [13/16] 0.0, 128
  %85 = vxpose.xlu0.b32.cont [14/16] 0.0, 128
  %86 = vxpose.xlu0.b32.cont [15/16] 0.0, 128
  %87 = vxpose.xlu0.b32.end [16/16] 0.0, 128
  %v88 = vpop.trf.xlu0
  %v89 = vpop.trf.xlu0
  %v90 = vpop.trf.xlu0
  %v91 = vpop.trf.xlu0
  %v92 = vpop.trf.xlu0
  %v93 = vpop.trf.xlu0
  %v94 = vpop.trf.xlu0
  %v95 = vpop.trf.xlu0
  %v96 = vpop.trf.xlu0
  %v97 = vpop.trf.xlu0
  %v98 = vpop.trf.xlu0
  %v99 = vpop.trf.xlu0
  %v100 = vpop.trf.xlu0
  %v101 = vpop.trf.xlu0
  %v102 = vpop.trf.xlu0
  %v103 = vpop.trf.xlu0
  %104 = vst.msk [vmem:[%s1] sm:$0xff] %vm10, %v56
  %105 = vst.msk [vmem:[%s1 + $0x8] sm:$0xff] %vm10, %v88
  // Predicated region
  $region6: #{encoder_forward.3} parent=0 // pred_check
    _
  $region7: #{encoder_forward.3} parent=0 // pred_check_branch
    %107 = sbr.rel (0) target = $region9
  $region8: #{encoder_forward.3} parent=0 // pred_region
    _
  $region9: #{encoder_forward.3} parent=0 // pred_fallthru
    _
  // Predicated region
  $region10: #{encoder_forward.3} parent=0 // pred_check
    _
  $region11: #{encoder_forward.3} parent=0 // pred_check_branch
    %109 = sbr.rel (0) target = $region13
  $region12: #{encoder_forward.3} parent=0 // pred_region
    _
  $region13: #{encoder_forward.3} parent=0 // pred_fallthru
    _

// kernel: encoder_forward.4
$region0: #{encoder_forward.4}
  #allocation0 [shape = 'u32[]', space=smem, size = 0x4, offset = 0x4, fixed_abs, tag = 'smem constant byte address 0x4 - core index']
  #allocation1 [shape = 'u32[144,128]{1,0:T(1,128)}', space=vmem, size = 0x12000, scoped, tag = 'internal scratch']
  %s0 = inlined_call_operand.vmem [shape: f32[2,8,8], index: 0, kind: input, shape index: {}]
  %s1 = inlined_call_operand.vmem [shape: f32[8,8], index: 1, kind: input, shape index: {}]
  %s2 = inlined_call_operand.vmem [shape: f32[2,8,2], index: 2, kind: input, shape index: {}]
  %s3 = inlined_call_operand.vmem [shape: f32[2,8,16], index: 3, kind: input, shape index: {}]
  %s4 = inlined_call_operand.vmem [shape: f32[8,32], index: 4, kind: input, shape index: {}]
  %s5 = inlined_call_operand.vmem [shape: f32[3,2,32], index: 5, kind: input, shape index: {}]
  %s6 = inlined_call_operand.vmem [shape: f32[3,32,32], index: 6, kind: input, shape index: {}]
  %s7 = inlined_call_operand.vmem [shape: f32[1,32], index: 7, kind: input, shape index: {}]
  %s8 = inlined_call_operand.vmem [shape: f32[3,2,16], index: 8, kind: input, shape index: {}]
  %s9 = inlined_call_operand.hbm [shape: f32[3,16,16], index: 9, kind: input, shape index: {}]
  %s10 = inlined_call_operand.hbm [shape: f32[1,16], index: 10, kind: input, shape index: {}]
  %s11 = inlined_call_operand.vmem [shape: f32[2,8,16], index: 11, kind: output, shape index: {}]
  %s12 = sld [smem:[#allocation0]]
  $region85: #{encoder_forward.4} parent=0
    _
  %s14 = ssub.s32 1, %s12
  %s15 = scalar_select 0, %s14, %s12
  $region1: #{encoder_forward.4} parent=0
    #allocation2 [shape = 'u8[24576]{0}', space=vmem, size = 0x6000, scoped, tag = 'input window, operand 9, single buffered']
    #allocation3 [shape = 's32[2]{0}', space=sflag, size = 0x8, scoped, tag = 'scoped memory for encoder_forward.4']
    #allocation4 [shape = 'u8[512]{0}', space=vmem, size = 0x400, scoped, tag = 'input window, operand 10, single buffered']
    #allocation5 [shape = 's32[1]{0}', space=sflag, size = 0x4, scoped, tag = 'scoped memory for encoder_forward.4']
    %16 = vsyncpa [#allocation3], 0
    %17 = vsyncpa [#allocation5], 0
    loop: start=0, step=1, limit=4
    $region2: #{encoder_forward.4} parent=1 // loop_pre_header
      _
    $region3: #{encoder_forward.4} parent=1 // loop_header
      %s19 = sphi 0, %s23
      %p20 = scmp.ge.s32.totalorder %s19, 4
      %s29 = sphi 0, %s31
      %s32 = sphi 0, %s29
      %s33 = sphi 0, %s32
      %s49 = sphi 0, %s33
      %s53 = sphi 0, %s53
      %s55 = sphi 0, %s53
      %s56 = sphi 0, %s55
      %s70 = sphi 0, %s56
      %s76 = sphi 0, %s78
      %s79 = sphi 0, %s76
      %s80 = sphi 0, %s79
      %s96 = sphi 0, %s80
      %s102 = sphi 0, %s104
      %s105 = sphi 0, %s102
      %s106 = sphi 0, %s105
      %s122 = sphi 0, %s106
      %s126 = sphi 0, %s126
      %s128 = sphi 0, %s126
      %s129 = sphi 0, %s128
      %s143 = sphi 0, %s129
      %s147 = sphi 0, %s147
      %s149 = sphi 0, %s147
      %s150 = sphi 0, %s149
      %s164 = sphi 0, %s150
      %s168 = sphi 0, %s168
      %s170 = sphi 0, %s168
      %s171 = sphi 0, %s170
      %s185 = sphi 0, %s171
      %s189 = sphi 0, %s189
      %s191 = sphi 0, %s189
      %s192 = sphi 0, %s191
      %s206 = sphi 0, %s192
      %s210 = sphi 0, %s210
      %s212 = sphi 0, %s210
      %s213 = sphi 0, %s212
      %s227 = sphi 0, %s213
      %s231 = sphi 0, %s231
      %s233 = sphi 0, %s231
      %s234 = sphi 0, %s233
      %s248 = sphi 0, %s234
      %s252 = sphi 0, %s252
      %s254 = sphi 0, %s252
      %s255 = sphi 0, %s254
      %s269 = sphi 0, %s255
      %s275 = sphi 0, %s277
      %s278 = sphi 0, %s275
      %s279 = sphi 0, %s278
      %s295 = sphi 0, %s279
    $region4: #{encoder_forward.4} parent=1 // loop_header_branch
      %22 = sbr.rel (%p20) target = $region8
    $region5: #{encoder_forward.4} parent=1 // loop_body
      %s24 = ssub.s32 %s19, 1
      %s25 = ssub.s32 %s19, 2
      %s26 = sadd.s32 %s19, 1
      %s27 = ssub.s32 %s19, %s26
      %p28 = scmp.eq.s32.totalorder %s27, 0
      %s30 = sadd.s32 %s29, 1
      %s31 = scalar_select %p28, %s29, %s30
      %p34 = pneg %p28
      %p35 = scmp.eq.s32.totalorder %s19, 1
      %p36 = por %p34, %p35
      %p37 = scmp.ne.s32.totalorder %s29, %s32
      %p38 = scmp.eq.s32.totalorder %s19, 0
      %p39 = por %p37, %p38
      %p40 = scmp.ne.s32.totalorder %s29, %s32
      %p41 = scmp.eq.s32.totalorder %s24, 1
      %p42 = por %p40, %p41
      %p43 = scmp.ne.s32.totalorder %s32, %s33
      %p44 = scmp.eq.s32.totalorder %s24, 0
      %p45 = por %p43, %p44
      %p46 = scmp.ne.s32.totalorder %s32, %s33
      %p47 = scmp.eq.s32.totalorder %s25, 1
      %p48 = por %p46, %p47
      %p50 = scmp.ne.s32.totalorder %s33, %s49
      %p51 = scmp.eq.s32.totalorder %s25, 0
      %p52 = por %p50, %p51
      %s54 = sadd.s32 %s53, 1
      %p57 = scmp.eq.s32.totalorder %s19, 1
      %p58 = scmp.ne.s32.totalorder %s53, %s55
      %p59 = scmp.eq.s32.totalorder %s19, 0
      %p60 = por %p58, %p59
      %p61 = scmp.ne.s32.totalorder %s53, %s55
      %p62 = scmp.eq.s32.totalorder %s24, 1
      %p63 = por %p61, %p62
      %p64 = scmp.ne.s32.totalorder %s55, %s56
      %p65 = scmp.eq.s32.totalorder %s24, 0
      %p66 = por %p64, %p65
      %p67 = scmp.ne.s32.totalorder %s55, %s56
      %p68 = scmp.eq.s32.totalorder %s25, 1
      %p69 = por %p67, %p68
      %p71 = scmp.ne.s32.totalorder %s56, %s70
      %p72 = scmp.eq.s32.totalorder %s25, 0
      %p73 = por %p71, %p72
      %s74 = ssub.s32 %s19, %s26
      %p75 = scmp.eq.s32.totalorder %s74, 0
      %s77 = sadd.s32 %s76, 1
      %s78 = scalar_select %p75, %s76, %s77
      %p81 = pneg %p75
      %p82 = scmp.eq.s32.totalorder %s19, 1
      %p83 = por %p81, %p82
      %p84 = scmp.ne.s32.totalorder %s76, %s79
      %p85 = scmp.eq.s32.totalorder %s19, 0
      %p86 = por %p84, %p85
      %p87 = scmp.ne.s32.totalorder %s76, %s79
      %p88 = scmp.eq.s32.totalorder %s24, 1
      %p89 = por %p87, %p88
      %p90 = scmp.ne.s32.totalorder %s79, %s80
      %p91 = scmp.eq.s32.totalorder %s24, 0
      %p92 = por %p90, %p91
      %p93 = scmp.ne.s32.totalorder %s79, %s80
      %p94 = scmp.eq.s32.totalorder %s25, 1
      %p95 = por %p93, %p94
      %p97 = scmp.ne.s32.totalorder %s80, %s96
      %p98 = scmp.eq.s32.totalorder %s25, 0
      %p99 = por %p97, %p98
      %s100 = ssub.s32 %s19, %s26
      %p101 = scmp.eq.s32.totalorder %s100, 0
      %s103 = sadd.s32 %s102, 1
      %s104 = scalar_select %p101, %s102, %s103
      %p107 = pneg %p101
      %p108 = scmp.eq.s32.totalorder %s19, 1
      %p109 = por %p107, %p108
      %p110 = scmp.ne.s32.totalorder %s102, %s105
      %p111 = scmp.eq.s32.totalorder %s19, 0
      %p112 = por %p110, %p111
      %p113 = scmp.ne.s32.totalorder %s102, %s105
      %p114 = scmp.eq.s32.totalorder %s24, 1
      %p115 = por %p113, %p114
      %p116 = scmp.ne.s32.totalorder %s105, %s106
      %p117 = scmp.eq.s32.totalorder %s24, 0
      %p118 = por %p116, %p117
      %p119 = scmp.ne.s32.totalorder %s105, %s106
      %p120 = scmp.eq.s32.totalorder %s25, 1
      %p121 = por %p119, %p120
      %p123 = scmp.ne.s32.totalorder %s106, %s122
      %p124 = scmp.eq.s32.totalorder %s25, 0
      %p125 = por %p123, %p124
      %s127 = sadd.s32 %s126, 1
      %p130 = scmp.eq.s32.totalorder %s19, 1
      %p131 = scmp.ne.s32.totalorder %s126, %s128
      %p132 = scmp.eq.s32.totalorder %s19, 0
      %p133 = por %p131, %p132
      %p134 = scmp.ne.s32.totalorder %s126, %s128
      %p135 = scmp.eq.s32.totalorder %s24, 1
      %p136 = por %p134, %p135
      %p137 = scmp.ne.s32.totalorder %s128, %s129
      %p138 = scmp.eq.s32.totalorder %s24, 0
      %p139 = por %p137, %p138
      %p140 = scmp.ne.s32.totalorder %s128, %s129
      %p141 = scmp.eq.s32.totalorder %s25, 1
      %p142 = por %p140, %p141
      %p144 = scmp.ne.s32.totalorder %s129, %s143
      %p145 = scmp.eq.s32.totalorder %s25, 0
      %p146 = por %p144, %p145
      %s148 = sadd.s32 %s147, 1
      %p151 = scmp.eq.s32.totalorder %s19, 1
      %p152 = scmp.ne.s32.totalorder %s147, %s149
      %p153 = scmp.eq.s32.totalorder %s19, 0
      %p154 = por %p152, %p153
      %p155 = scmp.ne.s32.totalorder %s147, %s149
      %p156 = scmp.eq.s32.totalorder %s24, 1
      %p157 = por %p155, %p156
      %p158 = scmp.ne.s32.totalorder %s149, %s150
      %p159 = scmp.eq.s32.totalorder %s24, 0
      %p160 = por %p158, %p159
      %p161 = scmp.ne.s32.totalorder %s149, %s150
      %p162 = scmp.eq.s32.totalorder %s25, 1
      %p163 = por %p161, %p162
      %p165 = scmp.ne.s32.totalorder %s150, %s164
      %p166 = scmp.eq.s32.totalorder %s25, 0
      %p167 = por %p165, %p166
      %s169 = sadd.s32 %s168, 1
      %p172 = scmp.eq.s32.totalorder %s19, 1
      %p173 = scmp.ne.s32.totalorder %s168, %s170
      %p174 = scmp.eq.s32.totalorder %s19, 0
      %p175 = por %p173, %p174
      %p176 = scmp.ne.s32.totalorder %s168, %s170
      %p177 = scmp.eq.s32.totalorder %s24, 1
      %p178 = por %p176, %p177
      %p179 = scmp.ne.s32.totalorder %s170, %s171
      %p180 = scmp.eq.s32.totalorder %s24, 0
      %p181 = por %p179, %p180
      %p182 = scmp.ne.s32.totalorder %s170, %s171
      %p183 = scmp.eq.s32.totalorder %s25, 1
      %p184 = por %p182, %p183
      %p186 = scmp.ne.s32.totalorder %s171, %s185
      %p187 = scmp.eq.s32.totalorder %s25, 0
      %p188 = por %p186, %p187
      %s190 = sadd.s32 %s189, 1
      %p193 = scmp.eq.s32.totalorder %s19, 1
      %p194 = scmp.ne.s32.totalorder %s189, %s191
      %p195 = scmp.eq.s32.totalorder %s19, 0
      %p196 = por %p194, %p195
      %p197 = scmp.ne.s32.totalorder %s189, %s191
      %p198 = scmp.eq.s32.totalorder %s24, 1
      %p199 = por %p197, %p198
      %p200 = scmp.ne.s32.totalorder %s191, %s192
      %p201 = scmp.eq.s32.totalorder %s24, 0
      %p202 = por %p200, %p201
      %p203 = scmp.ne.s32.totalorder %s191, %s192
      %p204 = scmp.eq.s32.totalorder %s25, 1
      %p205 = por %p203, %p204
      %p207 = scmp.ne.s32.totalorder %s192, %s206
      %p208 = scmp.eq.s32.totalorder %s25, 0
      %p209 = por %p207, %p208
      %s211 = sadd.s32 %s210, 1
      %p214 = scmp.eq.s32.totalorder %s19, 1
      %p215 = scmp.ne.s32.totalorder %s210, %s212
      %p216 = scmp.eq.s32.totalorder %s19, 0
      %p217 = por %p215, %p216
      %p218 = scmp.ne.s32.totalorder %s210, %s212
      %p219 = scmp.eq.s32.totalorder %s24, 1
      %p220 = por %p218, %p219
      %p221 = scmp.ne.s32.totalorder %s212, %s213
      %p222 = scmp.eq.s32.totalorder %s24, 0
      %p223 = por %p221, %p222
      %p224 = scmp.ne.s32.totalorder %s212, %s213
      %p225 = scmp.eq.s32.totalorder %s25, 1
      %p226 = por %p224, %p225
      %p228 = scmp.ne.s32.totalorder %s213, %s227
      %p229 = scmp.eq.s32.totalorder %s25, 0
      %p230 = por %p228, %p229
      %s232 = sadd.s32 %s231, 1
      %p235 = scmp.eq.s32.totalorder %s19, 1
      %p236 = scmp.ne.s32.totalorder %s231, %s233
      %p237 = scmp.eq.s32.totalorder %s19, 0
      %p238 = por %p236, %p237
      %p239 = scmp.ne.s32.totalorder %s231, %s233
      %p240 = scmp.eq.s32.totalorder %s24, 1
      %p241 = por %p239, %p240
      %p242 = scmp.ne.s32.totalorder %s233, %s234
      %p243 = scmp.eq.s32.totalorder %s24, 0
      %p244 = por %p242, %p243
      %p245 = scmp.ne.s32.totalorder %s233, %s234
      %p246 = scmp.eq.s32.totalorder %s25, 1
      %p247 = por %p245, %p246
      %p249 = scmp.ne.s32.totalorder %s234, %s248
      %p250 = scmp.eq.s32.totalorder %s25, 0
      %p251 = por %p249, %p250
      %s253 = sadd.s32 %s252, 1
      %p256 = scmp.eq.s32.totalorder %s19, 1
      %p257 = scmp.ne.s32.totalorder %s252, %s254
      %p258 = scmp.eq.s32.totalorder %s19, 0
      %p259 = por %p257, %p258
      %p260 = scmp.ne.s32.totalorder %s252, %s254
      %p261 = scmp.eq.s32.totalorder %s24, 1
      %p262 = por %p260, %p261
      %p263 = scmp.ne.s32.totalorder %s254, %s255
      %p264 = scmp.eq.s32.totalorder %s24, 0
      %p265 = por %p263, %p264
      %p266 = scmp.ne.s32.totalorder %s254, %s255
      %p267 = scmp.eq.s32.totalorder %s25, 1
      %p268 = por %p266, %p267
      %p270 = scmp.ne.s32.totalorder %s255, %s269
      %p271 = scmp.eq.s32.totalorder %s25, 0
      %p272 = por %p270, %p271
      %s273 = ssub.s32 %s19, %s26
      %p274 = scmp.eq.s32.totalorder %s273, 0
      %s276 = sadd.s32 %s275, 1
      %s277 = scalar_select %p274, %s275, %s276
      %p280 = pneg %p274
      %p281 = scmp.eq.s32.totalorder %s19, 1
      %p282 = por %p280, %p281
      %p283 = scmp.ne.s32.totalorder %s275, %s278
      %p284 = scmp.eq.s32.totalorder %s19, 0
      %p285 = por %p283, %p284
      %p286 = scmp.ne.s32.totalorder %s275, %s278
      %p287 = scmp.eq.s32.totalorder %s24, 1
      %p288 = por %p286, %p287
      %p289 = scmp.ne.s32.totalorder %s278, %s279
      %p290 = scmp.eq.s32.totalorder %s24, 0
      %p291 = por %p289, %p290
      %p292 = scmp.ne.s32.totalorder %s278, %s279
      %p293 = scmp.eq.s32.totalorder %s25, 1
      %p294 = por %p292, %p293
      %p296 = scmp.ne.s32.totalorder %s279, %s295
      %p297 = scmp.eq.s32.totalorder %s25, 0
      %p298 = por %p296, %p297
      %p299 = scmp.le.s32.totalorder 1, %s19
      %p300 = scmp.lt.s32.totalorder %s19, 3
      %p301 = pnand %p299, %p300
      %p302 = pneg %p301
      // Predicated region
      $region9: #{encoder_forward.4} parent=5 // pred_check
        _
      $region10: #{encoder_forward.4} parent=5 // pred_check_branch
        %304 = sbr.rel (%p301) target = $region12
      $region11: #{encoder_forward.4} parent=5 // pred_region
        %s305 = ssub.s32 %s19, 1
        // Predicated region
        $region13: #{encoder_forward.4} parent=11 // pred_check
          %p306 = pneg %p66
        $region14: #{encoder_forward.4} parent=11 // pred_check_branch
          %308 = sbr.rel (%p306) target = $region16
        $region15: #{encoder_forward.4} parent=11 // pred_region
          _
        $region16: #{encoder_forward.4} parent=11 // pred_fallthru
          _
        // Predicated region
        $region17: #{encoder_forward.4} parent=11 // pred_check
          %p309 = pneg %p139
        $region18: #{encoder_forward.4} parent=11 // pred_check_branch
          %311 = sbr.rel (%p309) target = $region20
        $region19: #{encoder_forward.4} parent=11 // pred_region
          _
        $region20: #{encoder_forward.4} parent=11 // pred_fallthru
          _
        // Predicated region
        $region21: #{encoder_forward.4} parent=11 // pred_check
          %p312 = pneg %p160
        $region22: #{encoder_forward.4} parent=11 // pred_check_branch
          %314 = sbr.rel (%p312) target = $region24
        $region23: #{encoder_forward.4} parent=11 // pred_region
          _
        $region24: #{encoder_forward.4} parent=11 // pred_fallthru
          _
        // Predicated region
        $region25: #{encoder_forward.4} parent=11 // pred_check
          %p315 = pneg %p181
        $region26: #{encoder_forward.4} parent=11 // pred_check_branch
          %317 = sbr.rel (%p315) target = $region28
        $region27: #{encoder_forward.4} parent=11 // pred_region
          _
        $region28: #{encoder_forward.4} parent=11 // pred_fallthru
          _
        // Predicated region
        $region29: #{encoder_forward.4} parent=11 // pred_check
          %p318 = pneg %p202
        $region30: #{encoder_forward.4} parent=11 // pred_check_branch
          %320 = sbr.rel (%p318) target = $region32
        $region31: #{encoder_forward.4} parent=11 // pred_region
          _
        $region32: #{encoder_forward.4} parent=11 // pred_fallthru
          _
        // Predicated region
        $region33: #{encoder_forward.4} parent=11 // pred_check
          %p321 = pneg %p223
        $region34: #{encoder_forward.4} parent=11 // pred_check_branch
          %323 = sbr.rel (%p321) target = $region36
        $region35: #{encoder_forward.4} parent=11 // pred_region
          _
        $region36: #{encoder_forward.4} parent=11 // pred_fallthru
          _
        // Predicated region
        $region37: #{encoder_forward.4} parent=11 // pred_check
          %p324 = pneg %p244
        $region38: #{encoder_forward.4} parent=11 // pred_check_branch
          %326 = sbr.rel (%p324) target = $region40
        $region39: #{encoder_forward.4} parent=11 // pred_region
          %s328 = ssub.s32 768, 768
          %329 = vsyncadd [#allocation3], %s328
          %s330 = sshll.u32 [#allocation2], 4
          %s331 = int_to_ptr.vmem [resolvable:$true] %s330
          %336 = dma.hbm_to_vmem [thread:$0]  %s9, 768, %s331, [#allocation3], 128, 128, 8
        $region40: #{encoder_forward.4} parent=11 // pred_fallthru
          _
        // Predicated region
        $region41: #{encoder_forward.4} parent=11 // pred_check
          %p337 = pneg %p265
        $region42: #{encoder_forward.4} parent=11 // pred_check_branch
          %339 = sbr.rel (%p337) target = $region44
        $region43: #{encoder_forward.4} parent=11 // pred_region
          %s341 = ssub.s32 16, 16
          %342 = vsyncadd [#allocation5], %s341
          %s344 = sshll.u32 [#allocation4], 4
          %s345 = int_to_ptr.vmem [resolvable:$true] %s344
          %347 = dma.hbm_to_vmem [thread:$0]  %s10, 16, %s345, [#allocation5]
        $region44: #{encoder_forward.4} parent=11 // pred_fallthru
          _
      $region12: #{encoder_forward.4} parent=5 // pred_fallthru
        _
      %p348 = scmp.lt.s32.totalorder %s19, 2
      // Predicated region
      $region45: #{encoder_forward.4} parent=5 // pred_check
        %p349 = pneg %p348
      $region46: #{encoder_forward.4} parent=5 // pred_check_branch
        %351 = sbr.rel (%p349) target = $region48
      $region47: #{encoder_forward.4} parent=5 // pred_region
        // Predicated region
        $region49: #{encoder_forward.4} parent=47 // pred_check
          %p352 = pneg %p39
        $region50: #{encoder_forward.4} parent=47 // pred_check_branch
          %354 = sbr.rel (%p352) target = $region52
        $region51: #{encoder_forward.4} parent=47 // pred_region
          %p355 = scmp.lt.s32.totalorder %s19, 1
          %s356 = scalar_select %p355, %s19, 1
          %s357 = smul.addr %s356, 8
          %s358 = scalar_lea.vmem %s0, %s357
        $region52: #{encoder_forward.4} parent=47 // pred_fallthru
          _
        // Predicated region
        $region53: #{encoder_forward.4} parent=47 // pred_check
          %p359 = pneg %p86
        $region54: #{encoder_forward.4} parent=47 // pred_check_branch
          %361 = sbr.rel (%p359) target = $region56
        $region55: #{encoder_forward.4} parent=47 // pred_region
          %p362 = scmp.lt.s32.totalorder %s19, 1
          %s363 = scalar_select %p362, %s19, 1
          %s364 = smul.addr %s363, 8
          %s365 = scalar_lea.vmem %s2, %s364
        $region56: #{encoder_forward.4} parent=47 // pred_fallthru
          _
        // Predicated region
        $region57: #{encoder_forward.4} parent=47 // pred_check
          %p366 = pneg %p112
        $region58: #{encoder_forward.4} parent=47 // pred_check_branch
          %368 = sbr.rel (%p366) target = $region60
        $region59: #{encoder_forward.4} parent=47 // pred_region
          %p369 = scmp.lt.s32.totalorder %s19, 1
          %s370 = scalar_select %p369, %s19, 1
          %s371 = smul.addr %s370, 8
          %s372 = scalar_lea.vmem %s3, %s371
        $region60: #{encoder_forward.4} parent=47 // pred_fallthru
          _
      $region48: #{encoder_forward.4} parent=5 // pred_fallthru
        _
      %p373 = scmp.le.s32.totalorder 1, %s19
      %p374 = scmp.lt.s32.totalorder %s19, 3
      %p375 = pnand %p373, %p374
      %p376 = pneg %p375
      // Predicated region
      $region61: #{encoder_forward.4} parent=5 // pred_check
        _
      $region62: #{encoder_forward.4} parent=5 // pred_check_branch
        %378 = sbr.rel (%p375) target = $region64
      $region63: #{encoder_forward.4} parent=5 // pred_region
        %s379 = ssub.s32 %s19, 1
        // Predicated region
        $region65: #{encoder_forward.4} parent=63 // pred_check
          %p380 = pneg %p244
        $region66: #{encoder_forward.4} parent=63 // pred_check_branch
          %382 = sbr.rel (%p380) target = $region68
        $region67: #{encoder_forward.4} parent=63 // pred_region
          %383 = dma.done [#allocation3], 768
        $region68: #{encoder_forward.4} parent=63 // pred_fallthru
          _
        // Predicated region
        $region69: #{encoder_forward.4} parent=63 // pred_check
          %p384 = pneg %p265
        $region70: #{encoder_forward.4} parent=63 // pred_check_branch
          %386 = sbr.rel (%p384) target = $region72
        $region71: #{encoder_forward.4} parent=63 // pred_region
          %387 = dma.done [#allocation5], 16
        $region72: #{encoder_forward.4} parent=63 // pred_fallthru
          _
        %p388 = scmp.lt.s32.totalorder %s24, 1
        %s389 = scalar_select %p388, %s24, 1
        %s390 = smul.addr %s389, 8
        %s391 = scalar_lea.vmem %s0, %s390
        %p392 = pneg %p45
        %p393 = pneg %p42
        %p394 = pneg %p66
        %p395 = pneg %p63
        %p396 = scmp.lt.s32.totalorder %s24, 1
        %s397 = scalar_select %p396, %s24, 1
        %s398 = smul.addr %s397, 8
        %s399 = scalar_lea.vmem %s2, %s398
        %p400 = pneg %p92
        %p401 = pneg %p89
        %p402 = scmp.lt.s32.totalorder %s24, 1
        %s403 = scalar_select %p402, %s24, 1
        %s404 = smul.addr %s403, 8
        %s405 = scalar_lea.vmem %s3, %s404
        %p406 = pneg %p118
        %p407 = pneg %p115
        %p408 = pneg %p139
        %p409 = pneg %p136
        %p410 = pneg %p160
        %p411 = pneg %p157
        %p412 = pneg %p181
        %p413 = pneg %p178
        %p414 = pneg %p202
        %p415 = pneg %p199
        %p416 = pneg %p223
        %p417 = pneg %p220
        %p418 = pneg %p244
        %p419 = pneg %p241
        %p420 = pneg %p265
        %p421 = pneg %p262
        %p422 = pneg %p291
        %p423 = pneg %p288
        %p424 = scmp.lt.s32.totalorder %s24, 1
        %s425 = scalar_select %p424, %s24, 1
        %s426 = smul.addr %s425, 8
        %s427 = scalar_lea.vmem %s11, %s426
        %p428 = scmp.lt.s32.totalorder %s24, 1
        %s429 = scalar_select %p428, %s24, 1
        %s430 = smul.addr %s429, 8
        %s431 = scalar_lea.vmem %s0, %s430
        %p432 = scmp.lt.s32.totalorder %s24, 1
        %s433 = scalar_select %p432, %s24, 1
        %s434 = smul.addr %s433, 8
        %s435 = scalar_lea.vmem %s2, %s434
        %p436 = scmp.lt.s32.totalorder %s24, 1
        %s437 = scalar_select %p436, %s24, 1
        %s438 = smul.addr %s437, 8
        %s439 = scalar_lea.vmem %s3, %s438
        %p440 = scmp.lt.s32.totalorder %s24, 1
        %s441 = scalar_select %p440, %s24, 1
        %s442 = smul.addr %s441, 8
        %s443 = scalar_lea.vmem %s11, %s442
        %v444 = vld [vmem:[%s431] sm:$0xff]
        %v445 = vld [vmem:[%s1] sm:$0xff]
        %v446 = vld [vmem:[%s435] sm:$0xff]
        %v447 = vld [vmem:[%s439] sm:$0xff]
        %v448 = vld [vmem:[%s4] sm:$0xff]
        %v449 = vld [vmem:[%s5] sm:$0x3]
        %vm450 = vcmask 64512
        %v452 = vsel %vm450, %v444, 0
        %454 = vmatprep.subr.mxu0 0.0
        %455 = vmatpush1.msra.mxu0 0.0
        %456 = vmatprep.subr.mxu0 0.0
        %457 = vmatpush1.msra.mxu0 0.0
        %458 = vmatprep.subr.mxu0 0.0
        %459 = vmatpush1.msra.mxu0 0.0
        %460 = vmatprep.subr.mxu0 0.0
        %461 = vmatpush1.msra.mxu0 0.0
        %462 = vmatprep.subr.mxu0 0.0
        %463 = vmatpush1.msra.mxu0 0.0
        %464 = vmatprep.subr.mxu0 0.0
        %465 = vmatpush1.msra.mxu0 0.0
        %466 = vmatprep.subr.mxu0 0.0
        %467 = vmatpush1.msra.mxu0 0.0
        %468 = vmatprep.subr.mxu0 0.0
        %469 = vmatpush1.msra.mxu0 0.0
        %470 = vmatprep.subr.mxu0 0.0
        %471 = vmatpush1.msra.mxu0 0.0
        %472 = vmatprep.subr.mxu0 0.0
        %473 = vmatpush1.msra.mxu0 0.0
        %474 = vmatprep.subr.mxu0 0.0
        %475 = vmatpush1.msra.mxu0 0.0
        %476 = vmatprep.subr.mxu0 0.0
        %477 = vmatpush1.msra.mxu0 0.0
        %478 = vmatprep.subr.mxu0 0.0
        %479 = vmatpush1.msra.mxu0 0.0
        %480 = vmatprep.subr.mxu0 0.0
        %481 = vmatpush1.msra.mxu0 0.0
        %482 = vmatprep.subr.mxu0 0.0
        %483 = vmatpush1.msra.mxu0 0.0
        %484 = vmatprep.subr.mxu0 0.0
        %485 = vmatpush1.msra.mxu0 %v446
        %486 = vmatprep.subr.mxu0 0.0
        %487 = vmatpush2.msra.mxu0 0.0
        %488 = vmatprep.subr.mxu0 0.0
        %489 = vmatpush2.msra.mxu0 0.0
        %490 = vmatprep.subr.mxu0 0.0
        %491 = vmatpush2.msra.mxu0 0.0
        %492 = vmatprep.subr.mxu0 0.0
        %493 = vmatpush2.msra.mxu0 0.0
        %494 = vmatprep.subr.mxu0 0.0
        %495 = vmatpush2.msra.mxu0 0.0
        %496 = vmatprep.subr.mxu0 0.0
        %497 = vmatpush2.msra.mxu0 0.0
        %498 = vmatprep.subr.mxu0 0.0
        %499 = vmatpush2.msra.mxu0 0.0
        %500 = vmatprep.subr.mxu0 0.0
        %501 = vmatpush2.msra.mxu0 0.0
        %502 = vmatprep.subr.mxu0 0.0
        %503 = vmatpush2.msra.mxu0 0.0
        %504 = vmatprep.subr.mxu0 0.0
        %505 = vmatpush2.msra.mxu0 0.0
        %506 = vmatprep.subr.mxu0 0.0
        %507 = vmatpush2.msra.mxu0 0.0
        %508 = vmatprep.subr.mxu0 0.0
        %509 = vmatpush2.msra.mxu0 0.0
        %510 = vmatprep.subr.mxu0 0.0
        %511 = vmatpush2.msra.mxu0 0.0
        %512 = vmatprep.subr.mxu0 0.0
        %513 = vmatpush2.msra.mxu0 0.0
        %514 = vmatprep.subr.mxu0 0.0
        %515 = vmatpush2.msra.mxu0 0.0
        %516 = vmatprep.subr.mxu0 0.0
        %517 = vmatpush2.msra.mxu0 0.0
        %518 = vmatprep.mubr.f32.mxu0 0.0
        %519 = vmatmul.mubr.f32.gmra.mxu0 %v452
        %v520 = vpop.f32.mrf.mxu0
        %v521 = vadd.f32 0.0, %v520
        %v522 = vpop.f32.mrf.mxu0
        %523 = vdwg.mxu0
        %s524 = scalar_lea.vmem %s5, 2
        %v525 = vld [vmem:[%s524] sm:$0x3]
        %vm526 = vcmask 15360
        %v528 = vsel %vm526, %v521, 0
        %vm530 = vcmask 1041408
        %v532 = vsel %vm530, %v525, 0
        %534 = vmatprep.subr.mxu0 0.0
        %535 = vmatpush1.msra.mxu0 0.0
        %536 = vmatprep.subr.mxu0 0.0
        %537 = vmatpush1.msra.mxu0 0.0
        %538 = vmatprep.subr.mxu0 0.0
        %539 = vmatpush1.msra.mxu0 0.0
        %540 = vmatprep.subr.mxu0 0.0
        %541 = vmatpush1.msra.mxu0 0.0
        %542 = vmatprep.subr.mxu0 0.0
        %543 = vmatpush1.msra.mxu0 0.0
        %544 = vmatprep.subr.mxu0 0.0
        %545 = vmatpush1.msra.mxu0 0.0
        %546 = vmatprep.subr.mxu0 0.0
        %547 = vmatpush1.msra.mxu0 0.0
        %548 = vmatprep.subr.mxu0 0.0
        %549 = vmatpush1.msra.mxu0 0.0
        %550 = vmatprep.subr.mxu0 0.0
        %551 = vmatpush1.msra.mxu0 0.0
        %552 = vmatprep.subr.mxu0 0.0
        %553 = vmatpush1.msra.mxu0 0.0
        %554 = vmatprep.subr.mxu0 0.0
        %555 = vmatpush1.msra.mxu0 0.0
        %556 = vmatprep.subr.mxu0 0.0
        %557 = vmatpush1.msra.mxu0 0.0
        %558 = vmatprep.subr.mxu0 0.0
        %559 = vmatpush1.msra.mxu0 0.0
        %560 = vmatprep.subr.mxu0 0.0
        %561 = vmatpush1.msra.mxu0 0.0
        %562 = vmatprep.subr.mxu0 0.0
        %563 = vmatpush1.msra.mxu0 0.0
        %564 = vmatprep.subr.mxu0 0.0
        %565 = vmatpush1.msra.mxu0 %v532
        %566 = vmatprep.subr.mxu0 0.0
        %567 = vmatpush2.msra.mxu0 0.0
        %568 = vmatprep.subr.mxu0 0.0
        %569 = vmatpush2.msra.mxu0 0.0
        %570 = vmatprep.subr.mxu0 0.0
        %571 = vmatpush2.msra.mxu0 0.0
        %572 = vmatprep.subr.mxu0 0.0
        %573 = vmatpush2.msra.mxu0 0.0
        %574 = vmatprep.subr.mxu0 0.0
        %575 = vmatpush2.msra.mxu0 0.0
        %576 = vmatprep.subr.mxu0 0.0
        %577 = vmatpush2.msra.mxu0 0.0
        %578 = vmatprep.subr.mxu0 0.0
        %579 = vmatpush2.msra.mxu0 0.0
        %580 = vmatprep.subr.mxu0 0.0
        %581 = vmatpush2.msra.mxu0 0.0
        %582 = vmatprep.subr.mxu0 0.0
        %583 = vmatpush2.msra.mxu0 0.0
        %584 = vmatprep.subr.mxu0 0.0
        %585 = vmatpush2.msra.mxu0 0.0
        %586 = vmatprep.subr.mxu0 0.0
        %587 = vmatpush2.msra.mxu0 0.0
        %588 = vmatprep.subr.mxu0 0.0
        %589 = vmatpush2.msra.mxu0 0.0
        %590 = vmatprep.subr.mxu0 0.0
        %591 = vmatpush2.msra.mxu0 0.0
        %592 = vmatprep.subr.mxu0 0.0
        %593 = vmatpush2.msra.mxu0 0.0
        %594 = vmatprep.subr.mxu0 0.0
        %595 = vmatpush2.msra.mxu0 0.0
        %596 = vmatprep.subr.mxu0 0.0
        %597 = vmatpush2.msra.mxu0 0.0
        %598 = vmatprep.mubr.f32.mxu0 0.0
        %599 = vmatmul.mubr.f32.gmra.mxu0 %v528
        %v600 = vpop.f32.mrf.mxu0
        %v601 = vadd.f32 0.0, %v600
        %v602 = vpop.f32.mrf.mxu0
        %603 = vdwg.mxu0
        %v605 = vsel %vm526, %v446, 0
        %v608 = vsel %vm530, %v449, 0
        %610 = vmatprep.subr.mxu0 0.0
        %611 = vmatpush1.msra.mxu0 0.0
        %612 = vmatprep.subr.mxu0 0.0
        %613 = vmatpush1.msra.mxu0 0.0
        %614 = vmatprep.subr.mxu0 0.0
        %615 = vmatpush1.msra.mxu0 0.0
        %616 = vmatprep.subr.mxu0 0.0
        %617 = vmatpush1.msra.mxu0 0.0
        %618 = vmatprep.subr.mxu0 0.0
        %619 = vmatpush1.msra.mxu0 0.0
        %620 = vmatprep.subr.mxu0 0.0
        %621 = vmatpush1.msra.mxu0 0.0
        %622 = vmatprep.subr.mxu0 0.0
        %623 = vmatpush1.msra.mxu0 0.0
        %624 = vmatprep.subr.mxu0 0.0
        %625 = vmatpush1.msra.mxu0 0.0
        %626 = vmatprep.subr.mxu0 0.0
        %627 = vmatpush1.msra.mxu0 0.0
        %628 = vmatprep.subr.mxu0 0.0
        %629 = vmatpush1.msra.mxu0 0.0
        %630 = vmatprep.subr.mxu0 0.0
        %631 = vmatpush1.msra.mxu0 0.0
        %632 = vmatprep.subr.mxu0 0.0
        %633 = vmatpush1.msra.mxu0 0.0
        %634 = vmatprep.subr.mxu0 0.0
        %635 = vmatpush1.msra.mxu0 0.0
        %636 = vmatprep.subr.mxu0 0.0
        %637 = vmatpush1.msra.mxu0 0.0
        %638 = vmatprep.subr.mxu0 0.0
        %639 = vmatpush1.msra.mxu0 0.0
        %640 = vmatprep.subr.mxu0 0.0
        %641 = vmatpush1.msra.mxu0 %v608
        %642 = vmatprep.subr.mxu0 0.0
        %643 = vmatpush2.msra.mxu0 0.0
        %644 = vmatprep.subr.mxu0 0.0
        %645 = vmatpush2.msra.mxu0 0.0
        %646 = vmatprep.subr.mxu0 0.0
        %647 = vmatpush2.msra.mxu0 0.0
        %648 = vmatprep.subr.mxu0 0.0
        %649 = vmatpush2.msra.mxu0 0.0
        %650 = vmatprep.subr.mxu0 0.0
        %651 = vmatpush2.msra.mxu0 0.0
        %652 = vmatprep.subr.mxu0 0.0
        %653 = vmatpush2.msra.mxu0 0.0
        %654 = vmatprep.subr.mxu0 0.0
        %655 = vmatpush2.msra.mxu0 0.0
        %656 = vmatprep.subr.mxu0 0.0
        %657 = vmatpush2.msra.mxu0 0.0
        %658 = vmatprep.subr.mxu0 0.0
        %659 = vmatpush2.msra.mxu0 0.0
        %660 = vmatprep.subr.mxu0 0.0
        %661 = vmatpush2.msra.mxu0 0.0
        %662 = vmatprep.subr.mxu0 0.0
        %663 = vmatpush2.msra.mxu0 0.0
        %664 = vmatprep.subr.mxu0 0.0
        %665 = vmatpush2.msra.mxu0 0.0
        %666 = vmatprep.subr.mxu0 0.0
        %667 = vmatpush2.msra.mxu0 0.0
        %668 = vmatprep.subr.mxu0 0.0
        %669 = vmatpush2.msra.mxu0 0.0
        %670 = vmatprep.subr.mxu0 0.0
        %671 = vmatpush2.msra.mxu0 0.0
        %672 = vmatprep.subr.mxu0 0.0
        %673 = vmatpush2.msra.mxu0 0.0
        %674 = vmatprep.mubr.f32.mxu0 0.0
        %675 = vmatmul.mubr.f32.gmra.mxu0 %v605
        %v676 = vpop.f32.mrf.mxu0
        %v677 = vadd.f32 %v601, %v676
        %v678 = vpop.f32.mrf.mxu0
        %679 = vdwg.mxu0
        %680 = vmatprep.subr.mxu0 0.0
        %681 = vmatpush1.msra.mxu0 0.0
        %682 = vmatprep.subr.mxu0 0.0
        %683 = vmatpush1.msra.mxu0 0.0
        %684 = vmatprep.subr.mxu0 0.0
        %685 = vmatpush1.msra.mxu0 0.0
        %686 = vmatprep.subr.mxu0 0.0
        %687 = vmatpush1.msra.mxu0 0.0
        %688 = vmatprep.subr.mxu0 0.0
        %689 = vmatpush1.msra.mxu0 0.0
        %690 = vmatprep.subr.mxu0 0.0
        %691 = vmatpush1.msra.mxu0 0.0
        %692 = vmatprep.subr.mxu0 0.0
        %693 = vmatpush1.msra.mxu0 0.0
        %694 = vmatprep.subr.mxu0 0.0
        %695 = vmatpush1.msra.mxu0 0.0
        %696 = vmatprep.subr.mxu0 0.0
        %697 = vmatpush1.msra.mxu0 0.0
        %698 = vmatprep.subr.mxu0 0.0
        %699 = vmatpush1.msra.mxu0 0.0
        %700 = vmatprep.subr.mxu0 0.0
        %701 = vmatpush1.msra.mxu0 0.0
        %702 = vmatprep.subr.mxu0 0.0
        %703 = vmatpush1.msra.mxu0 0.0
        %704 = vmatprep.subr.mxu0 0.0
        %705 = vmatpush1.msra.mxu0 0.0
        %706 = vmatprep.subr.mxu0 0.0
        %707 = vmatpush1.msra.mxu0 0.0
        %708 = vmatprep.subr.mxu0 0.0
        %709 = vmatpush1.msra.mxu0 0.0
        %710 = vmatprep.subr.mxu0 0.0
        %711 = vmatpush1.msra.mxu0 %v521
        %712 = vmatprep.subr.mxu0 0.0
        %713 = vmatpush2.msra.mxu0 0.0
        %714 = vmatprep.subr.mxu0 0.0
        %715 = vmatpush2.msra.mxu0 0.0
        %716 = vmatprep.subr.mxu0 0.0
        %717 = vmatpush2.msra.mxu0 0.0
        %718 = vmatprep.subr.mxu0 0.0
        %719 = vmatpush2.msra.mxu0 0.0
        %720 = vmatprep.subr.mxu0 0.0
        %721 = vmatpush2.msra.mxu0 0.0
        %722 = vmatprep.subr.mxu0 0.0
        %723 = vmatpush2.msra.mxu0 0.0
        %724 = vmatprep.subr.mxu0 0.0
        %725 = vmatpush2.msra.mxu0 0.0
        %726 = vmatprep.subr.mxu0 0.0
        %727 = vmatpush2.msra.mxu0 0.0
        %728 = vmatprep.subr.mxu0 0.0
        %729 = vmatpush2.msra.mxu0 0.0
        %730 = vmatprep.subr.mxu0 0.0
        %731 = vmatpush2.msra.mxu0 0.0
        %732 = vmatprep.subr.mxu0 0.0
        %733 = vmatpush2.msra.mxu0 0.0
        %734 = vmatprep.subr.mxu0 0.0
        %735 = vmatpush2.msra.mxu0 0.0
        %736 = vmatprep.subr.mxu0 0.0
        %737 = vmatpush2.msra.mxu0 0.0
        %738 = vmatprep.subr.mxu0 0.0
        %739 = vmatpush2.msra.mxu0 0.0
        %740 = vmatprep.subr.mxu0 0.0
        %741 = vmatpush2.msra.mxu0 0.0
        %742 = vmatprep.subr.mxu0 0.0
        %743 = vmatpush2.msra.mxu0 0.0
        %744 = vmatprep.mubr.f32.mxu0 0.0
        %745 = vmatmul.mubr.f32.gmra.mxu0 %v452
        %v746 = vpop.f32.mrf.mxu0
        %v747 = vadd.f32 0.0, %v746
        %v748 = vpop.f32.mrf.mxu0
        %749 = vdwg.mxu0
        %v750 = vmul.f32 %v747, 2.0
        %v751 = vsub.f32 %v750, %v446
        %s752 = scalar_lea.vmem %s5, 4
        %v753 = vld [vmem:[%s752] sm:$0x3]
        %v755 = vsel %vm526, %v751, 0
        %v758 = vsel %vm530, %v753, 0
        %760 = vmatprep.subr.mxu0 0.0
        %761 = vmatpush1.msra.mxu0 0.0
        %762 = vmatprep.subr.mxu0 0.0
        %763 = vmatpush1.msra.mxu0 0.0
        %764 = vmatprep.subr.mxu0 0.0
        %765 = vmatpush1.msra.mxu0 0.0
        %766 = vmatprep.subr.mxu0 0.0
        %767 = vmatpush1.msra.mxu0 0.0
        %768 = vmatprep.subr.mxu0 0.0
        %769 = vmatpush1.msra.mxu0 0.0
        %770 = vmatprep.subr.mxu0 0.0
        %771 = vmatpush1.msra.mxu0 0.0
        %772 = vmatprep.subr.mxu0 0.0
        %773 = vmatpush1.msra.mxu0 0.0
        %774 = vmatprep.subr.mxu0 0.0
        %775 = vmatpush1.msra.mxu0 0.0
        %776 = vmatprep.subr.mxu0 0.0
        %777 = vmatpush1.msra.mxu0 0.0
        %778 = vmatprep.subr.mxu0 0.0
        %779 = vmatpush1.msra.mxu0 0.0
        %780 = vmatprep.subr.mxu0 0.0
        %781 = vmatpush1.msra.mxu0 0.0
        %782 = vmatprep.subr.mxu0 0.0
        %783 = vmatpush1.msra.mxu0 0.0
        %784 = vmatprep.subr.mxu0 0.0
        %785 = vmatpush1.msra.mxu0 0.0
        %786 = vmatprep.subr.mxu0 0.0
        %787 = vmatpush1.msra.mxu0 0.0
        %788 = vmatprep.subr.mxu0 0.0
        %789 = vmatpush1.msra.mxu0 0.0
        %790 = vmatprep.subr.mxu0 0.0
        %791 = vmatpush1.msra.mxu0 %v758
        %792 = vmatprep.subr.mxu0 0.0
        %793 = vmatpush2.msra.mxu0 0.0
        %794 = vmatprep.subr.mxu0 0.0
        %795 = vmatpush2.msra.mxu0 0.0
        %796 = vmatprep.subr.mxu0 0.0
        %797 = vmatpush2.msra.mxu0 0.0
        %798 = vmatprep.subr.mxu0 0.0
        %799 = vmatpush2.msra.mxu0 0.0
        %800 = vmatprep.subr.mxu0 0.0
        %801 = vmatpush2.msra.mxu0 0.0
        %802 = vmatprep.subr.mxu0 0.0
        %803 = vmatpush2.msra.mxu0 0.0
        %804 = vmatprep.subr.mxu0 0.0
        %805 = vmatpush2.msra.mxu0 0.0
        %806 = vmatprep.subr.mxu0 0.0
        %807 = vmatpush2.msra.mxu0 0.0
        %808 = vmatprep.subr.mxu0 0.0
        %809 = vmatpush2.msra.mxu0 0.0
        %810 = vmatprep.subr.mxu0 0.0
        %811 = vmatpush2.msra.mxu0 0.0
        %812 = vmatprep.subr.mxu0 0.0
        %813 = vmatpush2.msra.mxu0 0.0
        %814 = vmatprep.subr.mxu0 0.0
        %815 = vmatpush2.msra.mxu0 0.0
        %816 = vmatprep.subr.mxu0 0.0
        %817 = vmatpush2.msra.mxu0 0.0
        %818 = vmatprep.subr.mxu0 0.0
        %819 = vmatpush2.msra.mxu0 0.0
        %820 = vmatprep.subr.mxu0 0.0
        %821 = vmatpush2.msra.mxu0 0.0
        %822 = vmatprep.subr.mxu0 0.0
        %823 = vmatpush2.msra.mxu0 0.0
        %824 = vmatprep.mubr.f32.mxu0 0.0
        %825 = vmatmul.mubr.f32.gmra.mxu0 %v755
        %v826 = vpop.f32.mrf.mxu0
        %v827 = vadd.f32 0.0, %v826
        %v828 = vpop.f32.mrf.mxu0
        %829 = vdwg.mxu0
        %v830 = vadd.f32 %v677, %v827
        %v831 = vld [vmem:[%s6] sm:$0xff]
        %v832 = vld [vmem:[%s6 + $0x8] sm:$0xff]
        %v833 = vld [vmem:[%s6 + $0x10] sm:$0xff]
        %v834 = vld [vmem:[%s6 + $0x18] sm:$0xff]
        %vm835 = vcmask 261120
        %v837 = vsel %vm835, %v448, 0
        %839 = vmatprep.subr.mxu0 0.0
        %840 = vmatpush1.msra.mxu0 0.0
        %841 = vmatprep.subr.mxu0 0.0
        %842 = vmatpush1.msra.mxu0 0.0
        %843 = vmatprep.subr.mxu0 0.0
        %844 = vmatpush1.msra.mxu0 0.0
        %845 = vmatprep.subr.mxu0 0.0
        %846 = vmatpush1.msra.mxu0 0.0
        %847 = vmatprep.subr.mxu0 0.0
        %848 = vmatpush1.msra.mxu0 0.0
        %849 = vmatprep.subr.mxu0 0.0
        %850 = vmatpush1.msra.mxu0 0.0
        %851 = vmatprep.subr.mxu0 0.0
        %852 = vmatpush1.msra.mxu0 0.0
        %853 = vmatprep.subr.mxu0 0.0
        %854 = vmatpush1.msra.mxu0 0.0
        %855 = vmatprep.subr.mxu0 0.0
        %856 = vmatpush1.msra.mxu0 0.0
        %857 = vmatprep.subr.mxu0 0.0
        %858 = vmatpush1.msra.mxu0 0.0
        %859 = vmatprep.subr.mxu0 0.0
        %860 = vmatpush1.msra.mxu0 0.0
        %861 = vmatprep.subr.mxu0 0.0
        %862 = vmatpush1.msra.mxu0 0.0
        %863 = vmatprep.subr.mxu0 0.0
        %864 = vmatpush1.msra.mxu0 %v834
        %865 = vmatprep.subr.mxu0 0.0
        %866 = vmatpush1.msra.mxu0 %v833
        %867 = vmatprep.subr.mxu0 0.0
        %868 = vmatpush1.msra.mxu0 %v832
        %869 = vmatprep.subr.mxu0 0.0
        %870 = vmatpush1.msra.mxu0 %v831
        %871 = vmatprep.subr.mxu0 0.0
        %872 = vmatpush2.msra.mxu0 0.0
        %873 = vmatprep.subr.mxu0 0.0
        %874 = vmatpush2.msra.mxu0 0.0
        %875 = vmatprep.subr.mxu0 0.0
        %876 = vmatpush2.msra.mxu0 0.0
        %877 = vmatprep.subr.mxu0 0.0
        %878 = vmatpush2.msra.mxu0 0.0
        %879 = vmatprep.subr.mxu0 0.0
        %880 = vmatpush2.msra.mxu0 0.0
        %881 = vmatprep.subr.mxu0 0.0
        %882 = vmatpush2.msra.mxu0 0.0
        %883 = vmatprep.subr.mxu0 0.0
        %884 = vmatpush2.msra.mxu0 0.0
        %885 = vmatprep.subr.mxu0 0.0
        %886 = vmatpush2.msra.mxu0 0.0
        %887 = vmatprep.subr.mxu0 0.0
        %888 = vmatpush2.msra.mxu0 0.0
        %889 = vmatprep.subr.mxu0 0.0
        %890 = vmatpush2.msra.mxu0 0.0
        %891 = vmatprep.subr.mxu0 0.0
        %892 = vmatpush2.msra.mxu0 0.0
        %893 = vmatprep.subr.mxu0 0.0
        %894 = vmatpush2.msra.mxu0 0.0
        %895 = vmatprep.subr.mxu0 0.0
        %896 = vmatpush2.msra.mxu0 0.0
        %897 = vmatprep.subr.mxu0 0.0
        %898 = vmatpush2.msra.mxu0 0.0
        %899 = vmatprep.subr.mxu0 0.0
        %900 = vmatpush2.msra.mxu0 0.0
        %901 = vmatprep.subr.mxu0 0.0
        %902 = vmatpush2.msra.mxu0 0.0
        %903 = vmatprep.mubr.f32.mxu0 0.0
        %904 = vmatmul.mubr.f32.gmra.mxu0 %v837
        %v905 = vpop.f32.mrf.mxu0
        %v906 = vadd.f32 0.0, %v905
        %v907 = vpop.f32.mrf.mxu0
        %908 = vdwg.mxu0
        %v909 = vadd.f32 %v830, %v906
        %910 = vmatprep.subr.mxu0 0.0
        %911 = vmatpush1.msra.mxu0 0.0
        %912 = vmatprep.subr.mxu0 0.0
        %913 = vmatpush1.msra.mxu0 0.0
        %914 = vmatprep.subr.mxu0 0.0
        %915 = vmatpush1.msra.mxu0 0.0
        %916 = vmatprep.subr.mxu0 0.0
        %917 = vmatpush1.msra.mxu0 0.0
        %918 = vmatprep.subr.mxu0 0.0
        %919 = vmatpush1.msra.mxu0 0.0
        %920 = vmatprep.subr.mxu0 0.0
        %921 = vmatpush1.msra.mxu0 0.0
        %922 = vmatprep.subr.mxu0 0.0
        %923 = vmatpush1.msra.mxu0 0.0
        %924 = vmatprep.subr.mxu0 0.0
        %925 = vmatpush1.msra.mxu0 0.0
        %926 = vmatprep.subr.mxu0 0.0
        %927 = vmatpush1.msra.mxu0 0.0
        %928 = vmatprep.subr.mxu0 0.0
        %929 = vmatpush1.msra.mxu0 0.0
        %930 = vmatprep.subr.mxu0 0.0
        %931 = vmatpush1.msra.mxu0 0.0
        %932 = vmatprep.subr.mxu0 0.0
        %933 = vmatpush1.msra.mxu0 0.0
        %934 = vmatprep.subr.mxu0 0.0
        %935 = vmatpush1.msra.mxu0 0.0
        %936 = vmatprep.subr.mxu0 0.0
        %937 = vmatpush1.msra.mxu0 0.0
        %938 = vmatprep.subr.mxu0 0.0
        %939 = vmatpush1.msra.mxu0 0.0
        %940 = vmatprep.subr.mxu0 0.0
        %941 = vmatpush1.msra.mxu0 %v448
        %942 = vmatprep.subr.mxu0 0.0
        %943 = vmatpush2.msra.mxu0 0.0
        %944 = vmatprep.subr.mxu0 0.0
        %945 = vmatpush2.msra.mxu0 0.0
        %946 = vmatprep.subr.mxu0 0.0
        %947 = vmatpush2.msra.mxu0 0.0
        %948 = vmatprep.subr.mxu0 0.0
        %949 = vmatpush2.msra.mxu0 0.0
        %950 = vmatprep.subr.mxu0 0.0
        %951 = vmatpush2.msra.mxu0 0.0
        %952 = vmatprep.subr.mxu0 0.0
        %953 = vmatpush2.msra.mxu0 0.0
        %954 = vmatprep.subr.mxu0 0.0
        %955 = vmatpush2.msra.mxu0 0.0
        %956 = vmatprep.subr.mxu0 0.0
        %957 = vmatpush2.msra.mxu0 0.0
        %958 = vmatprep.subr.mxu0 0.0
        %959 = vmatpush2.msra.mxu0 0.0
        %960 = vmatprep.subr.mxu0 0.0
        %961 = vmatpush2.msra.mxu0 0.0
        %962 = vmatprep.subr.mxu0 0.0
        %963 = vmatpush2.msra.mxu0 0.0
        %964 = vmatprep.subr.mxu0 0.0
        %965 = vmatpush2.msra.mxu0 0.0
        %966 = vmatprep.subr.mxu0 0.0
        %967 = vmatpush2.msra.mxu0 0.0
        %968 = vmatprep.subr.mxu0 0.0
        %969 = vmatpush2.msra.mxu0 0.0
        %970 = vmatprep.subr.mxu0 0.0
        %971 = vmatpush2.msra.mxu0 0.0
        %972 = vmatprep.subr.mxu0 0.0
        %973 = vmatpush2.msra.mxu0 0.0
        %974 = vmatprep.mubr.f32.mxu0 0.0
        %975 = vmatmul.mubr.f32.gmra.mxu0 %v452
        %v976 = vpop.f32.mrf.mxu0
        %v977 = vadd.f32 0.0, %v976
        %v978 = vpop.f32.mrf.mxu0
        %979 = vdwg.mxu0
        %s980 = scalar_lea.vmem %s6, 32
        %v981 = vld [vmem:[%s980] sm:$0xff]
        %v982 = vld [vmem:[%s980 + $0x8] sm:$0xff]
        %v983 = vld [vmem:[%s980 + $0x10] sm:$0xff]
        %v984 = vld [vmem:[%s980 + $0x18] sm:$0xff]
        %v986 = vsel %vm835, %v977, 0
        %988 = vmatprep.subr.mxu0 0.0
        %989 = vmatpush1.msra.mxu0 0.0
        %990 = vmatprep.subr.mxu0 0.0
        %991 = vmatpush1.msra.mxu0 0.0
        %992 = vmatprep.subr.mxu0 0.0
        %993 = vmatpush1.msra.mxu0 0.0
        %994 = vmatprep.subr.mxu0 0.0
        %995 = vmatpush1.msra.mxu0 0.0
        %996 = vmatprep.subr.mxu0 0.0
        %997 = vmatpush1.msra.mxu0 0.0
        %998 = vmatprep.subr.mxu0 0.0
        %999 = vmatpush1.msra.mxu0 0.0
        %1000 = vmatprep.subr.mxu0 0.0
        %1001 = vmatpush1.msra.mxu0 0.0
        %1002 = vmatprep.subr.mxu0 0.0
        %1003 = vmatpush1.msra.mxu0 0.0
        %1004 = vmatprep.subr.mxu0 0.0
        %1005 = vmatpush1.msra.mxu0 0.0
        %1006 = vmatprep.subr.mxu0 0.0
        %1007 = vmatpush1.msra.mxu0 0.0
        %1008 = vmatprep.subr.mxu0 0.0
        %1009 = vmatpush1.msra.mxu0 0.0
        %1010 = vmatprep.subr.mxu0 0.0
        %1011 = vmatpush1.msra.mxu0 0.0
        %1012 = vmatprep.subr.mxu0 0.0
        %1013 = vmatpush1.msra.mxu0 %v984
        %1014 = vmatprep.subr.mxu0 0.0
        %1015 = vmatpush1.msra.mxu0 %v983
        %1016 = vmatprep.subr.mxu0 0.0
        %1017 = vmatpush1.msra.mxu0 %v982
        %1018 = vmatprep.subr.mxu0 0.0
        %1019 = vmatpush1.msra.mxu0 %v981
        %1020 = vmatprep.subr.mxu0 0.0
        %1021 = vmatpush2.msra.mxu0 0.0
        %1022 = vmatprep.subr.mxu0 0.0
        %1023 = vmatpush2.msra.mxu0 0.0
        %1024 = vmatprep.subr.mxu0 0.0
        %1025 = vmatpush2.msra.mxu0 0.0
        %1026 = vmatprep.subr.mxu0 0.0
        %1027 = vmatpush2.msra.mxu0 0.0
        %1028 = vmatprep.subr.mxu0 0.0
        %1029 = vmatpush2.msra.mxu0 0.0
        %1030 = vmatprep.subr.mxu0 0.0
        %1031 = vmatpush2.msra.mxu0 0.0
        %1032 = vmatprep.subr.mxu0 0.0
        %1033 = vmatpush2.msra.mxu0 0.0
        %1034 = vmatprep.subr.mxu0 0.0
        %1035 = vmatpush2.msra.mxu0 0.0
        %1036 = vmatprep.subr.mxu0 0.0
        %1037 = vmatpush2.msra.mxu0 0.0
        %1038 = vmatprep.subr.mxu0 0.0
        %1039 = vmatpush2.msra.mxu0 0.0
        %1040 = vmatprep.subr.mxu0 0.0
        %1041 = vmatpush2.msra.mxu0 0.0
        %1042 = vmatprep.subr.mxu0 0.0
        %1043 = vmatpush2.msra.mxu0 0.0
        %1044 = vmatprep.subr.mxu0 0.0
        %1045 = vmatpush2.msra.mxu0 0.0
        %1046 = vmatprep.subr.mxu0 0.0
        %1047 = vmatpush2.msra.mxu0 0.0
        %1048 = vmatprep.subr.mxu0 0.0
        %1049 = vmatpush2.msra.mxu0 0.0
        %1050 = vmatprep.subr.mxu0 0.0
        %1051 = vmatpush2.msra.mxu0 0.0
        %1052 = vmatprep.mubr.f32.mxu0 0.0
        %1053 = vmatmul.mubr.f32.gmra.mxu0 %v986
        %v1054 = vpop.f32.mrf.mxu0
        %v1055 = vadd.f32 0.0, %v1054
        %v1056 = vpop.f32.mrf.mxu0
        %1057 = vdwg.mxu0
        %v1058 = vadd.f32 %v909, %v1055
        %1059 = vmatprep.subr.mxu0 0.0
        %1060 = vmatpush1.msra.mxu0 0.0
        %1061 = vmatprep.subr.mxu0 0.0
        %1062 = vmatpush1.msra.mxu0 0.0
        %1063 = vmatprep.subr.mxu0 0.0
        %1064 = vmatpush1.msra.mxu0 0.0
        %1065 = vmatprep.subr.mxu0 0.0
        %1066 = vmatpush1.msra.mxu0 0.0
        %1067 = vmatprep.subr.mxu0 0.0
        %1068 = vmatpush1.msra.mxu0 0.0
        %1069 = vmatprep.subr.mxu0 0.0
        %1070 = vmatpush1.msra.mxu0 0.0
        %1071 = vmatprep.subr.mxu0 0.0
        %1072 = vmatpush1.msra.mxu0 0.0
        %1073 = vmatprep.subr.mxu0 0.0
        %1074 = vmatpush1.msra.mxu0 0.0
        %1075 = vmatprep.subr.mxu0 0.0
        %1076 = vmatpush1.msra.mxu0 0.0
        %1077 = vmatprep.subr.mxu0 0.0
        %1078 = vmatpush1.msra.mxu0 0.0
        %1079 = vmatprep.subr.mxu0 0.0
        %1080 = vmatpush1.msra.mxu0 0.0
        %1081 = vmatprep.subr.mxu0 0.0
        %1082 = vmatpush1.msra.mxu0 0.0
        %1083 = vmatprep.subr.mxu0 0.0
        %1084 = vmatpush1.msra.mxu0 0.0
        %1085 = vmatprep.subr.mxu0 0.0
        %1086 = vmatpush1.msra.mxu0 0.0
        %1087 = vmatprep.subr.mxu0 0.0
        %1088 = vmatpush1.msra.mxu0 0.0
        %1089 = vmatprep.subr.mxu0 0.0
        %1090 = vmatpush1.msra.mxu0 %v977
        %1091 = vmatprep.subr.mxu0 0.0
        %1092 = vmatpush2.msra.mxu0 0.0
        %1093 = vmatprep.subr.mxu0 0.0
        %1094 = vmatpush2.msra.mxu0 0.0
        %1095 = vmatprep.subr.mxu0 0.0
        %1096 = vmatpush2.msra.mxu0 0.0
        %1097 = vmatprep.subr.mxu0 0.0
        %1098 = vmatpush2.msra.mxu0 0.0
        %1099 = vmatprep.subr.mxu0 0.0
        %1100 = vmatpush2.msra.mxu0 0.0
        %1101 = vmatprep.subr.mxu0 0.0
        %1102 = vmatpush2.msra.mxu0 0.0
        %1103 = vmatprep.subr.mxu0 0.0
        %1104 = vmatpush2.msra.mxu0 0.0
        %1105 = vmatprep.subr.mxu0 0.0
        %1106 = vmatpush2.msra.mxu0 0.0
        %1107 = vmatprep.subr.mxu0 0.0
        %1108 = vmatpush2.msra.mxu0 0.0
        %1109 = vmatprep.subr.mxu0 0.0
        %1110 = vmatpush2.msra.mxu0 0.0
        %1111 = vmatprep.subr.mxu0 0.0
        %1112 = vmatpush2.msra.mxu0 0.0
        %1113 = vmatprep.subr.mxu0 0.0
        %1114 = vmatpush2.msra.mxu0 0.0
        %1115 = vmatprep.subr.mxu0 0.0
        %1116 = vmatpush2.msra.mxu0 0.0
        %1117 = vmatprep.subr.mxu0 0.0
        %1118 = vmatpush2.msra.mxu0 0.0
        %1119 = vmatprep.subr.mxu0 0.0
        %1120 = vmatpush2.msra.mxu0 0.0
        %1121 = vmatprep.subr.mxu0 0.0
        %1122 = vmatpush2.msra.mxu0 0.0
        %1123 = vmatprep.mubr.f32.mxu0 0.0
        %1124 = vmatmul.mubr.f32.gmra.mxu0 %v452
        %v1125 = vpop.f32.mrf.mxu0
        %v1126 = vadd.f32 0.0, %v1125
        %v1127 = vpop.f32.mrf.mxu0
        %1128 = vdwg.mxu0
        %v1129 = vmul.f32 %v1126, 2.0
        %v1130 = vsub.f32 %v1129, %v448
        %s1131 = scalar_lea.vmem %s6, 64
        %v1132 = vld [vmem:[%s1131] sm:$0xff]
        %v1133 = vld [vmem:[%s1131 + $0x8] sm:$0xff]
        %v1134 = vld [vmem:[%s1131 + $0x10] sm:$0xff]
        %v1135 = vld [vmem:[%s1131 + $0x18] sm:$0xff]
        %v1137 = vsel %vm835, %v1130, 0
        %1139 = vmatprep.subr.mxu0 0.0
        %1140 = vmatpush1.msra.mxu0 0.0
        %1141 = vmatprep.subr.mxu0 0.0
        %1142 = vmatpush1.msra.mxu0 0.0
        %1143 = vmatprep.subr.mxu0 0.0
        %1144 = vmatpush1.msra.mxu0 0.0
        %1145 = vmatprep.subr.mxu0 0.0
        %1146 = vmatpush1.msra.mxu0 0.0
        %1147 = vmatprep.subr.mxu0 0.0
        %1148 = vmatpush1.msra.mxu0 0.0
        %1149 = vmatprep.subr.mxu0 0.0
        %1150 = vmatpush1.msra.mxu0 0.0
        %1151 = vmatprep.subr.mxu0 0.0
        %1152 = vmatpush1.msra.mxu0 0.0
        %1153 = vmatprep.subr.mxu0 0.0
        %1154 = vmatpush1.msra.mxu0 0.0
        %1155 = vmatprep.subr.mxu0 0.0
        %1156 = vmatpush1.msra.mxu0 0.0
        %1157 = vmatprep.subr.mxu0 0.0
        %1158 = vmatpush1.msra.mxu0 0.0
        %1159 = vmatprep.subr.mxu0 0.0
        %1160 = vmatpush1.msra.mxu0 0.0
        %1161 = vmatprep.subr.mxu0 0.0
        %1162 = vmatpush1.msra.mxu0 0.0
        %1163 = vmatprep.subr.mxu0 0.0
        %1164 = vmatpush1.msra.mxu0 %v1135
        %1165 = vmatprep.subr.mxu0 0.0
        %1166 = vmatpush1.msra.mxu0 %v1134
        %1167 = vmatprep.subr.mxu0 0.0
        %1168 = vmatpush1.msra.mxu0 %v1133
        %1169 = vmatprep.subr.mxu0 0.0
        %1170 = vmatpush1.msra.mxu0 %v1132
        %1171 = vmatprep.subr.mxu0 0.0
        %1172 = vmatpush2.msra.mxu0 0.0
        %1173 = vmatprep.subr.mxu0 0.0
        %1174 = vmatpush2.msra.mxu0 0.0
        %1175 = vmatprep.subr.mxu0 0.0
        %1176 = vmatpush2.msra.mxu0 0.0
        %1177 = vmatprep.subr.mxu0 0.0
        %1178 = vmatpush2.msra.mxu0 0.0
        %1179 = vmatprep.subr.mxu0 0.0
        %1180 = vmatpush2.msra.mxu0 0.0
        %1181 = vmatprep.subr.mxu0 0.0
        %1182 = vmatpush2.msra.mxu0 0.0
        %1183 = vmatprep.subr.mxu0 0.0
        %1184 = vmatpush2.msra.mxu0 0.0
        %1185 = vmatprep.subr.mxu0 0.0
        %1186 = vmatpush2.msra.mxu0 0.0
        %1187 = vmatprep.subr.mxu0 0.0
        %1188 = vmatpush2.msra.mxu0 0.0
        %1189 = vmatprep.subr.mxu0 0.0
        %1190 = vmatpush2.msra.mxu0 0.0
        %1191 = vmatprep.subr.mxu0 0.0
        %1192 = vmatpush2.msra.mxu0 0.0
        %1193 = vmatprep.subr.mxu0 0.0
        %1194 = vmatpush2.msra.mxu0 0.0
        %1195 = vmatprep.subr.mxu0 0.0
        %1196 = vmatpush2.msra.mxu0 0.0
        %1197 = vmatprep.subr.mxu0 0.0
        %1198 = vmatpush2.msra.mxu0 0.0
        %1199 = vmatprep.subr.mxu0 0.0
        %1200 = vmatpush2.msra.mxu0 0.0
        %1201 = vmatprep.subr.mxu0 0.0
        %1202 = vmatpush2.msra.mxu0 0.0
        %1203 = vmatprep.mubr.f32.mxu0 0.0
        %1204 = vmatmul.mubr.f32.gmra.mxu0 %v1137
        %v1205 = vpop.f32.mrf.mxu0
        %v1206 = vadd.f32 0.0, %v1205
        %v1207 = vpop.f32.mrf.mxu0
        %1208 = vdwg.mxu0
        %v1209 = vadd.f32 %v1058, %v1206
        %v1210 = vld [vmem:[%s7] sm:$0x1]
        %v1212 = vlaneseq
        %v1213 = vshrl.u32 %v1212, 7
        %v1214 = vsub.s32 0, %v1213
        %v1215 = vrot.slane %v1210, %v1214
        %v1217 = vadd.f32 %v1209, %v1215
        %v1218 = vxor.u32 %v1217, 2147483648
        %v1219 = vmul.f32 %v1218, 1.442695
        %v1220 = vpow.pop %v1219
        %v1221 = vadd.f32 %v1220, 1.0
        %v1222 = vrcp.pop %v1221
        %v1223 = vmul.f32 1.0, %v1222
        %v1224 = vld [vmem:[%s8] sm:$0x3]
        %v1226 = vsel %vm450, %v445, 0
        %1228 = vmatprep.subr.mxu0 0.0
        %1229 = vmatpush1.msra.mxu0 0.0
        %1230 = vmatprep.subr.mxu0 0.0
        %1231 = vmatpush1.msra.mxu0 0.0
        %1232 = vmatprep.subr.mxu0 0.0
        %1233 = vmatpush1.msra.mxu0 0.0
        %1234 = vmatprep.subr.mxu0 0.0
        %1235 = vmatpush1.msra.mxu0 0.0
        %1236 = vmatprep.subr.mxu0 0.0
        %1237 = vmatpush1.msra.mxu0 0.0
        %1238 = vmatprep.subr.mxu0 0.0
        %1239 = vmatpush1.msra.mxu0 0.0
        %1240 = vmatprep.subr.mxu0 0.0
        %1241 = vmatpush1.msra.mxu0 0.0
        %1242 = vmatprep.subr.mxu0 0.0
        %1243 = vmatpush1.msra.mxu0 0.0
        %1244 = vmatprep.subr.mxu0 0.0
        %1245 = vmatpush1.msra.mxu0 0.0
        %1246 = vmatprep.subr.mxu0 0.0
        %1247 = vmatpush1.msra.mxu0 0.0
        %1248 = vmatprep.subr.mxu0 0.0
        %1249 = vmatpush1.msra.mxu0 0.0
        %1250 = vmatprep.subr.mxu0 0.0
        %1251 = vmatpush1.msra.mxu0 0.0
        %1252 = vmatprep.subr.mxu0 0.0
        %1253 = vmatpush1.msra.mxu0 0.0
        %1254 = vmatprep.subr.mxu0 0.0
        %1255 = vmatpush1.msra.mxu0 0.0
        %1256 = vmatprep.subr.mxu0 0.0
        %1257 = vmatpush1.msra.mxu0 0.0
        %1258 = vmatprep.subr.mxu0 0.0
        %1259 = vmatpush1.msra.mxu0 %v446
        %1260 = vmatprep.subr.mxu0 0.0
        %1261 = vmatpush2.msra.mxu0 0.0
        %1262 = vmatprep.subr.mxu0 0.0
        %1263 = vmatpush2.msra.mxu0 0.0
        %1264 = vmatprep.subr.mxu0 0.0
        %1265 = vmatpush2.msra.mxu0 0.0
        %1266 = vmatprep.subr.mxu0 0.0
        %1267 = vmatpush2.msra.mxu0 0.0
        %1268 = vmatprep.subr.mxu0 0.0
        %1269 = vmatpush2.msra.mxu0 0.0
        %1270 = vmatprep.subr.mxu0 0.0
        %1271 = vmatpush2.msra.mxu0 0.0
        %1272 = vmatprep.subr.mxu0 0.0
        %1273 = vmatpush2.msra.mxu0 0.0
        %1274 = vmatprep.subr.mxu0 0.0
        %1275 = vmatpush2.msra.mxu0 0.0
        %1276 = vmatprep.subr.mxu0 0.0
        %1277 = vmatpush2.msra.mxu0 0.0
        %1278 = vmatprep.subr.mxu0 0.0
        %1279 = vmatpush2.msra.mxu0 0.0
        %1280 = vmatprep.subr.mxu0 0.0
        %1281 = vmatpush2.msra.mxu0 0.0
        %1282 = vmatprep.subr.mxu0 0.0
        %1283 = vmatpush2.msra.mxu0 0.0
        %1284 = vmatprep.subr.mxu0 0.0
        %1285 = vmatpush2.msra.mxu0 0.0
        %1286 = vmatprep.subr.mxu0 0.0
        %1287 = vmatpush2.msra.mxu0 0.0
        %1288 = vmatprep.subr.mxu0 0.0
        %1289 = vmatpush2.msra.mxu0 0.0
        %1290 = vmatprep.subr.mxu0 0.0
        %1291 = vmatpush2.msra.mxu0 0.0
        %1292 = vmatprep.mubr.f32.mxu0 0.0
        %1293 = vmatmul.mubr.f32.gmra.mxu0 %v1226
        %v1294 = vpop.f32.mrf.mxu0
        %v1295 = vadd.f32 0.0, %v1294
        %v1296 = vpop.f32.mrf.mxu0
        %1297 = vdwg.mxu0
        %s1298 = scalar_lea.vmem %s8, 2
        %v1299 = vld [vmem:[%s1298] sm:$0x3]
        %v1301 = vsel %vm526, %v1295, 0
        %v1304 = vsel %vm530, %v1299, 0
        %1306 = vmatprep.subr.mxu0 0.0
        %1307 = vmatpush1.msra.mxu0 0.0
        %1308 = vmatprep.subr.mxu0 0.0
        %1309 = vmatpush1.msra.mxu0 0.0
        %1310 = vmatprep.subr.mxu0 0.0
        %1311 = vmatpush1.msra.mxu0 0.0
        %1312 = vmatprep.subr.mxu0 0.0
        %1313 = vmatpush1.msra.mxu0 0.0
        %1314 = vmatprep.subr.mxu0 0.0
        %1315 = vmatpush1.msra.mxu0 0.0
        %1316 = vmatprep.subr.mxu0 0.0
        %1317 = vmatpush1.msra.mxu0 0.0
        %1318 = vmatprep.subr.mxu0 0.0
        %1319 = vmatpush1.msra.mxu0 0.0
        %1320 = vmatprep.subr.mxu0 0.0
        %1321 = vmatpush1.msra.mxu0 0.0
        %1322 = vmatprep.subr.mxu0 0.0
        %1323 = vmatpush1.msra.mxu0 0.0
        %1324 = vmatprep.subr.mxu0 0.0
        %1325 = vmatpush1.msra.mxu0 0.0
        %1326 = vmatprep.subr.mxu0 0.0
        %1327 = vmatpush1.msra.mxu0 0.0
        %1328 = vmatprep.subr.mxu0 0.0
        %1329 = vmatpush1.msra.mxu0 0.0
        %1330 = vmatprep.subr.mxu0 0.0
        %1331 = vmatpush1.msra.mxu0 0.0
        %1332 = vmatprep.subr.mxu0 0.0
        %1333 = vmatpush1.msra.mxu0 0.0
        %1334 = vmatprep.subr.mxu0 0.0
        %1335 = vmatpush1.msra.mxu0 0.0
        %1336 = vmatprep.subr.mxu0 0.0
        %1337 = vmatpush1.msra.mxu0 %v1304
        %1338 = vmatprep.subr.mxu0 0.0
        %1339 = vmatpush2.msra.mxu0 0.0
        %1340 = vmatprep.subr.mxu0 0.0
        %1341 = vmatpush2.msra.mxu0 0.0
        %1342 = vmatprep.subr.mxu0 0.0
        %1343 = vmatpush2.msra.mxu0 0.0
        %1344 = vmatprep.subr.mxu0 0.0
        %1345 = vmatpush2.msra.mxu0 0.0
        %1346 = vmatprep.subr.mxu0 0.0
        %1347 = vmatpush2.msra.mxu0 0.0
        %1348 = vmatprep.subr.mxu0 0.0
        %1349 = vmatpush2.msra.mxu0 0.0
        %1350 = vmatprep.subr.mxu0 0.0
        %1351 = vmatpush2.msra.mxu0 0.0
        %1352 = vmatprep.subr.mxu0 0.0
        %1353 = vmatpush2.msra.mxu0 0.0
        %1354 = vmatprep.subr.mxu0 0.0
        %1355 = vmatpush2.msra.mxu0 0.0
        %1356 = vmatprep.subr.mxu0 0.0
        %1357 = vmatpush2.msra.mxu0 0.0
        %1358 = vmatprep.subr.mxu0 0.0
        %1359 = vmatpush2.msra.mxu0 0.0
        %1360 = vmatprep.subr.mxu0 0.0
        %1361 = vmatpush2.msra.mxu0 0.0
        %1362 = vmatprep.subr.mxu0 0.0
        %1363 = vmatpush2.msra.mxu0 0.0
        %1364 = vmatprep.subr.mxu0 0.0
        %1365 = vmatpush2.msra.mxu0 0.0
        %1366 = vmatprep.subr.mxu0 0.0
        %1367 = vmatpush2.msra.mxu0 0.0
        %1368 = vmatprep.subr.mxu0 0.0
        %1369 = vmatpush2.msra.mxu0 0.0
        %1370 = vmatprep.mubr.f32.mxu0 0.0
        %1371 = vmatmul.mubr.f32.gmra.mxu0 %v1301
        %v1372 = vpop.f32.mrf.mxu0
        %v1373 = vadd.f32 0.0, %v1372
        %v1374 = vpop.f32.mrf.mxu0
        %1375 = vdwg.mxu0
        %v1377 = vsel %vm530, %v1224, 0
        %1379 = vmatprep.subr.mxu0 0.0
        %1380 = vmatpush1.msra.mxu0 0.0
        %1381 = vmatprep.subr.mxu0 0.0
        %1382 = vmatpush1.msra.mxu0 0.0
        %1383 = vmatprep.subr.mxu0 0.0
        %1384 = vmatpush1.msra.mxu0 0.0
        %1385 = vmatprep.subr.mxu0 0.0
        %1386 = vmatpush1.msra.mxu0 0.0
        %1387 = vmatprep.subr.mxu0 0.0
        %1388 = vmatpush1.msra.mxu0 0.0
        %1389 = vmatprep.subr.mxu0 0.0
        %1390 = vmatpush1.msra.mxu0 0.0
        %1391 = vmatprep.subr.mxu0 0.0
        %1392 = vmatpush1.msra.mxu0 0.0
        %1393 = vmatprep.subr.mxu0 0.0
        %1394 = vmatpush1.msra.mxu0 0.0
        %1395 = vmatprep.subr.mxu0 0.0
        %1396 = vmatpush1.msra.mxu0 0.0
        %1397 = vmatprep.subr.mxu0 0.0
        %1398 = vmatpush1.msra.mxu0 0.0
        %1399 = vmatprep.subr.mxu0 0.0
        %1400 = vmatpush1.msra.mxu0 0.0
        %1401 = vmatprep.subr.mxu0 0.0
        %1402 = vmatpush1.msra.mxu0 0.0
        %1403 = vmatprep.subr.mxu0 0.0
        %1404 = vmatpush1.msra.mxu0 0.0
        %1405 = vmatprep.subr.mxu0 0.0
        %1406 = vmatpush1.msra.mxu0 0.0
        %1407 = vmatprep.subr.mxu0 0.0
        %1408 = vmatpush1.msra.mxu0 0.0
        %1409 = vmatprep.subr.mxu0 0.0
        %1410 = vmatpush1.msra.mxu0 %v1377
        %1411 = vmatprep.subr.mxu0 0.0
        %1412 = vmatpush2.msra.mxu0 0.0
        %1413 = vmatprep.subr.mxu0 0.0
        %1414 = vmatpush2.msra.mxu0 0.0
        %1415 = vmatprep.subr.mxu0 0.0
        %1416 = vmatpush2.msra.mxu0 0.0
        %1417 = vmatprep.subr.mxu0 0.0
        %1418 = vmatpush2.msra.mxu0 0.0
        %1419 = vmatprep.subr.mxu0 0.0
        %1420 = vmatpush2.msra.mxu0 0.0
        %1421 = vmatprep.subr.mxu0 0.0
        %1422 = vmatpush2.msra.mxu0 0.0
        %1423 = vmatprep.subr.mxu0 0.0
        %1424 = vmatpush2.msra.mxu0 0.0
        %1425 = vmatprep.subr.mxu0 0.0
        %1426 = vmatpush2.msra.mxu0 0.0
        %1427 = vmatprep.subr.mxu0 0.0
        %1428 = vmatpush2.msra.mxu0 0.0
        %1429 = vmatprep.subr.mxu0 0.0
        %1430 = vmatpush2.msra.mxu0 0.0
        %1431 = vmatprep.subr.mxu0 0.0
        %1432 = vmatpush2.msra.mxu0 0.0
        %1433 = vmatprep.subr.mxu0 0.0
        %1434 = vmatpush2.msra.mxu0 0.0
        %1435 = vmatprep.subr.mxu0 0.0
        %1436 = vmatpush2.msra.mxu0 0.0
        %1437 = vmatprep.subr.mxu0 0.0
        %1438 = vmatpush2.msra.mxu0 0.0
        %1439 = vmatprep.subr.mxu0 0.0
        %1440 = vmatpush2.msra.mxu0 0.0
        %1441 = vmatprep.subr.mxu0 0.0
        %1442 = vmatpush2.msra.mxu0 0.0
        %1443 = vmatprep.mubr.f32.mxu0 0.0
        %1444 = vmatmul.mubr.f32.gmra.mxu0 %v605
        %v1445 = vpop.f32.mrf.mxu0
        %v1446 = vadd.f32 %v1373, %v1445
        %v1447 = vpop.f32.mrf.mxu0
        %1448 = vdwg.mxu0
        %1449 = vmatprep.subr.mxu0 0.0
        %1450 = vmatpush1.msra.mxu0 0.0
        %1451 = vmatprep.subr.mxu0 0.0
        %1452 = vmatpush1.msra.mxu0 0.0
        %1453 = vmatprep.subr.mxu0 0.0
        %1454 = vmatpush1.msra.mxu0 0.0
        %1455 = vmatprep.subr.mxu0 0.0
        %1456 = vmatpush1.msra.mxu0 0.0
        %1457 = vmatprep.subr.mxu0 0.0
        %1458 = vmatpush1.msra.mxu0 0.0
        %1459 = vmatprep.subr.mxu0 0.0
        %1460 = vmatpush1.msra.mxu0 0.0
        %1461 = vmatprep.subr.mxu0 0.0
        %1462 = vmatpush1.msra.mxu0 0.0
        %1463 = vmatprep.subr.mxu0 0.0
        %1464 = vmatpush1.msra.mxu0 0.0
        %1465 = vmatprep.subr.mxu0 0.0
        %1466 = vmatpush1.msra.mxu0 0.0
        %1467 = vmatprep.subr.mxu0 0.0
        %1468 = vmatpush1.msra.mxu0 0.0
        %1469 = vmatprep.subr.mxu0 0.0
        %1470 = vmatpush1.msra.mxu0 0.0
        %1471 = vmatprep.subr.mxu0 0.0
        %1472 = vmatpush1.msra.mxu0 0.0
        %1473 = vmatprep.subr.mxu0 0.0
        %1474 = vmatpush1.msra.mxu0 0.0
        %1475 = vmatprep.subr.mxu0 0.0
        %1476 = vmatpush1.msra.mxu0 0.0
        %1477 = vmatprep.subr.mxu0 0.0
        %1478 = vmatpush1.msra.mxu0 0.0
        %1479 = vmatprep.subr.mxu0 0.0
        %1480 = vmatpush1.msra.mxu0 %v1295
        %1481 = vmatprep.subr.mxu0 0.0
        %1482 = vmatpush2.msra.mxu0 0.0
        %1483 = vmatprep.subr.mxu0 0.0
        %1484 = vmatpush2.msra.mxu0 0.0
        %1485 = vmatprep.subr.mxu0 0.0
        %1486 = vmatpush2.msra.mxu0 0.0
        %1487 = vmatprep.subr.mxu0 0.0
        %1488 = vmatpush2.msra.mxu0 0.0
        %1489 = vmatprep.subr.mxu0 0.0
        %1490 = vmatpush2.msra.mxu0 0.0
        %1491 = vmatprep.subr.mxu0 0.0
        %1492 = vmatpush2.msra.mxu0 0.0
        %1493 = vmatprep.subr.mxu0 0.0
        %1494 = vmatpush2.msra.mxu0 0.0
        %1495 = vmatprep.subr.mxu0 0.0
        %1496 = vmatpush2.msra.mxu0 0.0
        %1497 = vmatprep.subr.mxu0 0.0
        %1498 = vmatpush2.msra.mxu0 0.0
        %1499 = vmatprep.subr.mxu0 0.0
        %1500 = vmatpush2.msra.mxu0 0.0
        %1501 = vmatprep.subr.mxu0 0.0
        %1502 = vmatpush2.msra.mxu0 0.0
        %1503 = vmatprep.subr.mxu0 0.0
        %1504 = vmatpush2.msra.mxu0 0.0
        %1505 = vmatprep.subr.mxu0 0.0
        %1506 = vmatpush2.msra.mxu0 0.0
        %1507 = vmatprep.subr.mxu0 0.0
        %1508 = vmatpush2.msra.mxu0 0.0
        %1509 = vmatprep.subr.mxu0 0.0
        %1510 = vmatpush2.msra.mxu0 0.0
        %1511 = vmatprep.subr.mxu0 0.0
        %1512 = vmatpush2.msra.mxu0 0.0
        %1513 = vmatprep.mubr.f32.mxu0 0.0
        %1514 = vmatmul.mubr.f32.gmra.mxu0 %v1226
        %v1515 = vpop.f32.mrf.mxu0
        %v1516 = vadd.f32 0.0, %v1515
        %v1517 = vpop.f32.mrf.mxu0
        %1518 = vdwg.mxu0
        %v1519 = vmul.f32 %v1516, 2.0
        %v1520 = vsub.f32 %v1519, %v446
        %s1521 = scalar_lea.vmem %s8, 4
        %v1522 = vld [vmem:[%s1521] sm:$0x3]
        %v1524 = vsel %vm526, %v1520, 0
        %v1527 = vsel %vm530, %v1522, 0
        %1529 = vmatprep.subr.mxu0 0.0
        %1530 = vmatpush1.msra.mxu0 0.0
        %1531 = vmatprep.subr.mxu0 0.0
        %1532 = vmatpush1.msra.mxu0 0.0
        %1533 = vmatprep.subr.mxu0 0.0
        %1534 = vmatpush1.msra.mxu0 0.0
        %1535 = vmatprep.subr.mxu0 0.0
        %1536 = vmatpush1.msra.mxu0 0.0
        %1537 = vmatprep.subr.mxu0 0.0
        %1538 = vmatpush1.msra.mxu0 0.0
        %1539 = vmatprep.subr.mxu0 0.0
        %1540 = vmatpush1.msra.mxu0 0.0
        %1541 = vmatprep.subr.mxu0 0.0
        %1542 = vmatpush1.msra.mxu0 0.0
        %1543 = vmatprep.subr.mxu0 0.0
        %1544 = vmatpush1.msra.mxu0 0.0
        %1545 = vmatprep.subr.mxu0 0.0
        %1546 = vmatpush1.msra.mxu0 0.0
        %1547 = vmatprep.subr.mxu0 0.0
        %1548 = vmatpush1.msra.mxu0 0.0
        %1549 = vmatprep.subr.mxu0 0.0
        %1550 = vmatpush1.msra.mxu0 0.0
        %1551 = vmatprep.subr.mxu0 0.0
        %1552 = vmatpush1.msra.mxu0 0.0
        %1553 = vmatprep.subr.mxu0 0.0
        %1554 = vmatpush1.msra.mxu0 0.0
        %1555 = vmatprep.subr.mxu0 0.0
        %1556 = vmatpush1.msra.mxu0 0.0
        %1557 = vmatprep.subr.mxu0 0.0
        %1558 = vmatpush1.msra.mxu0 0.0
        %1559 = vmatprep.subr.mxu0 0.0
        %1560 = vmatpush1.msra.mxu0 %v1527
        %1561 = vmatprep.subr.mxu0 0.0
        %1562 = vmatpush2.msra.mxu0 0.0
        %1563 = vmatprep.subr.mxu0 0.0
        %1564 = vmatpush2.msra.mxu0 0.0
        %1565 = vmatprep.subr.mxu0 0.0
        %1566 = vmatpush2.msra.mxu0 0.0
        %1567 = vmatprep.subr.mxu0 0.0
        %1568 = vmatpush2.msra.mxu0 0.0
        %1569 = vmatprep.subr.mxu0 0.0
        %1570 = vmatpush2.msra.mxu0 0.0
        %1571 = vmatprep.subr.mxu0 0.0
        %1572 = vmatpush2.msra.mxu0 0.0
        %1573 = vmatprep.subr.mxu0 0.0
        %1574 = vmatpush2.msra.mxu0 0.0
        %1575 = vmatprep.subr.mxu0 0.0
        %1576 = vmatpush2.msra.mxu0 0.0
        %1577 = vmatprep.subr.mxu0 0.0
        %1578 = vmatpush2.msra.mxu0 0.0
        %1579 = vmatprep.subr.mxu0 0.0
        %1580 = vmatpush2.msra.mxu0 0.0
        %1581 = vmatprep.subr.mxu0 0.0
        %1582 = vmatpush2.msra.mxu0 0.0
        %1583 = vmatprep.subr.mxu0 0.0
        %1584 = vmatpush2.msra.mxu0 0.0
        %1585 = vmatprep.subr.mxu0 0.0
        %1586 = vmatpush2.msra.mxu0 0.0
        %1587 = vmatprep.subr.mxu0 0.0
        %1588 = vmatpush2.msra.mxu0 0.0
        %1589 = vmatprep.subr.mxu0 0.0
        %1590 = vmatpush2.msra.mxu0 0.0
        %1591 = vmatprep.subr.mxu0 0.0
        %1592 = vmatpush2.msra.mxu0 0.0
        %1593 = vmatprep.mubr.f32.mxu0 0.0
        %1594 = vmatmul.mubr.f32.gmra.mxu0 %v1524
        %v1595 = vpop.f32.mrf.mxu0
        %v1596 = vadd.f32 0.0, %v1595
        %v1597 = vpop.f32.mrf.mxu0
        %1598 = vdwg.mxu0
        %v1599 = vadd.f32 %v1446, %v1596
        %v1600 = vmul.f32 %v1223, %v447
        %v1601 = vld [vmem:[#allocation2] sm:$0xff]
        %v1602 = vld [vmem:[#allocation2 + $0x8] sm:$0xff]
        %vm1603 = vcmask 130048
        %v1605 = vsel %vm1603, %v1600, 0
        %1607 = vmatprep.subr.mxu0 0.0
        %1608 = vmatpush1.msra.mxu0 0.0
        %1609 = vmatprep.subr.mxu0 0.0
        %1610 = vmatpush1.msra.mxu0 0.0
        %1611 = vmatprep.subr.mxu0 0.0
        %1612 = vmatpush1.msra.mxu0 0.0
        %1613 = vmatprep.subr.mxu0 0.0
        %1614 = vmatpush1.msra.mxu0 0.0
        %1615 = vmatprep.subr.mxu0 0.0
        %1616 = vmatpush1.msra.mxu0 0.0
        %1617 = vmatprep.subr.mxu0 0.0
        %1618 = vmatpush1.msra.mxu0 0.0
        %1619 = vmatprep.subr.mxu0 0.0
        %1620 = vmatpush1.msra.mxu0 0.0
        %1621 = vmatprep.subr.mxu0 0.0
        %1622 = vmatpush1.msra.mxu0 0.0
        %1623 = vmatprep.subr.mxu0 0.0
        %1624 = vmatpush1.msra.mxu0 0.0
        %1625 = vmatprep.subr.mxu0 0.0
        %1626 = vmatpush1.msra.mxu0 0.0
        %1627 = vmatprep.subr.mxu0 0.0
        %1628 = vmatpush1.msra.mxu0 0.0
        %1629 = vmatprep.subr.mxu0 0.0
        %1630 = vmatpush1.msra.mxu0 0.0
        %1631 = vmatprep.subr.mxu0 0.0
        %1632 = vmatpush1.msra.mxu0 0.0
        %1633 = vmatprep.subr.mxu0 0.0
        %1634 = vmatpush1.msra.mxu0 0.0
        %1635 = vmatprep.subr.mxu0 0.0
        %1636 = vmatpush1.msra.mxu0 %v1602
        %1637 = vmatprep.subr.mxu0 0.0
        %1638 = vmatpush1.msra.mxu0 %v1601
        %1639 = vmatprep.subr.mxu0 0.0
        %1640 = vmatpush2.msra.mxu0 0.0
        %1641 = vmatprep.subr.mxu0 0.0
        %1642 = vmatpush2.msra.mxu0 0.0
        %1643 = vmatprep.subr.mxu0 0.0
        %1644 = vmatpush2.msra.mxu0 0.0
        %1645 = vmatprep.subr.mxu0 0.0
        %1646 = vmatpush2.msra.mxu0 0.0
        %1647 = vmatprep.subr.mxu0 0.0
        %1648 = vmatpush2.msra.mxu0 0.0
        %1649 = vmatprep.subr.mxu0 0.0
        %1650 = vmatpush2.msra.mxu0 0.0
        %1651 = vmatprep.subr.mxu0 0.0
        %1652 = vmatpush2.msra.mxu0 0.0
        %1653 = vmatprep.subr.mxu0 0.0
        %1654 = vmatpush2.msra.mxu0 0.0
        %1655 = vmatprep.subr.mxu0 0.0
        %1656 = vmatpush2.msra.mxu0 0.0
        %1657 = vmatprep.subr.mxu0 0.0
        %1658 = vmatpush2.msra.mxu0 0.0
        %1659 = vmatprep.subr.mxu0 0.0
        %1660 = vmatpush2.msra.mxu0 0.0
        %1661 = vmatprep.subr.mxu0 0.0
        %1662 = vmatpush2.msra.mxu0 0.0
        %1663 = vmatprep.subr.mxu0 0.0
        %1664 = vmatpush2.msra.mxu0 0.0
        %1665 = vmatprep.subr.mxu0 0.0
        %1666 = vmatpush2.msra.mxu0 0.0
        %1667 = vmatprep.subr.mxu0 0.0
        %1668 = vmatpush2.msra.mxu0 0.0
        %1669 = vmatprep.subr.mxu0 0.0
        %1670 = vmatpush2.msra.mxu0 0.0
        %1671 = vmatprep.mubr.f32.mxu0 0.0
        %1672 = vmatmul.mubr.f32.gmra.mxu0 %v1605
        %v1673 = vpop.f32.mrf.mxu0
        %v1674 = vadd.f32 0.0, %v1673
        %v1675 = vpop.f32.mrf.mxu0
        %1676 = vdwg.mxu0
        %v1677 = vadd.f32 %v1599, %v1674
        %1678 = vmatprep.subr.mxu0 0.0
        %1679 = vmatpush1.msra.mxu0 0.0
        %1680 = vmatprep.subr.mxu0 0.0
        %1681 = vmatpush1.msra.mxu0 0.0
        %1682 = vmatprep.subr.mxu0 0.0
        %1683 = vmatpush1.msra.mxu0 0.0
        %1684 = vmatprep.subr.mxu0 0.0
        %1685 = vmatpush1.msra.mxu0 0.0
        %1686 = vmatprep.subr.mxu0 0.0
        %1687 = vmatpush1.msra.mxu0 0.0
        %1688 = vmatprep.subr.mxu0 0.0
        %1689 = vmatpush1.msra.mxu0 0.0
        %1690 = vmatprep.subr.mxu0 0.0
        %1691 = vmatpush1.msra.mxu0 0.0
        %1692 = vmatprep.subr.mxu0 0.0
        %1693 = vmatpush1.msra.mxu0 0.0
        %1694 = vmatprep.subr.mxu0 0.0
        %1695 = vmatpush1.msra.mxu0 0.0
        %1696 = vmatprep.subr.mxu0 0.0
        %1697 = vmatpush1.msra.mxu0 0.0
        %1698 = vmatprep.subr.mxu0 0.0
        %1699 = vmatpush1.msra.mxu0 0.0
        %1700 = vmatprep.subr.mxu0 0.0
        %1701 = vmatpush1.msra.mxu0 0.0
        %1702 = vmatprep.subr.mxu0 0.0
        %1703 = vmatpush1.msra.mxu0 0.0
        %1704 = vmatprep.subr.mxu0 0.0
        %1705 = vmatpush1.msra.mxu0 0.0
        %1706 = vmatprep.subr.mxu0 0.0
        %1707 = vmatpush1.msra.mxu0 0.0
        %1708 = vmatprep.subr.mxu0 0.0
        %1709 = vmatpush1.msra.mxu0 %v1600
        %1710 = vmatprep.subr.mxu0 0.0
        %1711 = vmatpush2.msra.mxu0 0.0
        %1712 = vmatprep.subr.mxu0 0.0
        %1713 = vmatpush2.msra.mxu0 0.0
        %1714 = vmatprep.subr.mxu0 0.0
        %1715 = vmatpush2.msra.mxu0 0.0
        %1716 = vmatprep.subr.mxu0 0.0
        %1717 = vmatpush2.msra.mxu0 0.0
        %1718 = vmatprep.subr.mxu0 0.0
        %1719 = vmatpush2.msra.mxu0 0.0
        %1720 = vmatprep.subr.mxu0 0.0
        %1721 = vmatpush2.msra.mxu0 0.0
        %1722 = vmatprep.subr.mxu0 0.0
        %1723 = vmatpush2.msra.mxu0 0.0
        %1724 = vmatprep.subr.mxu0 0.0
        %1725 = vmatpush2.msra.mxu0 0.0
        %1726 = vmatprep.subr.mxu0 0.0
        %1727 = vmatpush2.msra.mxu0 0.0
        %1728 = vmatprep.subr.mxu0 0.0
        %1729 = vmatpush2.msra.mxu0 0.0
        %1730 = vmatprep.subr.mxu0 0.0
        %1731 = vmatpush2.msra.mxu0 0.0
        %1732 = vmatprep.subr.mxu0 0.0
        %1733 = vmatpush2.msra.mxu0 0.0
        %1734 = vmatprep.subr.mxu0 0.0
        %1735 = vmatpush2.msra.mxu0 0.0
        %1736 = vmatprep.subr.mxu0 0.0
        %1737 = vmatpush2.msra.mxu0 0.0
        %1738 = vmatprep.subr.mxu0 0.0
        %1739 = vmatpush2.msra.mxu0 0.0
        %1740 = vmatprep.subr.mxu0 0.0
        %1741 = vmatpush2.msra.mxu0 0.0
        %1742 = vmatprep.mubr.f32.mxu0 0.0
        %1743 = vmatmul.mubr.f32.gmra.mxu0 %v1226
        %v1744 = vpop.f32.mrf.mxu0
        %v1745 = vadd.f32 0.0, %v1744
        %v1746 = vpop.f32.mrf.mxu0
        %1747 = vdwg.mxu0
        %s1748 = scalar_lea.vmem [#allocation2], 16
        %v1749 = vld [vmem:[%s1748] sm:$0xff]
        %v1750 = vld [vmem:[%s1748 + $0x8] sm:$0xff]
        %v1752 = vsel %vm1603, %v1745, 0
        %1754 = vmatprep.subr.mxu0 0.0
        %1755 = vmatpush1.msra.mxu0 0.0
        %1756 = vmatprep.subr.mxu0 0.0
        %1757 = vmatpush1.msra.mxu0 0.0
        %1758 = vmatprep.subr.mxu0 0.0
        %1759 = vmatpush1.msra.mxu0 0.0
        %1760 = vmatprep.subr.mxu0 0.0
        %1761 = vmatpush1.msra.mxu0 0.0
        %1762 = vmatprep.subr.mxu0 0.0
        %1763 = vmatpush1.msra.mxu0 0.0
        %1764 = vmatprep.subr.mxu0 0.0
        %1765 = vmatpush1.msra.mxu0 0.0
        %1766 = vmatprep.subr.mxu0 0.0
        %1767 = vmatpush1.msra.mxu0 0.0
        %1768 = vmatprep.subr.mxu0 0.0
        %1769 = vmatpush1.msra.mxu0 0.0
        %1770 = vmatprep.subr.mxu0 0.0
        %1771 = vmatpush1.msra.mxu0 0.0
        %1772 = vmatprep.subr.mxu0 0.0
        %1773 = vmatpush1.msra.mxu0 0.0
        %1774 = vmatprep.subr.mxu0 0.0
        %1775 = vmatpush1.msra.mxu0 0.0
        %1776 = vmatprep.subr.mxu0 0.0
        %1777 = vmatpush1.msra.mxu0 0.0
        %1778 = vmatprep.subr.mxu0 0.0
        %1779 = vmatpush1.msra.mxu0 0.0
        %1780 = vmatprep.subr.mxu0 0.0
        %1781 = vmatpush1.msra.mxu0 0.0
        %1782 = vmatprep.subr.mxu0 0.0
        %1783 = vmatpush1.msra.mxu0 %v1750
        %1784 = vmatprep.subr.mxu0 0.0
        %1785 = vmatpush1.msra.mxu0 %v1749
        %1786 = vmatprep.subr.mxu0 0.0
        %1787 = vmatpush2.msra.mxu0 0.0
        %1788 = vmatprep.subr.mxu0 0.0
        %1789 = vmatpush2.msra.mxu0 0.0
        %1790 = vmatprep.subr.mxu0 0.0
        %1791 = vmatpush2.msra.mxu0 0.0
        %1792 = vmatprep.subr.mxu0 0.0
        %1793 = vmatpush2.msra.mxu0 0.0
        %1794 = vmatprep.subr.mxu0 0.0
        %1795 = vmatpush2.msra.mxu0 0.0
        %1796 = vmatprep.subr.mxu0 0.0
        %1797 = vmatpush2.msra.mxu0 0.0
        %1798 = vmatprep.subr.mxu0 0.0
        %1799 = vmatpush2.msra.mxu0 0.0
        %1800 = vmatprep.subr.mxu0 0.0
        %1801 = vmatpush2.msra.mxu0 0.0
        %1802 = vmatprep.subr.mxu0 0.0
        %1803 = vmatpush2.msra.mxu0 0.0
        %1804 = vmatprep.subr.mxu0 0.0
        %1805 = vmatpush2.msra.mxu0 0.0
        %1806 = vmatprep.subr.mxu0 0.0
        %1807 = vmatpush2.msra.mxu0 0.0
        %1808 = vmatprep.subr.mxu0 0.0
        %1809 = vmatpush2.msra.mxu0 0.0
        %1810 = vmatprep.subr.mxu0 0.0
        %1811 = vmatpush2.msra.mxu0 0.0
        %1812 = vmatprep.subr.mxu0 0.0
        %1813 = vmatpush2.msra.mxu0 0.0
        %1814 = vmatprep.subr.mxu0 0.0
        %1815 = vmatpush2.msra.mxu0 0.0
        %1816 = vmatprep.subr.mxu0 0.0
        %1817 = vmatpush2.msra.mxu0 0.0
        %1818 = vmatprep.mubr.f32.mxu0 0.0
        %1819 = vmatmul.mubr.f32.gmra.mxu0 %v1752
        %v1820 = vpop.f32.mrf.mxu0
        %v1821 = vadd.f32 0.0, %v1820
        %v1822 = vpop.f32.mrf.mxu0
        %1823 = vdwg.mxu0
        %v1824 = vadd.f32 %v1677, %v1821
        %1825 = vmatprep.subr.mxu0 0.0
        %1826 = vmatpush1.msra.mxu0 0.0
        %1827 = vmatprep.subr.mxu0 0.0
        %1828 = vmatpush1.msra.mxu0 0.0
        %1829 = vmatprep.subr.mxu0 0.0
        %1830 = vmatpush1.msra.mxu0 0.0
        %1831 = vmatprep.subr.mxu0 0.0
        %1832 = vmatpush1.msra.mxu0 0.0
        %1833 = vmatprep.subr.mxu0 0.0
        %1834 = vmatpush1.msra.mxu0 0.0
        %1835 = vmatprep.subr.mxu0 0.0
        %1836 = vmatpush1.msra.mxu0 0.0
        %1837 = vmatprep.subr.mxu0 0.0
        %1838 = vmatpush1.msra.mxu0 0.0
        %1839 = vmatprep.subr.mxu0 0.0
        %1840 = vmatpush1.msra.mxu0 0.0
        %1841 = vmatprep.subr.mxu0 0.0
        %1842 = vmatpush1.msra.mxu0 0.0
        %1843 = vmatprep.subr.mxu0 0.0
        %1844 = vmatpush1.msra.mxu0 0.0
        %1845 = vmatprep.subr.mxu0 0.0
        %1846 = vmatpush1.msra.mxu0 0.0
        %1847 = vmatprep.subr.mxu0 0.0
        %1848 = vmatpush1.msra.mxu0 0.0
        %1849 = vmatprep.subr.mxu0 0.0
        %1850 = vmatpush1.msra.mxu0 0.0
        %1851 = vmatprep.subr.mxu0 0.0
        %1852 = vmatpush1.msra.mxu0 0.0
        %1853 = vmatprep.subr.mxu0 0.0
        %1854 = vmatpush1.msra.mxu0 0.0
        %1855 = vmatprep.subr.mxu0 0.0
        %1856 = vmatpush1.msra.mxu0 %v1745
        %1857 = vmatprep.subr.mxu0 0.0
        %1858 = vmatpush2.msra.mxu0 0.0
        %1859 = vmatprep.subr.mxu0 0.0
        %1860 = vmatpush2.msra.mxu0 0.0
        %1861 = vmatprep.subr.mxu0 0.0
        %1862 = vmatpush2.msra.mxu0 0.0
        %1863 = vmatprep.subr.mxu0 0.0
        %1864 = vmatpush2.msra.mxu0 0.0
        %1865 = vmatprep.subr.mxu0 0.0
        %1866 = vmatpush2.msra.mxu0 0.0
        %1867 = vmatprep.subr.mxu0 0.0
        %1868 = vmatpush2.msra.mxu0 0.0
        %1869 = vmatprep.subr.mxu0 0.0
        %1870 = vmatpush2.msra.mxu0 0.0
        %1871 = vmatprep.subr.mxu0 0.0
        %1872 = vmatpush2.msra.mxu0 0.0
        %1873 = vmatprep.subr.mxu0 0.0
        %1874 = vmatpush2.msra.mxu0 0.0
        %1875 = vmatprep.subr.mxu0 0.0
        %1876 = vmatpush2.msra.mxu0 0.0
        %1877 = vmatprep.subr.mxu0 0.0
        %1878 = vmatpush2.msra.mxu0 0.0
        %1879 = vmatprep.subr.mxu0 0.0
        %1880 = vmatpush2.msra.mxu0 0.0
        %1881 = vmatprep.subr.mxu0 0.0
        %1882 = vmatpush2.msra.mxu0 0.0
        %1883 = vmatprep.subr.mxu0 0.0
        %1884 = vmatpush2.msra.mxu0 0.0
        %1885 = vmatprep.subr.mxu0 0.0
        %1886 = vmatpush2.msra.mxu0 0.0
        %1887 = vmatprep.subr.mxu0 0.0
        %1888 = vmatpush2.msra.mxu0 0.0
        %1889 = vmatprep.mubr.f32.mxu0 0.0
        %1890 = vmatmul.mubr.f32.gmra.mxu0 %v1226
        %v1891 = vpop.f32.mrf.mxu0
        %v1892 = vadd.f32 0.0, %v1891
        %v1893 = vpop.f32.mrf.mxu0
        %1894 = vdwg.mxu0
        %v1895 = vmul.f32 %v1892, 2.0
        %v1896 = vsub.f32 %v1895, %v1600
        %s1897 = scalar_lea.vmem [#allocation2], 32
        %v1898 = vld [vmem:[%s1897] sm:$0xff]
        %v1899 = vld [vmem:[%s1897 + $0x8] sm:$0xff]
        %v1901 = vsel %vm1603, %v1896, 0
        %1903 = vmatprep.subr.mxu0 0.0
        %1904 = vmatpush1.msra.mxu0 0.0
        %1905 = vmatprep.subr.mxu0 0.0
        %1906 = vmatpush1.msra.mxu0 0.0
        %1907 = vmatprep.subr.mxu0 0.0
        %1908 = vmatpush1.msra.mxu0 0.0
        %1909 = vmatprep.subr.mxu0 0.0
        %1910 = vmatpush1.msra.mxu0 0.0
        %1911 = vmatprep.subr.mxu0 0.0
        %1912 = vmatpush1.msra.mxu0 0.0
        %1913 = vmatprep.subr.mxu0 0.0
        %1914 = vmatpush1.msra.mxu0 0.0
        %1915 = vmatprep.subr.mxu0 0.0
        %1916 = vmatpush1.msra.mxu0 0.0
        %1917 = vmatprep.subr.mxu0 0.0
        %1918 = vmatpush1.msra.mxu0 0.0
        %1919 = vmatprep.subr.mxu0 0.0
        %1920 = vmatpush1.msra.mxu0 0.0
        %1921 = vmatprep.subr.mxu0 0.0
        %1922 = vmatpush1.msra.mxu0 0.0
        %1923 = vmatprep.subr.mxu0 0.0
        %1924 = vmatpush1.msra.mxu0 0.0
        %1925 = vmatprep.subr.mxu0 0.0
        %1926 = vmatpush1.msra.mxu0 0.0
        %1927 = vmatprep.subr.mxu0 0.0
        %1928 = vmatpush1.msra.mxu0 0.0
        %1929 = vmatprep.subr.mxu0 0.0
        %1930 = vmatpush1.msra.mxu0 0.0
        %1931 = vmatprep.subr.mxu0 0.0
        %1932 = vmatpush1.msra.mxu0 %v1899
        %1933 = vmatprep.subr.mxu0 0.0
        %1934 = vmatpush1.msra.mxu0 %v1898
        %1935 = vmatprep.subr.mxu0 0.0
        %1936 = vmatpush2.msra.mxu0 0.0
        %1937 = vmatprep.subr.mxu0 0.0
        %1938 = vmatpush2.msra.mxu0 0.0
        %1939 = vmatprep.subr.mxu0 0.0
        %1940 = vmatpush2.msra.mxu0 0.0
        %1941 = vmatprep.subr.mxu0 0.0
        %1942 = vmatpush2.msra.mxu0 0.0
        %1943 = vmatprep.subr.mxu0 0.0
        %1944 = vmatpush2.msra.mxu0 0.0
        %1945 = vmatprep.subr.mxu0 0.0
        %1946 = vmatpush2.msra.mxu0 0.0
        %1947 = vmatprep.subr.mxu0 0.0
        %1948 = vmatpush2.msra.mxu0 0.0
        %1949 = vmatprep.subr.mxu0 0.0
        %1950 = vmatpush2.msra.mxu0 0.0
        %1951 = vmatprep.subr.mxu0 0.0
        %1952 = vmatpush2.msra.mxu0 0.0
        %1953 = vmatprep.subr.mxu0 0.0
        %1954 = vmatpush2.msra.mxu0 0.0
        %1955 = vmatprep.subr.mxu0 0.0
        %1956 = vmatpush2.msra.mxu0 0.0
        %1957 = vmatprep.subr.mxu0 0.0
        %1958 = vmatpush2.msra.mxu0 0.0
        %1959 = vmatprep.subr.mxu0 0.0
        %1960 = vmatpush2.msra.mxu0 0.0
        %1961 = vmatprep.subr.mxu0 0.0
        %1962 = vmatpush2.msra.mxu0 0.0
        %1963 = vmatprep.subr.mxu0 0.0
        %1964 = vmatpush2.msra.mxu0 0.0
        %1965 = vmatprep.subr.mxu0 0.0
        %1966 = vmatpush2.msra.mxu0 0.0
        %1967 = vmatprep.mubr.f32.mxu0 0.0
        %1968 = vmatmul.mubr.f32.gmra.mxu0 %v1901
        %v1969 = vpop.f32.mrf.mxu0
        %v1970 = vadd.f32 0.0, %v1969
        %v1971 = vpop.f32.mrf.mxu0
        %1972 = vdwg.mxu0
        %v1973 = vadd.f32 %v1824, %v1970
        %v1974 = vld [vmem:[#allocation4] sm:$0x1]
        %v1976 = vlaneseq
        %v1977 = vshrl.u32 %v1976, 7
        %v1978 = vsub.s32 0, %v1977
        %v1979 = vrot.slane %v1974, %v1978
        %v1981 = vadd.f32 %v1973, %v1979
        %v1982 = vtanh.pop %v1981
        %1984 = vrot.lane.b32.xlu0 %v447, 16
        %v1985 = vpop.permute.xlu0 %1984
        %v1987 = vmul.f32 %v1223, %v1985
        %v1988 = vsub.f32 1.0, %v1223
        %1990 = vrot.lane.b32.xlu0 %v1982, 16
        %v1991 = vpop.permute.xlu0 %1990
        %v1993 = vmul.f32 %v1988, %v1991
        %v1994 = vadd.f32 %v1987, %v1993
        %1996 = vrot.lane.b32.xlu0 %v1994, 112
        %v1997 = vpop.permute.xlu0 %1996
        %1999 = vst.msk [vmem:[%s443] sm:$0xff] %vm1603, %v1997
        %p2000 = scmp.lt.s32.totalorder %s24, 1
        %s2001 = scalar_select %p2000, %s24, 1
        %s2002 = smul.addr %s2001, 8
        %s2003 = scalar_lea.vmem %s11, %s2002
        // Predicated region
        $region73: #{encoder_forward.4} parent=63 // pred_check
          %p2004 = pneg %p288
        $region74: #{encoder_forward.4} parent=63 // pred_check_branch
          %2006 = sbr.rel (%p2004) target = $region76
        $region75: #{encoder_forward.4} parent=63 // pred_region
          _
        $region76: #{encoder_forward.4} parent=63 // pred_fallthru
          _
      $region64: #{encoder_forward.4} parent=5 // pred_fallthru
        _
      %p2007 = scmp.le.s32.totalorder 2, %s19
      // Predicated region
      $region77: #{encoder_forward.4} parent=5 // pred_check
        %p2008 = pneg %p2007
      $region78: #{encoder_forward.4} parent=5 // pred_check_branch
        %2010 = sbr.rel (%p2008) target = $region80
      $region79: #{encoder_forward.4} parent=5 // pred_region
        %s2011 = ssub.s32 %s19, 2
        // Predicated region
        $region81: #{encoder_forward.4} parent=79 // pred_check
          %p2012 = pneg %p294
        $region82: #{encoder_forward.4} parent=79 // pred_check_branch
          %2014 = sbr.rel (%p2012) target = $region84
        $region83: #{encoder_forward.4} parent=79 // pred_region
          %p2015 = scmp.lt.s32.totalorder %s25, 1
          %s2016 = scalar_select %p2015, %s25, 1
          %s2017 = smul.addr %s2016, 8
          %s2018 = scalar_lea.vmem %s11, %s2017
        $region84: #{encoder_forward.4} parent=79 // pred_fallthru
          _
      $region80: #{encoder_forward.4} parent=5 // pred_fallthru
        _
    $region6: #{encoder_forward.4} parent=1 // loop_footer
      %s23 = sadd.s32 1, %s19
    $region7: #{encoder_forward.4} parent=1 // loop_footer_branch
      %18 = sbr.rel target = $region3
    $region8: #{encoder_forward.4} parent=1 // loop_exit
      _
    %2019 = vsyncpa [#allocation3], 1
    %s2020 = scalar_lea.sflag [#allocation3], 1
    %2021 = vsyncpa %s2020, 1
    %2022 = vsyncpa [#allocation5], 1

// kernel: encoder_forward.5
$region0: #{encoder_forward.5}
  #allocation0 [shape = 'u32[]', space=smem, size = 0x4, offset = 0x4, fixed_abs, tag = 'smem constant byte address 0x4 - core index']
  #allocation1 [shape = 'u32[144,128]{1,0:T(1,128)}', space=vmem, size = 0x12000, scoped, tag = 'internal scratch']
  %s0 = inlined_call_operand.vmem [shape: f32[2,8,8], index: 0, kind: input, shape index: {}]
  %s1 = inlined_call_operand.vmem [shape: f32[8,8], index: 1, kind: input, shape index: {}]
  %s2 = inlined_call_operand.vmem [shape: f32[2,8,16], index: 2, kind: input, shape index: {}]
  %s3 = inlined_call_operand.vmem [shape: f32[2,8,16], index: 3, kind: input, shape index: {}]
  %s4 = inlined_call_operand.vmem [shape: f32[8,32], index: 4, kind: input, shape index: {}]
  %s5 = inlined_call_operand.vmem [shape: f32[3,16,32], index: 5, kind: input, shape index: {}]
  %s6 = inlined_call_operand.vmem [shape: f32[3,32,32], index: 6, kind: input, shape index: {}]
  %s7 = inlined_call_operand.vmem [shape: f32[1,32], index: 7, kind: input, shape index: {}]
  %s8 = inlined_call_operand.vmem [shape: f32[3,16,16], index: 8, kind: input, shape index: {}]
  %s9 = inlined_call_operand.vmem [shape: f32[3,16,16], index: 9, kind: input, shape index: {}]
  %s10 = inlined_call_operand.vmem [shape: f32[1,16], index: 10, kind: input, shape index: {}]
  %s11 = inlined_call_operand.vmem [shape: f32[2,8,16], index: 11, kind: output, shape index: {}]
  %s12 = sld [smem:[#allocation0]]
  $region77: #{encoder_forward.5} parent=0
    _
  %s14 = ssub.s32 1, %s12
  %s15 = scalar_select 0, %s14, %s12
  loop: start=0, step=1, limit=4
  $region2: #{encoder_forward.5} parent=0 // loop_pre_header
    _
  $region3: #{encoder_forward.5} parent=0 // loop_header
    %s17 = sphi 0, %s21
    %p18 = scmp.ge.s32.totalorder %s17, 4
    %s27 = sphi 0, %s29
    %s30 = sphi 0, %s27
    %s31 = sphi 0, %s30
    %s47 = sphi 0, %s31
    %s51 = sphi 0, %s51
    %s53 = sphi 0, %s51
    %s54 = sphi 0, %s53
    %s68 = sphi 0, %s54
    %s74 = sphi 0, %s76
    %s77 = sphi 0, %s74
    %s78 = sphi 0, %s77
    %s94 = sphi 0, %s78
    %s100 = sphi 0, %s102
    %s103 = sphi 0, %s100
    %s104 = sphi 0, %s103
    %s120 = sphi 0, %s104
    %s124 = sphi 0, %s124
    %s126 = sphi 0, %s124
    %s127 = sphi 0, %s126
    %s141 = sphi 0, %s127
    %s145 = sphi 0, %s145
    %s147 = sphi 0, %s145
    %s148 = sphi 0, %s147
    %s162 = sphi 0, %s148
    %s166 = sphi 0, %s166
    %s168 = sphi 0, %s166
    %s169 = sphi 0, %s168
    %s183 = sphi 0, %s169
    %s187 = sphi 0, %s187
    %s189 = sphi 0, %s187
    %s190 = sphi 0, %s189
    %s204 = sphi 0, %s190
    %s208 = sphi 0, %s208
    %s210 = sphi 0, %s208
    %s211 = sphi 0, %s210
    %s225 = sphi 0, %s211
    %s229 = sphi 0, %s229
    %s231 = sphi 0, %s229
    %s232 = sphi 0, %s231
    %s246 = sphi 0, %s232
    %s250 = sphi 0, %s250
    %s252 = sphi 0, %s250
    %s253 = sphi 0, %s252
    %s267 = sphi 0, %s253
    %s273 = sphi 0, %s275
    %s276 = sphi 0, %s273
    %s277 = sphi 0, %s276
    %s293 = sphi 0, %s277
  $region4: #{encoder_forward.5} parent=0 // loop_header_branch
    %20 = sbr.rel (%p18) target = $region8
  $region5: #{encoder_forward.5} parent=0 // loop_body
    %s22 = ssub.s32 %s17, 1
    %s23 = ssub.s32 %s17, 2
    %s24 = sadd.s32 %s17, 1
    %s25 = ssub.s32 %s17, %s24
    %p26 = scmp.eq.s32.totalorder %s25, 0
    %s28 = sadd.s32 %s27, 1
    %s29 = scalar_select %p26, %s27, %s28
    %p32 = pneg %p26
    %p33 = scmp.eq.s32.totalorder %s17, 1
    %p34 = por %p32, %p33
    %p35 = scmp.ne.s32.totalorder %s27, %s30
    %p36 = scmp.eq.s32.totalorder %s17, 0
    %p37 = por %p35, %p36
    %p38 = scmp.ne.s32.totalorder %s27, %s30
    %p39 = scmp.eq.s32.totalorder %s22, 1
    %p40 = por %p38, %p39
    %p41 = scmp.ne.s32.totalorder %s30, %s31
    %p42 = scmp.eq.s32.totalorder %s22, 0
    %p43 = por %p41, %p42
    %p44 = scmp.ne.s32.totalorder %s30, %s31
    %p45 = scmp.eq.s32.totalorder %s23, 1
    %p46 = por %p44, %p45
    %p48 = scmp.ne.s32.totalorder %s31, %s47
    %p49 = scmp.eq.s32.totalorder %s23, 0
    %p50 = por %p48, %p49
    %s52 = sadd.s32 %s51, 1
    %p55 = scmp.eq.s32.totalorder %s17, 1
    %p56 = scmp.ne.s32.totalorder %s51, %s53
    %p57 = scmp.eq.s32.totalorder %s17, 0
    %p58 = por %p56, %p57
    %p59 = scmp.ne.s32.totalorder %s51, %s53
    %p60 = scmp.eq.s32.totalorder %s22, 1
    %p61 = por %p59, %p60
    %p62 = scmp.ne.s32.totalorder %s53, %s54
    %p63 = scmp.eq.s32.totalorder %s22, 0
    %p64 = por %p62, %p63
    %p65 = scmp.ne.s32.totalorder %s53, %s54
    %p66 = scmp.eq.s32.totalorder %s23, 1
    %p67 = por %p65, %p66
    %p69 = scmp.ne.s32.totalorder %s54, %s68
    %p70 = scmp.eq.s32.totalorder %s23, 0
    %p71 = por %p69, %p70
    %s72 = ssub.s32 %s17, %s24
    %p73 = scmp.eq.s32.totalorder %s72, 0
    %s75 = sadd.s32 %s74, 1
    %s76 = scalar_select %p73, %s74, %s75
    %p79 = pneg %p73
    %p80 = scmp.eq.s32.totalorder %s17, 1
    %p81 = por %p79, %p80
    %p82 = scmp.ne.s32.totalorder %s74, %s77
    %p83 = scmp.eq.s32.totalorder %s17, 0
    %p84 = por %p82, %p83
    %p85 = scmp.ne.s32.totalorder %s74, %s77
    %p86 = scmp.eq.s32.totalorder %s22, 1
    %p87 = por %p85, %p86
    %p88 = scmp.ne.s32.totalorder %s77, %s78
    %p89 = scmp.eq.s32.totalorder %s22, 0
    %p90 = por %p88, %p89
    %p91 = scmp.ne.s32.totalorder %s77, %s78
    %p92 = scmp.eq.s32.totalorder %s23, 1
    %p93 = por %p91, %p92
    %p95 = scmp.ne.s32.totalorder %s78, %s94
    %p96 = scmp.eq.s32.totalorder %s23, 0
    %p97 = por %p95, %p96
    %s98 = ssub.s32 %s17, %s24
    %p99 = scmp.eq.s32.totalorder %s98, 0
    %s101 = sadd.s32 %s100, 1
    %s102 = scalar_select %p99, %s100, %s101
    %p105 = pneg %p99
    %p106 = scmp.eq.s32.totalorder %s17, 1
    %p107 = por %p105, %p106
    %p108 = scmp.ne.s32.totalorder %s100, %s103
    %p109 = scmp.eq.s32.totalorder %s17, 0
    %p110 = por %p108, %p109
    %p111 = scmp.ne.s32.totalorder %s100, %s103
    %p112 = scmp.eq.s32.totalorder %s22, 1
    %p113 = por %p111, %p112
    %p114 = scmp.ne.s32.totalorder %s103, %s104
    %p115 = scmp.eq.s32.totalorder %s22, 0
    %p116 = por %p114, %p115
    %p117 = scmp.ne.s32.totalorder %s103, %s104
    %p118 = scmp.eq.s32.totalorder %s23, 1
    %p119 = por %p117, %p118
    %p121 = scmp.ne.s32.totalorder %s104, %s120
    %p122 = scmp.eq.s32.totalorder %s23, 0
    %p123 = por %p121, %p122
    %s125 = sadd.s32 %s124, 1
    %p128 = scmp.eq.s32.totalorder %s17, 1
    %p129 = scmp.ne.s32.totalorder %s124, %s126
    %p130 = scmp.eq.s32.totalorder %s17, 0
    %p131 = por %p129, %p130
    %p132 = scmp.ne.s32.totalorder %s124, %s126
    %p133 = scmp.eq.s32.totalorder %s22, 1
    %p134 = por %p132, %p133
    %p135 = scmp.ne.s32.totalorder %s126, %s127
    %p136 = scmp.eq.s32.totalorder %s22, 0
    %p137 = por %p135, %p136
    %p138 = scmp.ne.s32.totalorder %s126, %s127
    %p139 = scmp.eq.s32.totalorder %s23, 1
    %p140 = por %p138, %p139
    %p142 = scmp.ne.s32.totalorder %s127, %s141
    %p143 = scmp.eq.s32.totalorder %s23, 0
    %p144 = por %p142, %p143
    %s146 = sadd.s32 %s145, 1
    %p149 = scmp.eq.s32.totalorder %s17, 1
    %p150 = scmp.ne.s32.totalorder %s145, %s147
    %p151 = scmp.eq.s32.totalorder %s17, 0
    %p152 = por %p150, %p151
    %p153 = scmp.ne.s32.totalorder %s145, %s147
    %p154 = scmp.eq.s32.totalorder %s22, 1
    %p155 = por %p153, %p154
    %p156 = scmp.ne.s32.totalorder %s147, %s148
    %p157 = scmp.eq.s32.totalorder %s22, 0
    %p158 = por %p156, %p157
    %p159 = scmp.ne.s32.totalorder %s147, %s148
    %p160 = scmp.eq.s32.totalorder %s23, 1
    %p161 = por %p159, %p160
    %p163 = scmp.ne.s32.totalorder %s148, %s162
    %p164 = scmp.eq.s32.totalorder %s23, 0
    %p165 = por %p163, %p164
    %s167 = sadd.s32 %s166, 1
    %p170 = scmp.eq.s32.totalorder %s17, 1
    %p171 = scmp.ne.s32.totalorder %s166, %s168
    %p172 = scmp.eq.s32.totalorder %s17, 0
    %p173 = por %p171, %p172
    %p174 = scmp.ne.s32.totalorder %s166, %s168
    %p175 = scmp.eq.s32.totalorder %s22, 1
    %p176 = por %p174, %p175
    %p177 = scmp.ne.s32.totalorder %s168, %s169
    %p178 = scmp.eq.s32.totalorder %s22, 0
    %p179 = por %p177, %p178
    %p180 = scmp.ne.s32.totalorder %s168, %s169
    %p181 = scmp.eq.s32.totalorder %s23, 1
    %p182 = por %p180, %p181
    %p184 = scmp.ne.s32.totalorder %s169, %s183
    %p185 = scmp.eq.s32.totalorder %s23, 0
    %p186 = por %p184, %p185
    %s188 = sadd.s32 %s187, 1
    %p191 = scmp.eq.s32.totalorder %s17, 1
    %p192 = scmp.ne.s32.totalorder %s187, %s189
    %p193 = scmp.eq.s32.totalorder %s17, 0
    %p194 = por %p192, %p193
    %p195 = scmp.ne.s32.totalorder %s187, %s189
    %p196 = scmp.eq.s32.totalorder %s22, 1
    %p197 = por %p195, %p196
    %p198 = scmp.ne.s32.totalorder %s189, %s190
    %p199 = scmp.eq.s32.totalorder %s22, 0
    %p200 = por %p198, %p199
    %p201 = scmp.ne.s32.totalorder %s189, %s190
    %p202 = scmp.eq.s32.totalorder %s23, 1
    %p203 = por %p201, %p202
    %p205 = scmp.ne.s32.totalorder %s190, %s204
    %p206 = scmp.eq.s32.totalorder %s23, 0
    %p207 = por %p205, %p206
    %s209 = sadd.s32 %s208, 1
    %p212 = scmp.eq.s32.totalorder %s17, 1
    %p213 = scmp.ne.s32.totalorder %s208, %s210
    %p214 = scmp.eq.s32.totalorder %s17, 0
    %p215 = por %p213, %p214
    %p216 = scmp.ne.s32.totalorder %s208, %s210
    %p217 = scmp.eq.s32.totalorder %s22, 1
    %p218 = por %p216, %p217
    %p219 = scmp.ne.s32.totalorder %s210, %s211
    %p220 = scmp.eq.s32.totalorder %s22, 0
    %p221 = por %p219, %p220
    %p222 = scmp.ne.s32.totalorder %s210, %s211
    %p223 = scmp.eq.s32.totalorder %s23, 1
    %p224 = por %p222, %p223
    %p226 = scmp.ne.s32.totalorder %s211, %s225
    %p227 = scmp.eq.s32.totalorder %s23, 0
    %p228 = por %p226, %p227
    %s230 = sadd.s32 %s229, 1
    %p233 = scmp.eq.s32.totalorder %s17, 1
    %p234 = scmp.ne.s32.totalorder %s229, %s231
    %p235 = scmp.eq.s32.totalorder %s17, 0
    %p236 = por %p234, %p235
    %p237 = scmp.ne.s32.totalorder %s229, %s231
    %p238 = scmp.eq.s32.totalorder %s22, 1
    %p239 = por %p237, %p238
    %p240 = scmp.ne.s32.totalorder %s231, %s232
    %p241 = scmp.eq.s32.totalorder %s22, 0
    %p242 = por %p240, %p241
    %p243 = scmp.ne.s32.totalorder %s231, %s232
    %p244 = scmp.eq.s32.totalorder %s23, 1
    %p245 = por %p243, %p244
    %p247 = scmp.ne.s32.totalorder %s232, %s246
    %p248 = scmp.eq.s32.totalorder %s23, 0
    %p249 = por %p247, %p248
    %s251 = sadd.s32 %s250, 1
    %p254 = scmp.eq.s32.totalorder %s17, 1
    %p255 = scmp.ne.s32.totalorder %s250, %s252
    %p256 = scmp.eq.s32.totalorder %s17, 0
    %p257 = por %p255, %p256
    %p258 = scmp.ne.s32.totalorder %s250, %s252
    %p259 = scmp.eq.s32.totalorder %s22, 1
    %p260 = por %p258, %p259
    %p261 = scmp.ne.s32.totalorder %s252, %s253
    %p262 = scmp.eq.s32.totalorder %s22, 0
    %p263 = por %p261, %p262
    %p264 = scmp.ne.s32.totalorder %s252, %s253
    %p265 = scmp.eq.s32.totalorder %s23, 1
    %p266 = por %p264, %p265
    %p268 = scmp.ne.s32.totalorder %s253, %s267
    %p269 = scmp.eq.s32.totalorder %s23, 0
    %p270 = por %p268, %p269
    %s271 = ssub.s32 %s17, %s24
    %p272 = scmp.eq.s32.totalorder %s271, 0
    %s274 = sadd.s32 %s273, 1
    %s275 = scalar_select %p272, %s273, %s274
    %p278 = pneg %p272
    %p279 = scmp.eq.s32.totalorder %s17, 1
    %p280 = por %p278, %p279
    %p281 = scmp.ne.s32.totalorder %s273, %s276
    %p282 = scmp.eq.s32.totalorder %s17, 0
    %p283 = por %p281, %p282
    %p284 = scmp.ne.s32.totalorder %s273, %s276
    %p285 = scmp.eq.s32.totalorder %s22, 1
    %p286 = por %p284, %p285
    %p287 = scmp.ne.s32.totalorder %s276, %s277
    %p288 = scmp.eq.s32.totalorder %s22, 0
    %p289 = por %p287, %p288
    %p290 = scmp.ne.s32.totalorder %s276, %s277
    %p291 = scmp.eq.s32.totalorder %s23, 1
    %p292 = por %p290, %p291
    %p294 = scmp.ne.s32.totalorder %s277, %s293
    %p295 = scmp.eq.s32.totalorder %s23, 0
    %p296 = por %p294, %p295
    %p297 = scmp.le.s32.totalorder 1, %s17
    %p298 = scmp.lt.s32.totalorder %s17, 3
    %p299 = pnand %p297, %p298
    %p300 = pneg %p299
    // Predicated region
    $region9: #{encoder_forward.5} parent=5 // pred_check
      _
    $region10: #{encoder_forward.5} parent=5 // pred_check_branch
      %302 = sbr.rel (%p299) target = $region12
    $region11: #{encoder_forward.5} parent=5 // pred_region
      %s303 = ssub.s32 %s17, 1
      // Predicated region
      $region13: #{encoder_forward.5} parent=11 // pred_check
        %p304 = pneg %p64
      $region14: #{encoder_forward.5} parent=11 // pred_check_branch
        %306 = sbr.rel (%p304) target = $region16
      $region15: #{encoder_forward.5} parent=11 // pred_region
        _
      $region16: #{encoder_forward.5} parent=11 // pred_fallthru
        _
      // Predicated region
      $region17: #{encoder_forward.5} parent=11 // pred_check
        %p307 = pneg %p137
      $region18: #{encoder_forward.5} parent=11 // pred_check_branch
        %309 = sbr.rel (%p307) target = $region20
      $region19: #{encoder_forward.5} parent=11 // pred_region
        _
      $region20: #{encoder_forward.5} parent=11 // pred_fallthru
        _
      // Predicated region
      $region21: #{encoder_forward.5} parent=11 // pred_check
        %p310 = pneg %p158
      $region22: #{encoder_forward.5} parent=11 // pred_check_branch
        %312 = sbr.rel (%p310) target = $region24
      $region23: #{encoder_forward.5} parent=11 // pred_region
        _
      $region24: #{encoder_forward.5} parent=11 // pred_fallthru
        _
      // Predicated region
      $region25: #{encoder_forward.5} parent=11 // pred_check
        %p313 = pneg %p179
      $region26: #{encoder_forward.5} parent=11 // pred_check_branch
        %315 = sbr.rel (%p313) target = $region28
      $region27: #{encoder_forward.5} parent=11 // pred_region
        _
      $region28: #{encoder_forward.5} parent=11 // pred_fallthru
        _
      // Predicated region
      $region29: #{encoder_forward.5} parent=11 // pred_check
        %p316 = pneg %p200
      $region30: #{encoder_forward.5} parent=11 // pred_check_branch
        %318 = sbr.rel (%p316) target = $region32
      $region31: #{encoder_forward.5} parent=11 // pred_region
        _
      $region32: #{encoder_forward.5} parent=11 // pred_fallthru
        _
      // Predicated region
      $region33: #{encoder_forward.5} parent=11 // pred_check
        %p319 = pneg %p221
      $region34: #{encoder_forward.5} parent=11 // pred_check_branch
        %321 = sbr.rel (%p319) target = $region36
      $region35: #{encoder_forward.5} parent=11 // pred_region
        _
      $region36: #{encoder_forward.5} parent=11 // pred_fallthru
        _
      // Predicated region
      $region37: #{encoder_forward.5} parent=11 // pred_check
        %p322 = pneg %p242
      $region38: #{encoder_forward.5} parent=11 // pred_check_branch
        %324 = sbr.rel (%p322) target = $region40
      $region39: #{encoder_forward.5} parent=11 // pred_region
        _
      $region40: #{encoder_forward.5} parent=11 // pred_fallthru
        _
      // Predicated region
      $region41: #{encoder_forward.5} parent=11 // pred_check
        %p325 = pneg %p263
      $region42: #{encoder_forward.5} parent=11 // pred_check_branch
        %327 = sbr.rel (%p325) target = $region44
      $region43: #{encoder_forward.5} parent=11 // pred_region
        _
      $region44: #{encoder_forward.5} parent=11 // pred_fallthru
        _
    $region12: #{encoder_forward.5} parent=5 // pred_fallthru
      _
    %p328 = scmp.lt.s32.totalorder %s17, 2
    // Predicated region
    $region45: #{encoder_forward.5} parent=5 // pred_check
      %p329 = pneg %p328
    $region46: #{encoder_forward.5} parent=5 // pred_check_branch
      %331 = sbr.rel (%p329) target = $region48
    $region47: #{encoder_forward.5} parent=5 // pred_region
      // Predicated region
      $region49: #{encoder_forward.5} parent=47 // pred_check
        %p332 = pneg %p37
      $region50: #{encoder_forward.5} parent=47 // pred_check_branch
        %334 = sbr.rel (%p332) target = $region52
      $region51: #{encoder_forward.5} parent=47 // pred_region
        %p335 = scmp.lt.s32.totalorder %s17, 1
        %s336 = scalar_select %p335, %s17, 1
        %s337 = smul.addr %s336, 8
        %s338 = scalar_lea.vmem %s0, %s337
      $region52: #{encoder_forward.5} parent=47 // pred_fallthru
        _
      // Predicated region
      $region53: #{encoder_forward.5} parent=47 // pred_check
        %p339 = pneg %p84
      $region54: #{encoder_forward.5} parent=47 // pred_check_branch
        %341 = sbr.rel (%p339) target = $region56
      $region55: #{encoder_forward.5} parent=47 // pred_region
        %p342 = scmp.lt.s32.totalorder %s17, 1
        %s343 = scalar_select %p342, %s17, 1
        %s344 = smul.addr %s343, 8
        %s345 = scalar_lea.vmem %s2, %s344
      $region56: #{encoder_forward.5} parent=47 // pred_fallthru
        _
      // Predicated region
      $region57: #{encoder_forward.5} parent=47 // pred_check
        %p346 = pneg %p110
      $region58: #{encoder_forward.5} parent=47 // pred_check_branch
        %348 = sbr.rel (%p346) target = $region60
      $region59: #{encoder_forward.5} parent=47 // pred_region
        %p349 = scmp.lt.s32.totalorder %s17, 1
        %s350 = scalar_select %p349, %s17, 1
        %s351 = smul.addr %s350, 8
        %s352 = scalar_lea.vmem %s3, %s351
      $region60: #{encoder_forward.5} parent=47 // pred_fallthru
        _
    $region48: #{encoder_forward.5} parent=5 // pred_fallthru
      _
    %p353 = scmp.le.s32.totalorder 1, %s17
    %p354 = scmp.lt.s32.totalorder %s17, 3
    %p355 = pnand %p353, %p354
    %p356 = pneg %p355
    // Predicated region
    $region61: #{encoder_forward.5} parent=5 // pred_check
      _
    $region62: #{encoder_forward.5} parent=5 // pred_check_branch
      %358 = sbr.rel (%p355) target = $region64
    $region63: #{encoder_forward.5} parent=5 // pred_region
      %s359 = ssub.s32 %s17, 1
      %p360 = scmp.lt.s32.totalorder %s22, 1
      %s361 = scalar_select %p360, %s22, 1
      %s362 = smul.addr %s361, 8
      %s363 = scalar_lea.vmem %s0, %s362
      %p364 = pneg %p43
      %p365 = pneg %p40
      %p366 = pneg %p64
      %p367 = pneg %p61
      %p368 = scmp.lt.s32.totalorder %s22, 1
      %s369 = scalar_select %p368, %s22, 1
      %s370 = smul.addr %s369, 8
      %s371 = scalar_lea.vmem %s2, %s370
      %p372 = pneg %p90
      %p373 = pneg %p87
      %p374 = scmp.lt.s32.totalorder %s22, 1
      %s375 = scalar_select %p374, %s22, 1
      %s376 = smul.addr %s375, 8
      %s377 = scalar_lea.vmem %s3, %s376
      %p378 = pneg %p116
      %p379 = pneg %p113
      %p380 = pneg %p137
      %p381 = pneg %p134
      %p382 = pneg %p158
      %p383 = pneg %p155
      %p384 = pneg %p179
      %p385 = pneg %p176
      %p386 = pneg %p200
      %p387 = pneg %p197
      %p388 = pneg %p221
      %p389 = pneg %p218
      %p390 = pneg %p242
      %p391 = pneg %p239
      %p392 = pneg %p263
      %p393 = pneg %p260
      %p394 = pneg %p289
      %p395 = pneg %p286
      %p396 = scmp.lt.s32.totalorder %s22, 1
      %s397 = scalar_select %p396, %s22, 1
      %s398 = smul.addr %s397, 8
      %s399 = scalar_lea.vmem %s11, %s398
      %p400 = scmp.lt.s32.totalorder %s22, 1
      %s401 = scalar_select %p400, %s22, 1
      %s402 = smul.addr %s401, 8
      %s403 = scalar_lea.vmem %s0, %s402
      %p404 = scmp.lt.s32.totalorder %s22, 1
      %s405 = scalar_select %p404, %s22, 1
      %s406 = smul.addr %s405, 8
      %s407 = scalar_lea.vmem %s2, %s406
      %p408 = scmp.lt.s32.totalorder %s22, 1
      %s409 = scalar_select %p408, %s22, 1
      %s410 = smul.addr %s409, 8
      %s411 = scalar_lea.vmem %s3, %s410
      %p412 = scmp.lt.s32.totalorder %s22, 1
      %s413 = scalar_select %p412, %s22, 1
      %s414 = smul.addr %s413, 8
      %s415 = scalar_lea.vmem %s11, %s414
      %v416 = vld [vmem:[%s403] sm:$0xff]
      %v417 = vld [vmem:[%s1] sm:$0xff]
      %v418 = vld [vmem:[%s407] sm:$0xff]
      %v419 = vld [vmem:[%s411] sm:$0xff]
      %v420 = vld [vmem:[%s4] sm:$0xff]
      %v421 = vld [vmem:[%s5] sm:$0xff]
      %v422 = vld [vmem:[%s5 + $0x8] sm:$0xff]
      %vm423 = vcmask 64512
      %v425 = vsel %vm423, %v416, 0
      %427 = vmatprep.subr.mxu0 0.0
      %428 = vmatpush1.msra.mxu0 0.0
      %429 = vmatprep.subr.mxu0 0.0
      %430 = vmatpush1.msra.mxu0 0.0
      %431 = vmatprep.subr.mxu0 0.0
      %432 = vmatpush1.msra.mxu0 0.0
      %433 = vmatprep.subr.mxu0 0.0
      %434 = vmatpush1.msra.mxu0 0.0
      %435 = vmatprep.subr.mxu0 0.0
      %436 = vmatpush1.msra.mxu0 0.0
      %437 = vmatprep.subr.mxu0 0.0
      %438 = vmatpush1.msra.mxu0 0.0
      %439 = vmatprep.subr.mxu0 0.0
      %440 = vmatpush1.msra.mxu0 0.0
      %441 = vmatprep.subr.mxu0 0.0
      %442 = vmatpush1.msra.mxu0 0.0
      %443 = vmatprep.subr.mxu0 0.0
      %444 = vmatpush1.msra.mxu0 0.0
      %445 = vmatprep.subr.mxu0 0.0
      %446 = vmatpush1.msra.mxu0 0.0
      %447 = vmatprep.subr.mxu0 0.0
      %448 = vmatpush1.msra.mxu0 0.0
      %449 = vmatprep.subr.mxu0 0.0
      %450 = vmatpush1.msra.mxu0 0.0
      %451 = vmatprep.subr.mxu0 0.0
      %452 = vmatpush1.msra.mxu0 0.0
      %453 = vmatprep.subr.mxu0 0.0
      %454 = vmatpush1.msra.mxu0 0.0
      %455 = vmatprep.subr.mxu0 0.0
      %456 = vmatpush1.msra.mxu0 0.0
      %457 = vmatprep.subr.mxu0 0.0
      %458 = vmatpush1.msra.mxu0 %v418
      %459 = vmatprep.subr.mxu0 0.0
      %460 = vmatpush2.msra.mxu0 0.0
      %461 = vmatprep.subr.mxu0 0.0
      %462 = vmatpush2.msra.mxu0 0.0
      %463 = vmatprep.subr.mxu0 0.0
      %464 = vmatpush2.msra.mxu0 0.0
      %465 = vmatprep.subr.mxu0 0.0
      %466 = vmatpush2.msra.mxu0 0.0
      %467 = vmatprep.subr.mxu0 0.0
      %468 = vmatpush2.msra.mxu0 0.0
      %469 = vmatprep.subr.mxu0 0.0
      %470 = vmatpush2.msra.mxu0 0.0
      %471 = vmatprep.subr.mxu0 0.0
      %472 = vmatpush2.msra.mxu0 0.0
      %473 = vmatprep.subr.mxu0 0.0
      %474 = vmatpush2.msra.mxu0 0.0
      %475 = vmatprep.subr.mxu0 0.0
      %476 = vmatpush2.msra.mxu0 0.0
      %477 = vmatprep.subr.mxu0 0.0
      %478 = vmatpush2.msra.mxu0 0.0
      %479 = vmatprep.subr.mxu0 0.0
      %480 = vmatpush2.msra.mxu0 0.0
      %481 = vmatprep.subr.mxu0 0.0
      %482 = vmatpush2.msra.mxu0 0.0
      %483 = vmatprep.subr.mxu0 0.0
      %484 = vmatpush2.msra.mxu0 0.0
      %485 = vmatprep.subr.mxu0 0.0
      %486 = vmatpush2.msra.mxu0 0.0
      %487 = vmatprep.subr.mxu0 0.0
      %488 = vmatpush2.msra.mxu0 0.0
      %489 = vmatprep.subr.mxu0 0.0
      %490 = vmatpush2.msra.mxu0 0.0
      %491 = vmatprep.mubr.f32.mxu0 0.0
      %492 = vmatmul.mubr.f32.gmra.mxu0 %v425
      %v493 = vpop.f32.mrf.mxu0
      %v494 = vadd.f32 0.0, %v493
      %v495 = vpop.f32.mrf.mxu0
      %496 = vdwg.mxu0
      %s497 = scalar_lea.vmem %s5, 16
      %v498 = vld [vmem:[%s497] sm:$0xff]
      %v499 = vld [vmem:[%s497 + $0x8] sm:$0xff]
      %vm500 = vcmask 130048
      %v502 = vsel %vm500, %v494, 0
      %504 = vmatprep.subr.mxu0 0.0
      %505 = vmatpush1.msra.mxu0 0.0
      %506 = vmatprep.subr.mxu0 0.0
      %507 = vmatpush1.msra.mxu0 0.0
      %508 = vmatprep.subr.mxu0 0.0
      %509 = vmatpush1.msra.mxu0 0.0
      %510 = vmatprep.subr.mxu0 0.0
      %511 = vmatpush1.msra.mxu0 0.0
      %512 = vmatprep.subr.mxu0 0.0
      %513 = vmatpush1.msra.mxu0 0.0
      %514 = vmatprep.subr.mxu0 0.0
      %515 = vmatpush1.msra.mxu0 0.0
      %516 = vmatprep.subr.mxu0 0.0
      %517 = vmatpush1.msra.mxu0 0.0
      %518 = vmatprep.subr.mxu0 0.0
      %519 = vmatpush1.msra.mxu0 0.0
      %520 = vmatprep.subr.mxu0 0.0
      %521 = vmatpush1.msra.mxu0 0.0
      %522 = vmatprep.subr.mxu0 0.0
      %523 = vmatpush1.msra.mxu0 0.0
      %524 = vmatprep.subr.mxu0 0.0
      %525 = vmatpush1.msra.mxu0 0.0
      %526 = vmatprep.subr.mxu0 0.0
      %527 = vmatpush1.msra.mxu0 0.0
      %528 = vmatprep.subr.mxu0 0.0
      %529 = vmatpush1.msra.mxu0 0.0
      %530 = vmatprep.subr.mxu0 0.0
      %531 = vmatpush1.msra.mxu0 0.0
      %532 = vmatprep.subr.mxu0 0.0
      %533 = vmatpush1.msra.mxu0 %v499
      %534 = vmatprep.subr.mxu0 0.0
      %535 = vmatpush1.msra.mxu0 %v498
      %536 = vmatprep.subr.mxu0 0.0
      %537 = vmatpush2.msra.mxu0 0.0
      %538 = vmatprep.subr.mxu0 0.0
      %539 = vmatpush2.msra.mxu0 0.0
      %540 = vmatprep.subr.mxu0 0.0
      %541 = vmatpush2.msra.mxu0 0.0
      %542 = vmatprep.subr.mxu0 0.0
      %543 = vmatpush2.msra.mxu0 0.0
      %544 = vmatprep.subr.mxu0 0.0
      %545 = vmatpush2.msra.mxu0 0.0
      %546 = vmatprep.subr.mxu0 0.0
      %547 = vmatpush2.msra.mxu0 0.0
      %548 = vmatprep.subr.mxu0 0.0
      %549 = vmatpush2.msra.mxu0 0.0
      %550 = vmatprep.subr.mxu0 0.0
      %551 = vmatpush2.msra.mxu0 0.0
      %552 = vmatprep.subr.mxu0 0.0
      %553 = vmatpush2.msra.mxu0 0.0
      %554 = vmatprep.subr.mxu0 0.0
      %555 = vmatpush2.msra.mxu0 0.0
      %556 = vmatprep.subr.mxu0 0.0
      %557 = vmatpush2.msra.mxu0 0.0
      %558 = vmatprep.subr.mxu0 0.0
      %559 = vmatpush2.msra.mxu0 0.0
      %560 = vmatprep.subr.mxu0 0.0
      %561 = vmatpush2.msra.mxu0 0.0
      %562 = vmatprep.subr.mxu0 0.0
      %563 = vmatpush2.msra.mxu0 0.0
      %564 = vmatprep.subr.mxu0 0.0
      %565 = vmatpush2.msra.mxu0 0.0
      %566 = vmatprep.subr.mxu0 0.0
      %567 = vmatpush2.msra.mxu0 0.0
      %568 = vmatprep.mubr.f32.mxu0 0.0
      %569 = vmatmul.mubr.f32.gmra.mxu0 %v502
      %v570 = vpop.f32.mrf.mxu0
      %v571 = vadd.f32 0.0, %v570
      %v572 = vpop.f32.mrf.mxu0
      %573 = vdwg.mxu0
      %v575 = vsel %vm500, %v418, 0
      %577 = vmatprep.subr.mxu0 0.0
      %578 = vmatpush1.msra.mxu0 0.0
      %579 = vmatprep.subr.mxu0 0.0
      %580 = vmatpush1.msra.mxu0 0.0
      %581 = vmatprep.subr.mxu0 0.0
      %582 = vmatpush1.msra.mxu0 0.0
      %583 = vmatprep.subr.mxu0 0.0
      %584 = vmatpush1.msra.mxu0 0.0
      %585 = vmatprep.subr.mxu0 0.0
      %586 = vmatpush1.msra.mxu0 0.0
      %587 = vmatprep.subr.mxu0 0.0
      %588 = vmatpush1.msra.mxu0 0.0
      %589 = vmatprep.subr.mxu0 0.0
      %590 = vmatpush1.msra.mxu0 0.0
      %591 = vmatprep.subr.mxu0 0.0
      %592 = vmatpush1.msra.mxu0 0.0
      %593 = vmatprep.subr.mxu0 0.0
      %594 = vmatpush1.msra.mxu0 0.0
      %595 = vmatprep.subr.mxu0 0.0
      %596 = vmatpush1.msra.mxu0 0.0
      %597 = vmatprep.subr.mxu0 0.0
      %598 = vmatpush1.msra.mxu0 0.0
      %599 = vmatprep.subr.mxu0 0.0
      %600 = vmatpush1.msra.mxu0 0.0
      %601 = vmatprep.subr.mxu0 0.0
      %602 = vmatpush1.msra.mxu0 0.0
      %603 = vmatprep.subr.mxu0 0.0
      %604 = vmatpush1.msra.mxu0 0.0
      %605 = vmatprep.subr.mxu0 0.0
      %606 = vmatpush1.msra.mxu0 %v422
      %607 = vmatprep.subr.mxu0 0.0
      %608 = vmatpush1.msra.mxu0 %v421
      %609 = vmatprep.subr.mxu0 0.0
      %610 = vmatpush2.msra.mxu0 0.0
      %611 = vmatprep.subr.mxu0 0.0
      %612 = vmatpush2.msra.mxu0 0.0
      %613 = vmatprep.subr.mxu0 0.0
      %614 = vmatpush2.msra.mxu0 0.0
      %615 = vmatprep.subr.mxu0 0.0
      %616 = vmatpush2.msra.mxu0 0.0
      %617 = vmatprep.subr.mxu0 0.0
      %618 = vmatpush2.msra.mxu0 0.0
      %619 = vmatprep.subr.mxu0 0.0
      %620 = vmatpush2.msra.mxu0 0.0
      %621 = vmatprep.subr.mxu0 0.0
      %622 = vmatpush2.msra.mxu0 0.0
      %623 = vmatprep.subr.mxu0 0.0
      %624 = vmatpush2.msra.mxu0 0.0
      %625 = vmatprep.subr.mxu0 0.0
      %626 = vmatpush2.msra.mxu0 0.0
      %627 = vmatprep.subr.mxu0 0.0
      %628 = vmatpush2.msra.mxu0 0.0
      %629 = vmatprep.subr.mxu0 0.0
      %630 = vmatpush2.msra.mxu0 0.0
      %631 = vmatprep.subr.mxu0 0.0
      %632 = vmatpush2.msra.mxu0 0.0
      %633 = vmatprep.subr.mxu0 0.0
      %634 = vmatpush2.msra.mxu0 0.0
      %635 = vmatprep.subr.mxu0 0.0
      %636 = vmatpush2.msra.mxu0 0.0
      %637 = vmatprep.subr.mxu0 0.0
      %638 = vmatpush2.msra.mxu0 0.0
      %639 = vmatprep.subr.mxu0 0.0
      %640 = vmatpush2.msra.mxu0 0.0
      %641 = vmatprep.mubr.f32.mxu0 0.0
      %642 = vmatmul.mubr.f32.gmra.mxu0 %v575
      %v643 = vpop.f32.mrf.mxu0
      %v644 = vadd.f32 %v571, %v643
      %v645 = vpop.f32.mrf.mxu0
      %646 = vdwg.mxu0
      %647 = vmatprep.subr.mxu0 0.0
      %648 = vmatpush1.msra.mxu0 0.0
      %649 = vmatprep.subr.mxu0 0.0
      %650 = vmatpush1.msra.mxu0 0.0
      %651 = vmatprep.subr.mxu0 0.0
      %652 = vmatpush1.msra.mxu0 0.0
      %653 = vmatprep.subr.mxu0 0.0
      %654 = vmatpush1.msra.mxu0 0.0
      %655 = vmatprep.subr.mxu0 0.0
      %656 = vmatpush1.msra.mxu0 0.0
      %657 = vmatprep.subr.mxu0 0.0
      %658 = vmatpush1.msra.mxu0 0.0
      %659 = vmatprep.subr.mxu0 0.0
      %660 = vmatpush1.msra.mxu0 0.0
      %661 = vmatprep.subr.mxu0 0.0
      %662 = vmatpush1.msra.mxu0 0.0
      %663 = vmatprep.subr.mxu0 0.0
      %664 = vmatpush1.msra.mxu0 0.0
      %665 = vmatprep.subr.mxu0 0.0
      %666 = vmatpush1.msra.mxu0 0.0
      %667 = vmatprep.subr.mxu0 0.0
      %668 = vmatpush1.msra.mxu0 0.0
      %669 = vmatprep.subr.mxu0 0.0
      %670 = vmatpush1.msra.mxu0 0.0
      %671 = vmatprep.subr.mxu0 0.0
      %672 = vmatpush1.msra.mxu0 0.0
      %673 = vmatprep.subr.mxu0 0.0
      %674 = vmatpush1.msra.mxu0 0.0
      %675 = vmatprep.subr.mxu0 0.0
      %676 = vmatpush1.msra.mxu0 0.0
      %677 = vmatprep.subr.mxu0 0.0
      %678 = vmatpush1.msra.mxu0 %v494
      %679 = vmatprep.subr.mxu0 0.0
      %680 = vmatpush2.msra.mxu0 0.0
      %681 = vmatprep.subr.mxu0 0.0
      %682 = vmatpush2.msra.mxu0 0.0
      %683 = vmatprep.subr.mxu0 0.0
      %684 = vmatpush2.msra.mxu0 0.0
      %685 = vmatprep.subr.mxu0 0.0
      %686 = vmatpush2.msra.mxu0 0.0
      %687 = vmatprep.subr.mxu0 0.0
      %688 = vmatpush2.msra.mxu0 0.0
      %689 = vmatprep.subr.mxu0 0.0
      %690 = vmatpush2.msra.mxu0 0.0
      %691 = vmatprep.subr.mxu0 0.0
      %692 = vmatpush2.msra.mxu0 0.0
      %693 = vmatprep.subr.mxu0 0.0
      %694 = vmatpush2.msra.mxu0 0.0
      %695 = vmatprep.subr.mxu0 0.0
      %696 = vmatpush2.msra.mxu0 0.0
      %697 = vmatprep.subr.mxu0 0.0
      %698 = vmatpush2.msra.mxu0 0.0
      %699 = vmatprep.subr.mxu0 0.0
      %700 = vmatpush2.msra.mxu0 0.0
      %701 = vmatprep.subr.mxu0 0.0
      %702 = vmatpush2.msra.mxu0 0.0
      %703 = vmatprep.subr.mxu0 0.0
      %704 = vmatpush2.msra.mxu0 0.0
      %705 = vmatprep.subr.mxu0 0.0
      %706 = vmatpush2.msra.mxu0 0.0
      %707 = vmatprep.subr.mxu0 0.0
      %708 = vmatpush2.msra.mxu0 0.0
      %709 = vmatprep.subr.mxu0 0.0
      %710 = vmatpush2.msra.mxu0 0.0
      %711 = vmatprep.mubr.f32.mxu0 0.0
      %712 = vmatmul.mubr.f32.gmra.mxu0 %v425
      %v713 = vpop.f32.mrf.mxu0
      %v714 = vadd.f32 0.0, %v713
      %v715 = vpop.f32.mrf.mxu0
      %716 = vdwg.mxu0
      %v717 = vmul.f32 %v714, 2.0
      %v718 = vsub.f32 %v717, %v418
      %s719 = scalar_lea.vmem %s5, 32
      %v720 = vld [vmem:[%s719] sm:$0xff]
      %v721 = vld [vmem:[%s719 + $0x8] sm:$0xff]
      %v723 = vsel %vm500, %v718, 0
      %725 = vmatprep.subr.mxu0 0.0
      %726 = vmatpush1.msra.mxu0 0.0
      %727 = vmatprep.subr.mxu0 0.0
      %728 = vmatpush1.msra.mxu0 0.0
      %729 = vmatprep.subr.mxu0 0.0
      %730 = vmatpush1.msra.mxu0 0.0
      %731 = vmatprep.subr.mxu0 0.0
      %732 = vmatpush1.msra.mxu0 0.0
      %733 = vmatprep.subr.mxu0 0.0
      %734 = vmatpush1.msra.mxu0 0.0
      %735 = vmatprep.subr.mxu0 0.0
      %736 = vmatpush1.msra.mxu0 0.0
      %737 = vmatprep.subr.mxu0 0.0
      %738 = vmatpush1.msra.mxu0 0.0
      %739 = vmatprep.subr.mxu0 0.0
      %740 = vmatpush1.msra.mxu0 0.0
      %741 = vmatprep.subr.mxu0 0.0
      %742 = vmatpush1.msra.mxu0 0.0
      %743 = vmatprep.subr.mxu0 0.0
      %744 = vmatpush1.msra.mxu0 0.0
      %745 = vmatprep.subr.mxu0 0.0
      %746 = vmatpush1.msra.mxu0 0.0
      %747 = vmatprep.subr.mxu0 0.0
      %748 = vmatpush1.msra.mxu0 0.0
      %749 = vmatprep.subr.mxu0 0.0
      %750 = vmatpush1.msra.mxu0 0.0
      %751 = vmatprep.subr.mxu0 0.0
      %752 = vmatpush1.msra.mxu0 0.0
      %753 = vmatprep.subr.mxu0 0.0
      %754 = vmatpush1.msra.mxu0 %v721
      %755 = vmatprep.subr.mxu0 0.0
      %756 = vmatpush1.msra.mxu0 %v720
      %757 = vmatprep.subr.mxu0 0.0
      %758 = vmatpush2.msra.mxu0 0.0
      %759 = vmatprep.subr.mxu0 0.0
      %760 = vmatpush2.msra.mxu0 0.0
      %761 = vmatprep.subr.mxu0 0.0
      %762 = vmatpush2.msra.mxu0 0.0
      %763 = vmatprep.subr.mxu0 0.0
      %764 = vmatpush2.msra.mxu0 0.0
      %765 = vmatprep.subr.mxu0 0.0
      %766 = vmatpush2.msra.mxu0 0.0
      %767 = vmatprep.subr.mxu0 0.0
      %768 = vmatpush2.msra.mxu0 0.0
      %769 = vmatprep.subr.mxu0 0.0
      %770 = vmatpush2.msra.mxu0 0.0
      %771 = vmatprep.subr.mxu0 0.0
      %772 = vmatpush2.msra.mxu0 0.0
      %773 = vmatprep.subr.mxu0 0.0
      %774 = vmatpush2.msra.mxu0 0.0
      %775 = vmatprep.subr.mxu0 0.0
      %776 = vmatpush2.msra.mxu0 0.0
      %777 = vmatprep.subr.mxu0 0.0
      %778 = vmatpush2.msra.mxu0 0.0
      %779 = vmatprep.subr.mxu0 0.0
      %780 = vmatpush2.msra.mxu0 0.0
      %781 = vmatprep.subr.mxu0 0.0
      %782 = vmatpush2.msra.mxu0 0.0
      %783 = vmatprep.subr.mxu0 0.0
      %784 = vmatpush2.msra.mxu0 0.0
      %785 = vmatprep.subr.mxu0 0.0
      %786 = vmatpush2.msra.mxu0 0.0
      %787 = vmatprep.subr.mxu0 0.0
      %788 = vmatpush2.msra.mxu0 0.0
      %789 = vmatprep.mubr.f32.mxu0 0.0
      %790 = vmatmul.mubr.f32.gmra.mxu0 %v723
      %v791 = vpop.f32.mrf.mxu0
      %v792 = vadd.f32 0.0, %v791
      %v793 = vpop.f32.mrf.mxu0
      %794 = vdwg.mxu0
      %v795 = vadd.f32 %v644, %v792
      %v796 = vld [vmem:[%s6] sm:$0xff]
      %v797 = vld [vmem:[%s6 + $0x8] sm:$0xff]
      %v798 = vld [vmem:[%s6 + $0x10] sm:$0xff]
      %v799 = vld [vmem:[%s6 + $0x18] sm:$0xff]
      %vm800 = vcmask 261120
      %v802 = vsel %vm800, %v420, 0
      %804 = vmatprep.subr.mxu0 0.0
      %805 = vmatpush1.msra.mxu0 0.0
      %806 = vmatprep.subr.mxu0 0.0
      %807 = vmatpush1.msra.mxu0 0.0
      %808 = vmatprep.subr.mxu0 0.0
      %809 = vmatpush1.msra.mxu0 0.0
      %810 = vmatprep.subr.mxu0 0.0
      %811 = vmatpush1.msra.mxu0 0.0
      %812 = vmatprep.subr.mxu0 0.0
      %813 = vmatpush1.msra.mxu0 0.0
      %814 = vmatprep.subr.mxu0 0.0
      %815 = vmatpush1.msra.mxu0 0.0
      %816 = vmatprep.subr.mxu0 0.0
      %817 = vmatpush1.msra.mxu0 0.0
      %818 = vmatprep.subr.mxu0 0.0
      %819 = vmatpush1.msra.mxu0 0.0
      %820 = vmatprep.subr.mxu0 0.0
      %821 = vmatpush1.msra.mxu0 0.0
      %822 = vmatprep.subr.mxu0 0.0
      %823 = vmatpush1.msra.mxu0 0.0
      %824 = vmatprep.subr.mxu0 0.0
      %825 = vmatpush1.msra.mxu0 0.0
      %826 = vmatprep.subr.mxu0 0.0
      %827 = vmatpush1.msra.mxu0 0.0
      %828 = vmatprep.subr.mxu0 0.0
      %829 = vmatpush1.msra.mxu0 %v799
      %830 = vmatprep.subr.mxu0 0.0
      %831 = vmatpush1.msra.mxu0 %v798
      %832 = vmatprep.subr.mxu0 0.0
      %833 = vmatpush1.msra.mxu0 %v797
      %834 = vmatprep.subr.mxu0 0.0
      %835 = vmatpush1.msra.mxu0 %v796
      %836 = vmatprep.subr.mxu0 0.0
      %837 = vmatpush2.msra.mxu0 0.0
      %838 = vmatprep.subr.mxu0 0.0
      %839 = vmatpush2.msra.mxu0 0.0
      %840 = vmatprep.subr.mxu0 0.0
      %841 = vmatpush2.msra.mxu0 0.0
      %842 = vmatprep.subr.mxu0 0.0
      %843 = vmatpush2.msra.mxu0 0.0
      %844 = vmatprep.subr.mxu0 0.0
      %845 = vmatpush2.msra.mxu0 0.0
      %846 = vmatprep.subr.mxu0 0.0
      %847 = vmatpush2.msra.mxu0 0.0
      %848 = vmatprep.subr.mxu0 0.0
      %849 = vmatpush2.msra.mxu0 0.0
      %850 = vmatprep.subr.mxu0 0.0
      %851 = vmatpush2.msra.mxu0 0.0
      %852 = vmatprep.subr.mxu0 0.0
      %853 = vmatpush2.msra.mxu0 0.0
      %854 = vmatprep.subr.mxu0 0.0
      %855 = vmatpush2.msra.mxu0 0.0
      %856 = vmatprep.subr.mxu0 0.0
      %857 = vmatpush2.msra.mxu0 0.0
      %858 = vmatprep.subr.mxu0 0.0
      %859 = vmatpush2.msra.mxu0 0.0
      %860 = vmatprep.subr.mxu0 0.0
      %861 = vmatpush2.msra.mxu0 0.0
      %862 = vmatprep.subr.mxu0 0.0
      %863 = vmatpush2.msra.mxu0 0.0
      %864 = vmatprep.subr.mxu0 0.0
      %865 = vmatpush2.msra.mxu0 0.0
      %866 = vmatprep.subr.mxu0 0.0
      %867 = vmatpush2.msra.mxu0 0.0
      %868 = vmatprep.mubr.f32.mxu0 0.0
      %869 = vmatmul.mubr.f32.gmra.mxu0 %v802
      %v870 = vpop.f32.mrf.mxu0
      %v871 = vadd.f32 0.0, %v870
      %v872 = vpop.f32.mrf.mxu0
      %873 = vdwg.mxu0
      %v874 = vadd.f32 %v795, %v871
      %875 = vmatprep.subr.mxu0 0.0
      %876 = vmatpush1.msra.mxu0 0.0
      %877 = vmatprep.subr.mxu0 0.0
      %878 = vmatpush1.msra.mxu0 0.0
      %879 = vmatprep.subr.mxu0 0.0
      %880 = vmatpush1.msra.mxu0 0.0
      %881 = vmatprep.subr.mxu0 0.0
      %882 = vmatpush1.msra.mxu0 0.0
      %883 = vmatprep.subr.mxu0 0.0
      %884 = vmatpush1.msra.mxu0 0.0
      %885 = vmatprep.subr.mxu0 0.0
      %886 = vmatpush1.msra.mxu0 0.0
      %887 = vmatprep.subr.mxu0 0.0
      %888 = vmatpush1.msra.mxu0 0.0
      %889 = vmatprep.subr.mxu0 0.0
      %890 = vmatpush1.msra.mxu0 0.0
      %891 = vmatprep.subr.mxu0 0.0
      %892 = vmatpush1.msra.mxu0 0.0
      %893 = vmatprep.subr.mxu0 0.0
      %894 = vmatpush1.msra.mxu0 0.0
      %895 = vmatprep.subr.mxu0 0.0
      %896 = vmatpush1.msra.mxu0 0.0
      %897 = vmatprep.subr.mxu0 0.0
      %898 = vmatpush1.msra.mxu0 0.0
      %899 = vmatprep.subr.mxu0 0.0
      %900 = vmatpush1.msra.mxu0 0.0
      %901 = vmatprep.subr.mxu0 0.0
      %902 = vmatpush1.msra.mxu0 0.0
      %903 = vmatprep.subr.mxu0 0.0
      %904 = vmatpush1.msra.mxu0 0.0
      %905 = vmatprep.subr.mxu0 0.0
      %906 = vmatpush1.msra.mxu0 %v420
      %907 = vmatprep.subr.mxu0 0.0
      %908 = vmatpush2.msra.mxu0 0.0
      %909 = vmatprep.subr.mxu0 0.0
      %910 = vmatpush2.msra.mxu0 0.0
      %911 = vmatprep.subr.mxu0 0.0
      %912 = vmatpush2.msra.mxu0 0.0
      %913 = vmatprep.subr.mxu0 0.0
      %914 = vmatpush2.msra.mxu0 0.0
      %915 = vmatprep.subr.mxu0 0.0
      %916 = vmatpush2.msra.mxu0 0.0
      %917 = vmatprep.subr.mxu0 0.0
      %918 = vmatpush2.msra.mxu0 0.0
      %919 = vmatprep.subr.mxu0 0.0
      %920 = vmatpush2.msra.mxu0 0.0
      %921 = vmatprep.subr.mxu0 0.0
      %922 = vmatpush2.msra.mxu0 0.0
      %923 = vmatprep.subr.mxu0 0.0
      %924 = vmatpush2.msra.mxu0 0.0
      %925 = vmatprep.subr.mxu0 0.0
      %926 = vmatpush2.msra.mxu0 0.0
      %927 = vmatprep.subr.mxu0 0.0
      %928 = vmatpush2.msra.mxu0 0.0
      %929 = vmatprep.subr.mxu0 0.0
      %930 = vmatpush2.msra.mxu0 0.0
      %931 = vmatprep.subr.mxu0 0.0
      %932 = vmatpush2.msra.mxu0 0.0
      %933 = vmatprep.subr.mxu0 0.0
      %934 = vmatpush2.msra.mxu0 0.0
      %935 = vmatprep.subr.mxu0 0.0
      %936 = vmatpush2.msra.mxu0 0.0
      %937 = vmatprep.subr.mxu0 0.0
      %938 = vmatpush2.msra.mxu0 0.0
      %939 = vmatprep.mubr.f32.mxu0 0.0
      %940 = vmatmul.mubr.f32.gmra.mxu0 %v425
      %v941 = vpop.f32.mrf.mxu0
      %v942 = vadd.f32 0.0, %v941
      %v943 = vpop.f32.mrf.mxu0
      %944 = vdwg.mxu0
      %s945 = scalar_lea.vmem %s6, 32
      %v946 = vld [vmem:[%s945] sm:$0xff]
      %v947 = vld [vmem:[%s945 + $0x8] sm:$0xff]
      %v948 = vld [vmem:[%s945 + $0x10] sm:$0xff]
      %v949 = vld [vmem:[%s945 + $0x18] sm:$0xff]
      %v951 = vsel %vm800, %v942, 0
      %953 = vmatprep.subr.mxu0 0.0
      %954 = vmatpush1.msra.mxu0 0.0
      %955 = vmatprep.subr.mxu0 0.0
      %956 = vmatpush1.msra.mxu0 0.0
      %957 = vmatprep.subr.mxu0 0.0
      %958 = vmatpush1.msra.mxu0 0.0
      %959 = vmatprep.subr.mxu0 0.0
      %960 = vmatpush1.msra.mxu0 0.0
      %961 = vmatprep.subr.mxu0 0.0
      %962 = vmatpush1.msra.mxu0 0.0
      %963 = vmatprep.subr.mxu0 0.0
      %964 = vmatpush1.msra.mxu0 0.0
      %965 = vmatprep.subr.mxu0 0.0
      %966 = vmatpush1.msra.mxu0 0.0
      %967 = vmatprep.subr.mxu0 0.0
      %968 = vmatpush1.msra.mxu0 0.0
      %969 = vmatprep.subr.mxu0 0.0
      %970 = vmatpush1.msra.mxu0 0.0
      %971 = vmatprep.subr.mxu0 0.0
      %972 = vmatpush1.msra.mxu0 0.0
      %973 = vmatprep.subr.mxu0 0.0
      %974 = vmatpush1.msra.mxu0 0.0
      %975 = vmatprep.subr.mxu0 0.0
      %976 = vmatpush1.msra.mxu0 0.0
      %977 = vmatprep.subr.mxu0 0.0
      %978 = vmatpush1.msra.mxu0 %v949
      %979 = vmatprep.subr.mxu0 0.0
      %980 = vmatpush1.msra.mxu0 %v948
      %981 = vmatprep.subr.mxu0 0.0
      %982 = vmatpush1.msra.mxu0 %v947
      %983 = vmatprep.subr.mxu0 0.0
      %984 = vmatpush1.msra.mxu0 %v946
      %985 = vmatprep.subr.mxu0 0.0
      %986 = vmatpush2.msra.mxu0 0.0
      %987 = vmatprep.subr.mxu0 0.0
      %988 = vmatpush2.msra.mxu0 0.0
      %989 = vmatprep.subr.mxu0 0.0
      %990 = vmatpush2.msra.mxu0 0.0
      %991 = vmatprep.subr.mxu0 0.0
      %992 = vmatpush2.msra.mxu0 0.0
      %993 = vmatprep.subr.mxu0 0.0
      %994 = vmatpush2.msra.mxu0 0.0
      %995 = vmatprep.subr.mxu0 0.0
      %996 = vmatpush2.msra.mxu0 0.0
      %997 = vmatprep.subr.mxu0 0.0
      %998 = vmatpush2.msra.mxu0 0.0
      %999 = vmatprep.subr.mxu0 0.0
      %1000 = vmatpush2.msra.mxu0 0.0
      %1001 = vmatprep.subr.mxu0 0.0
      %1002 = vmatpush2.msra.mxu0 0.0
      %1003 = vmatprep.subr.mxu0 0.0
      %1004 = vmatpush2.msra.mxu0 0.0
      %1005 = vmatprep.subr.mxu0 0.0
      %1006 = vmatpush2.msra.mxu0 0.0
      %1007 = vmatprep.subr.mxu0 0.0
      %1008 = vmatpush2.msra.mxu0 0.0
      %1009 = vmatprep.subr.mxu0 0.0
      %1010 = vmatpush2.msra.mxu0 0.0
      %1011 = vmatprep.subr.mxu0 0.0
      %1012 = vmatpush2.msra.mxu0 0.0
      %1013 = vmatprep.subr.mxu0 0.0
      %1014 = vmatpush2.msra.mxu0 0.0
      %1015 = vmatprep.subr.mxu0 0.0
      %1016 = vmatpush2.msra.mxu0 0.0
      %1017 = vmatprep.mubr.f32.mxu0 0.0
      %1018 = vmatmul.mubr.f32.gmra.mxu0 %v951
      %v1019 = vpop.f32.mrf.mxu0
      %v1020 = vadd.f32 0.0, %v1019
      %v1021 = vpop.f32.mrf.mxu0
      %1022 = vdwg.mxu0
      %v1023 = vadd.f32 %v874, %v1020
      %1024 = vmatprep.subr.mxu0 0.0
      %1025 = vmatpush1.msra.mxu0 0.0
      %1026 = vmatprep.subr.mxu0 0.0
      %1027 = vmatpush1.msra.mxu0 0.0
      %1028 = vmatprep.subr.mxu0 0.0
      %1029 = vmatpush1.msra.mxu0 0.0
      %1030 = vmatprep.subr.mxu0 0.0
      %1031 = vmatpush1.msra.mxu0 0.0
      %1032 = vmatprep.subr.mxu0 0.0
      %1033 = vmatpush1.msra.mxu0 0.0
      %1034 = vmatprep.subr.mxu0 0.0
      %1035 = vmatpush1.msra.mxu0 0.0
      %1036 = vmatprep.subr.mxu0 0.0
      %1037 = vmatpush1.msra.mxu0 0.0
      %1038 = vmatprep.subr.mxu0 0.0
      %1039 = vmatpush1.msra.mxu0 0.0
      %1040 = vmatprep.subr.mxu0 0.0
      %1041 = vmatpush1.msra.mxu0 0.0
      %1042 = vmatprep.subr.mxu0 0.0
      %1043 = vmatpush1.msra.mxu0 0.0
      %1044 = vmatprep.subr.mxu0 0.0
      %1045 = vmatpush1.msra.mxu0 0.0
      %1046 = vmatprep.subr.mxu0 0.0
      %1047 = vmatpush1.msra.mxu0 0.0
      %1048 = vmatprep.subr.mxu0 0.0
      %1049 = vmatpush1.msra.mxu0 0.0
      %1050 = vmatprep.subr.mxu0 0.0
      %1051 = vmatpush1.msra.mxu0 0.0
      %1052 = vmatprep.subr.mxu0 0.0
      %1053 = vmatpush1.msra.mxu0 0.0
      %1054 = vmatprep.subr.mxu0 0.0
      %1055 = vmatpush1.msra.mxu0 %v942
      %1056 = vmatprep.subr.mxu0 0.0
      %1057 = vmatpush2.msra.mxu0 0.0
      %1058 = vmatprep.subr.mxu0 0.0
      %1059 = vmatpush2.msra.mxu0 0.0
      %1060 = vmatprep.subr.mxu0 0.0
      %1061 = vmatpush2.msra.mxu0 0.0
      %1062 = vmatprep.subr.mxu0 0.0
      %1063 = vmatpush2.msra.mxu0 0.0
      %1064 = vmatprep.subr.mxu0 0.0
      %1065 = vmatpush2.msra.mxu0 0.0
      %1066 = vmatprep.subr.mxu0 0.0
      %1067 = vmatpush2.msra.mxu0 0.0
      %1068 = vmatprep.subr.mxu0 0.0
      %1069 = vmatpush2.msra.mxu0 0.0
      %1070 = vmatprep.subr.mxu0 0.0
      %1071 = vmatpush2.msra.mxu0 0.0
      %1072 = vmatprep.subr.mxu0 0.0
      %1073 = vmatpush2.msra.mxu0 0.0
      %1074 = vmatprep.subr.mxu0 0.0
      %1075 = vmatpush2.msra.mxu0 0.0
      %1076 = vmatprep.subr.mxu0 0.0
      %1077 = vmatpush2.msra.mxu0 0.0
      %1078 = vmatprep.subr.mxu0 0.0
      %1079 = vmatpush2.msra.mxu0 0.0
      %1080 = vmatprep.subr.mxu0 0.0
      %1081 = vmatpush2.msra.mxu0 0.0
      %1082 = vmatprep.subr.mxu0 0.0
      %1083 = vmatpush2.msra.mxu0 0.0
      %1084 = vmatprep.subr.mxu0 0.0
      %1085 = vmatpush2.msra.mxu0 0.0
      %1086 = vmatprep.subr.mxu0 0.0
      %1087 = vmatpush2.msra.mxu0 0.0
      %1088 = vmatprep.mubr.f32.mxu0 0.0
      %1089 = vmatmul.mubr.f32.gmra.mxu0 %v425
      %v1090 = vpop.f32.mrf.mxu0
      %v1091 = vadd.f32 0.0, %v1090
      %v1092 = vpop.f32.mrf.mxu0
      %1093 = vdwg.mxu0
      %v1094 = vmul.f32 %v1091, 2.0
      %v1095 = vsub.f32 %v1094, %v420
      %s1096 = scalar_lea.vmem %s6, 64
      %v1097 = vld [vmem:[%s1096] sm:$0xff]
      %v1098 = vld [vmem:[%s1096 + $0x8] sm:$0xff]
      %v1099 = vld [vmem:[%s1096 + $0x10] sm:$0xff]
      %v1100 = vld [vmem:[%s1096 + $0x18] sm:$0xff]
      %v1102 = vsel %vm800, %v1095, 0
      %1104 = vmatprep.subr.mxu0 0.0
      %1105 = vmatpush1.msra.mxu0 0.0
      %1106 = vmatprep.subr.mxu0 0.0
      %1107 = vmatpush1.msra.mxu0 0.0
      %1108 = vmatprep.subr.mxu0 0.0
      %1109 = vmatpush1.msra.mxu0 0.0
      %1110 = vmatprep.subr.mxu0 0.0
      %1111 = vmatpush1.msra.mxu0 0.0
      %1112 = vmatprep.subr.mxu0 0.0
      %1113 = vmatpush1.msra.mxu0 0.0
      %1114 = vmatprep.subr.mxu0 0.0
      %1115 = vmatpush1.msra.mxu0 0.0
      %1116 = vmatprep.subr.mxu0 0.0
      %1117 = vmatpush1.msra.mxu0 0.0
      %1118 = vmatprep.subr.mxu0 0.0
      %1119 = vmatpush1.msra.mxu0 0.0
      %1120 = vmatprep.subr.mxu0 0.0
      %1121 = vmatpush1.msra.mxu0 0.0
      %1122 = vmatprep.subr.mxu0 0.0
      %1123 = vmatpush1.msra.mxu0 0.0
      %1124 = vmatprep.subr.mxu0 0.0
      %1125 = vmatpush1.msra.mxu0 0.0
      %1126 = vmatprep.subr.mxu0 0.0
      %1127 = vmatpush1.msra.mxu0 0.0
      %1128 = vmatprep.subr.mxu0 0.0
      %1129 = vmatpush1.msra.mxu0 %v1100
      %1130 = vmatprep.subr.mxu0 0.0
      %1131 = vmatpush1.msra.mxu0 %v1099
      %1132 = vmatprep.subr.mxu0 0.0
      %1133 = vmatpush1.msra.mxu0 %v1098
      %1134 = vmatprep.subr.mxu0 0.0
      %1135 = vmatpush1.msra.mxu0 %v1097
      %1136 = vmatprep.subr.mxu0 0.0
      %1137 = vmatpush2.msra.mxu0 0.0
      %1138 = vmatprep.subr.mxu0 0.0
      %1139 = vmatpush2.msra.mxu0 0.0
      %1140 = vmatprep.subr.mxu0 0.0
      %1141 = vmatpush2.msra.mxu0 0.0
      %1142 = vmatprep.subr.mxu0 0.0
      %1143 = vmatpush2.msra.mxu0 0.0
      %1144 = vmatprep.subr.mxu0 0.0
      %1145 = vmatpush2.msra.mxu0 0.0
      %1146 = vmatprep.subr.mxu0 0.0
      %1147 = vmatpush2.msra.mxu0 0.0
      %1148 = vmatprep.subr.mxu0 0.0
      %1149 = vmatpush2.msra.mxu0 0.0
      %1150 = vmatprep.subr.mxu0 0.0
      %1151 = vmatpush2.msra.mxu0 0.0
      %1152 = vmatprep.subr.mxu0 0.0
      %1153 = vmatpush2.msra.mxu0 0.0
      %1154 = vmatprep.subr.mxu0 0.0
      %1155 = vmatpush2.msra.mxu0 0.0
      %1156 = vmatprep.subr.mxu0 0.0
      %1157 = vmatpush2.msra.mxu0 0.0
      %1158 = vmatprep.subr.mxu0 0.0
      %1159 = vmatpush2.msra.mxu0 0.0
      %1160 = vmatprep.subr.mxu0 0.0
      %1161 = vmatpush2.msra.mxu0 0.0
      %1162 = vmatprep.subr.mxu0 0.0
      %1163 = vmatpush2.msra.mxu0 0.0
      %1164 = vmatprep.subr.mxu0 0.0
      %1165 = vmatpush2.msra.mxu0 0.0
      %1166 = vmatprep.subr.mxu0 0.0
      %1167 = vmatpush2.msra.mxu0 0.0
      %1168 = vmatprep.mubr.f32.mxu0 0.0
      %1169 = vmatmul.mubr.f32.gmra.mxu0 %v1102
      %v1170 = vpop.f32.mrf.mxu0
      %v1171 = vadd.f32 0.0, %v1170
      %v1172 = vpop.f32.mrf.mxu0
      %1173 = vdwg.mxu0
      %v1174 = vadd.f32 %v1023, %v1171
      %v1175 = vld [vmem:[%s7] sm:$0x1]
      %v1177 = vlaneseq
      %v1178 = vshrl.u32 %v1177, 7
      %v1179 = vsub.s32 0, %v1178
      %v1180 = vrot.slane %v1175, %v1179
      %v1182 = vadd.f32 %v1174, %v1180
      %v1183 = vxor.u32 %v1182, 2147483648
      %v1184 = vmul.f32 %v1183, 1.442695
      %v1185 = vpow.pop %v1184
      %v1186 = vadd.f32 %v1185, 1.0
      %v1187 = vrcp.pop %v1186
      %v1188 = vmul.f32 1.0, %v1187
      %v1189 = vld [vmem:[%s8] sm:$0xff]
      %v1190 = vld [vmem:[%s8 + $0x8] sm:$0xff]
      %v1192 = vsel %vm423, %v417, 0
      %1194 = vmatprep.subr.mxu0 0.0
      %1195 = vmatpush1.msra.mxu0 0.0
      %1196 = vmatprep.subr.mxu0 0.0
      %1197 = vmatpush1.msra.mxu0 0.0
      %1198 = vmatprep.subr.mxu0 0.0
      %1199 = vmatpush1.msra.mxu0 0.0
      %1200 = vmatprep.subr.mxu0 0.0
      %1201 = vmatpush1.msra.mxu0 0.0
      %1202 = vmatprep.subr.mxu0 0.0
      %1203 = vmatpush1.msra.mxu0 0.0
      %1204 = vmatprep.subr.mxu0 0.0
      %1205 = vmatpush1.msra.mxu0 0.0
      %1206 = vmatprep.subr.mxu0 0.0
      %1207 = vmatpush1.msra.mxu0 0.0
      %1208 = vmatprep.subr.mxu0 0.0
      %1209 = vmatpush1.msra.mxu0 0.0
      %1210 = vmatprep.subr.mxu0 0.0
      %1211 = vmatpush1.msra.mxu0 0.0
      %1212 = vmatprep.subr.mxu0 0.0
      %1213 = vmatpush1.msra.mxu0 0.0
      %1214 = vmatprep.subr.mxu0 0.0
      %1215 = vmatpush1.msra.mxu0 0.0
      %1216 = vmatprep.subr.mxu0 0.0
      %1217 = vmatpush1.msra.mxu0 0.0
      %1218 = vmatprep.subr.mxu0 0.0
      %1219 = vmatpush1.msra.mxu0 0.0
      %1220 = vmatprep.subr.mxu0 0.0
      %1221 = vmatpush1.msra.mxu0 0.0
      %1222 = vmatprep.subr.mxu0 0.0
      %1223 = vmatpush1.msra.mxu0 0.0
      %1224 = vmatprep.subr.mxu0 0.0
      %1225 = vmatpush1.msra.mxu0 %v418
      %1226 = vmatprep.subr.mxu0 0.0
      %1227 = vmatpush2.msra.mxu0 0.0
      %1228 = vmatprep.subr.mxu0 0.0
      %1229 = vmatpush2.msra.mxu0 0.0
      %1230 = vmatprep.subr.mxu0 0.0
      %1231 = vmatpush2.msra.mxu0 0.0
      %1232 = vmatprep.subr.mxu0 0.0
      %1233 = vmatpush2.msra.mxu0 0.0
      %1234 = vmatprep.subr.mxu0 0.0
      %1235 = vmatpush2.msra.mxu0 0.0
      %1236 = vmatprep.subr.mxu0 0.0
      %1237 = vmatpush2.msra.mxu0 0.0
      %1238 = vmatprep.subr.mxu0 0.0
      %1239 = vmatpush2.msra.mxu0 0.0
      %1240 = vmatprep.subr.mxu0 0.0
      %1241 = vmatpush2.msra.mxu0 0.0
      %1242 = vmatprep.subr.mxu0 0.0
      %1243 = vmatpush2.msra.mxu0 0.0
      %1244 = vmatprep.subr.mxu0 0.0
      %1245 = vmatpush2.msra.mxu0 0.0
      %1246 = vmatprep.subr.mxu0 0.0
      %1247 = vmatpush2.msra.mxu0 0.0
      %1248 = vmatprep.subr.mxu0 0.0
      %1249 = vmatpush2.msra.mxu0 0.0
      %1250 = vmatprep.subr.mxu0 0.0
      %1251 = vmatpush2.msra.mxu0 0.0
      %1252 = vmatprep.subr.mxu0 0.0
      %1253 = vmatpush2.msra.mxu0 0.0
      %1254 = vmatprep.subr.mxu0 0.0
      %1255 = vmatpush2.msra.mxu0 0.0
      %1256 = vmatprep.subr.mxu0 0.0
      %1257 = vmatpush2.msra.mxu0 0.0
      %1258 = vmatprep.mubr.f32.mxu0 0.0
      %1259 = vmatmul.mubr.f32.gmra.mxu0 %v1192
      %v1260 = vpop.f32.mrf.mxu0
      %v1261 = vadd.f32 0.0, %v1260
      %v1262 = vpop.f32.mrf.mxu0
      %1263 = vdwg.mxu0
      %s1264 = scalar_lea.vmem %s8, 16
      %v1265 = vld [vmem:[%s1264] sm:$0xff]
      %v1266 = vld [vmem:[%s1264 + $0x8] sm:$0xff]
      %v1268 = vsel %vm500, %v1261, 0
      %1270 = vmatprep.subr.mxu0 0.0
      %1271 = vmatpush1.msra.mxu0 0.0
      %1272 = vmatprep.subr.mxu0 0.0
      %1273 = vmatpush1.msra.mxu0 0.0
      %1274 = vmatprep.subr.mxu0 0.0
      %1275 = vmatpush1.msra.mxu0 0.0
      %1276 = vmatprep.subr.mxu0 0.0
      %1277 = vmatpush1.msra.mxu0 0.0
      %1278 = vmatprep.subr.mxu0 0.0
      %1279 = vmatpush1.msra.mxu0 0.0
      %1280 = vmatprep.subr.mxu0 0.0
      %1281 = vmatpush1.msra.mxu0 0.0
      %1282 = vmatprep.subr.mxu0 0.0
      %1283 = vmatpush1.msra.mxu0 0.0
      %1284 = vmatprep.subr.mxu0 0.0
      %1285 = vmatpush1.msra.mxu0 0.0
      %1286 = vmatprep.subr.mxu0 0.0
      %1287 = vmatpush1.msra.mxu0 0.0
      %1288 = vmatprep.subr.mxu0 0.0
      %1289 = vmatpush1.msra.mxu0 0.0
      %1290 = vmatprep.subr.mxu0 0.0
      %1291 = vmatpush1.msra.mxu0 0.0
      %1292 = vmatprep.subr.mxu0 0.0
      %1293 = vmatpush1.msra.mxu0 0.0
      %1294 = vmatprep.subr.mxu0 0.0
      %1295 = vmatpush1.msra.mxu0 0.0
      %1296 = vmatprep.subr.mxu0 0.0
      %1297 = vmatpush1.msra.mxu0 0.0
      %1298 = vmatprep.subr.mxu0 0.0
      %1299 = vmatpush1.msra.mxu0 %v1266
      %1300 = vmatprep.subr.mxu0 0.0
      %1301 = vmatpush1.msra.mxu0 %v1265
      %1302 = vmatprep.subr.mxu0 0.0
      %1303 = vmatpush2.msra.mxu0 0.0
      %1304 = vmatprep.subr.mxu0 0.0
      %1305 = vmatpush2.msra.mxu0 0.0
      %1306 = vmatprep.subr.mxu0 0.0
      %1307 = vmatpush2.msra.mxu0 0.0
      %1308 = vmatprep.subr.mxu0 0.0
      %1309 = vmatpush2.msra.mxu0 0.0
      %1310 = vmatprep.subr.mxu0 0.0
      %1311 = vmatpush2.msra.mxu0 0.0
      %1312 = vmatprep.subr.mxu0 0.0
      %1313 = vmatpush2.msra.mxu0 0.0
      %1314 = vmatprep.subr.mxu0 0.0
      %1315 = vmatpush2.msra.mxu0 0.0
      %1316 = vmatprep.subr.mxu0 0.0
      %1317 = vmatpush2.msra.mxu0 0.0
      %1318 = vmatprep.subr.mxu0 0.0
      %1319 = vmatpush2.msra.mxu0 0.0
      %1320 = vmatprep.subr.mxu0 0.0
      %1321 = vmatpush2.msra.mxu0 0.0
      %1322 = vmatprep.subr.mxu0 0.0
      %1323 = vmatpush2.msra.mxu0 0.0
      %1324 = vmatprep.subr.mxu0 0.0
      %1325 = vmatpush2.msra.mxu0 0.0
      %1326 = vmatprep.subr.mxu0 0.0
      %1327 = vmatpush2.msra.mxu0 0.0
      %1328 = vmatprep.subr.mxu0 0.0
      %1329 = vmatpush2.msra.mxu0 0.0
      %1330 = vmatprep.subr.mxu0 0.0
      %1331 = vmatpush2.msra.mxu0 0.0
      %1332 = vmatprep.subr.mxu0 0.0
      %1333 = vmatpush2.msra.mxu0 0.0
      %1334 = vmatprep.mubr.f32.mxu0 0.0
      %1335 = vmatmul.mubr.f32.gmra.mxu0 %v1268
      %v1336 = vpop.f32.mrf.mxu0
      %v1337 = vadd.f32 0.0, %v1336
      %v1338 = vpop.f32.mrf.mxu0
      %1339 = vdwg.mxu0
      %1340 = vmatprep.subr.mxu0 0.0
      %1341 = vmatpush1.msra.mxu0 0.0
      %1342 = vmatprep.subr.mxu0 0.0
      %1343 = vmatpush1.msra.mxu0 0.0
      %1344 = vmatprep.subr.mxu0 0.0
      %1345 = vmatpush1.msra.mxu0 0.0
      %1346 = vmatprep.subr.mxu0 0.0
      %1347 = vmatpush1.msra.mxu0 0.0
      %1348 = vmatprep.subr.mxu0 0.0
      %1349 = vmatpush1.msra.mxu0 0.0
      %1350 = vmatprep.subr.mxu0 0.0
      %1351 = vmatpush1.msra.mxu0 0.0
      %1352 = vmatprep.subr.mxu0 0.0
      %1353 = vmatpush1.msra.mxu0 0.0
      %1354 = vmatprep.subr.mxu0 0.0
      %1355 = vmatpush1.msra.mxu0 0.0
      %1356 = vmatprep.subr.mxu0 0.0
      %1357 = vmatpush1.msra.mxu0 0.0
      %1358 = vmatprep.subr.mxu0 0.0
      %1359 = vmatpush1.msra.mxu0 0.0
      %1360 = vmatprep.subr.mxu0 0.0
      %1361 = vmatpush1.msra.mxu0 0.0
      %1362 = vmatprep.subr.mxu0 0.0
      %1363 = vmatpush1.msra.mxu0 0.0
      %1364 = vmatprep.subr.mxu0 0.0
      %1365 = vmatpush1.msra.mxu0 0.0
      %1366 = vmatprep.subr.mxu0 0.0
      %1367 = vmatpush1.msra.mxu0 0.0
      %1368 = vmatprep.subr.mxu0 0.0
      %1369 = vmatpush1.msra.mxu0 %v1190
      %1370 = vmatprep.subr.mxu0 0.0
      %1371 = vmatpush1.msra.mxu0 %v1189
      %1372 = vmatprep.subr.mxu0 0.0
      %1373 = vmatpush2.msra.mxu0 0.0
      %1374 = vmatprep.subr.mxu0 0.0
      %1375 = vmatpush2.msra.mxu0 0.0
      %1376 = vmatprep.subr.mxu0 0.0
      %1377 = vmatpush2.msra.mxu0 0.0
      %1378 = vmatprep.subr.mxu0 0.0
      %1379 = vmatpush2.msra.mxu0 0.0
      %1380 = vmatprep.subr.mxu0 0.0
      %1381 = vmatpush2.msra.mxu0 0.0
      %1382 = vmatprep.subr.mxu0 0.0
      %1383 = vmatpush2.msra.mxu0 0.0
      %1384 = vmatprep.subr.mxu0 0.0
      %1385 = vmatpush2.msra.mxu0 0.0
      %1386 = vmatprep.subr.mxu0 0.0
      %1387 = vmatpush2.msra.mxu0 0.0
      %1388 = vmatprep.subr.mxu0 0.0
      %1389 = vmatpush2.msra.mxu0 0.0
      %1390 = vmatprep.subr.mxu0 0.0
      %1391 = vmatpush2.msra.mxu0 0.0
      %1392 = vmatprep.subr.mxu0 0.0
      %1393 = vmatpush2.msra.mxu0 0.0
      %1394 = vmatprep.subr.mxu0 0.0
      %1395 = vmatpush2.msra.mxu0 0.0
      %1396 = vmatprep.subr.mxu0 0.0
      %1397 = vmatpush2.msra.mxu0 0.0
      %1398 = vmatprep.subr.mxu0 0.0
      %1399 = vmatpush2.msra.mxu0 0.0
      %1400 = vmatprep.subr.mxu0 0.0
      %1401 = vmatpush2.msra.mxu0 0.0
      %1402 = vmatprep.subr.mxu0 0.0
      %1403 = vmatpush2.msra.mxu0 0.0
      %1404 = vmatprep.mubr.f32.mxu0 0.0
      %1405 = vmatmul.mubr.f32.gmra.mxu0 %v575
      %v1406 = vpop.f32.mrf.mxu0
      %v1407 = vadd.f32 %v1337, %v1406
      %v1408 = vpop.f32.mrf.mxu0
      %1409 = vdwg.mxu0
      %1410 = vmatprep.subr.mxu0 0.0
      %1411 = vmatpush1.msra.mxu0 0.0
      %1412 = vmatprep.subr.mxu0 0.0
      %1413 = vmatpush1.msra.mxu0 0.0
      %1414 = vmatprep.subr.mxu0 0.0
      %1415 = vmatpush1.msra.mxu0 0.0
      %1416 = vmatprep.subr.mxu0 0.0
      %1417 = vmatpush1.msra.mxu0 0.0
      %1418 = vmatprep.subr.mxu0 0.0
      %1419 = vmatpush1.msra.mxu0 0.0
      %1420 = vmatprep.subr.mxu0 0.0
      %1421 = vmatpush1.msra.mxu0 0.0
      %1422 = vmatprep.subr.mxu0 0.0
      %1423 = vmatpush1.msra.mxu0 0.0
      %1424 = vmatprep.subr.mxu0 0.0
      %1425 = vmatpush1.msra.mxu0 0.0
      %1426 = vmatprep.subr.mxu0 0.0
      %1427 = vmatpush1.msra.mxu0 0.0
      %1428 = vmatprep.subr.mxu0 0.0
      %1429 = vmatpush1.msra.mxu0 0.0
      %1430 = vmatprep.subr.mxu0 0.0
      %1431 = vmatpush1.msra.mxu0 0.0
      %1432 = vmatprep.subr.mxu0 0.0
      %1433 = vmatpush1.msra.mxu0 0.0
      %1434 = vmatprep.subr.mxu0 0.0
      %1435 = vmatpush1.msra.mxu0 0.0
      %1436 = vmatprep.subr.mxu0 0.0
      %1437 = vmatpush1.msra.mxu0 0.0
      %1438 = vmatprep.subr.mxu0 0.0
      %1439 = vmatpush1.msra.mxu0 0.0
      %1440 = vmatprep.subr.mxu0 0.0
      %1441 = vmatpush1.msra.mxu0 %v1261
      %1442 = vmatprep.subr.mxu0 0.0
      %1443 = vmatpush2.msra.mxu0 0.0
      %1444 = vmatprep.subr.mxu0 0.0
      %1445 = vmatpush2.msra.mxu0 0.0
      %1446 = vmatprep.subr.mxu0 0.0
      %1447 = vmatpush2.msra.mxu0 0.0
      %1448 = vmatprep.subr.mxu0 0.0
      %1449 = vmatpush2.msra.mxu0 0.0
      %1450 = vmatprep.subr.mxu0 0.0
      %1451 = vmatpush2.msra.mxu0 0.0
      %1452 = vmatprep.subr.mxu0 0.0
      %1453 = vmatpush2.msra.mxu0 0.0
      %1454 = vmatprep.subr.mxu0 0.0
      %1455 = vmatpush2.msra.mxu0 0.0
      %1456 = vmatprep.subr.mxu0 0.0
      %1457 = vmatpush2.msra.mxu0 0.0
      %1458 = vmatprep.subr.mxu0 0.0
      %1459 = vmatpush2.msra.mxu0 0.0
      %1460 = vmatprep.subr.mxu0 0.0
      %1461 = vmatpush2.msra.mxu0 0.0
      %1462 = vmatprep.subr.mxu0 0.0
      %1463 = vmatpush2.msra.mxu0 0.0
      %1464 = vmatprep.subr.mxu0 0.0
      %1465 = vmatpush2.msra.mxu0 0.0
      %1466 = vmatprep.subr.mxu0 0.0
      %1467 = vmatpush2.msra.mxu0 0.0
      %1468 = vmatprep.subr.mxu0 0.0
      %1469 = vmatpush2.msra.mxu0 0.0
      %1470 = vmatprep.subr.mxu0 0.0
      %1471 = vmatpush2.msra.mxu0 0.0
      %1472 = vmatprep.subr.mxu0 0.0
      %1473 = vmatpush2.msra.mxu0 0.0
      %1474 = vmatprep.mubr.f32.mxu0 0.0
      %1475 = vmatmul.mubr.f32.gmra.mxu0 %v1192
      %v1476 = vpop.f32.mrf.mxu0
      %v1477 = vadd.f32 0.0, %v1476
      %v1478 = vpop.f32.mrf.mxu0
      %1479 = vdwg.mxu0
      %v1480 = vmul.f32 %v1477, 2.0
      %v1481 = vsub.f32 %v1480, %v418
      %s1482 = scalar_lea.vmem %s8, 32
      %v1483 = vld [vmem:[%s1482] sm:$0xff]
      %v1484 = vld [vmem:[%s1482 + $0x8] sm:$0xff]
      %v1486 = vsel %vm500, %v1481, 0
      %1488 = vmatprep.subr.mxu0 0.0
      %1489 = vmatpush1.msra.mxu0 0.0
      %1490 = vmatprep.subr.mxu0 0.0
      %1491 = vmatpush1.msra.mxu0 0.0
      %1492 = vmatprep.subr.mxu0 0.0
      %1493 = vmatpush1.msra.mxu0 0.0
      %1494 = vmatprep.subr.mxu0 0.0
      %1495 = vmatpush1.msra.mxu0 0.0
      %1496 = vmatprep.subr.mxu0 0.0
      %1497 = vmatpush1.msra.mxu0 0.0
      %1498 = vmatprep.subr.mxu0 0.0
      %1499 = vmatpush1.msra.mxu0 0.0
      %1500 = vmatprep.subr.mxu0 0.0
      %1501 = vmatpush1.msra.mxu0 0.0
      %1502 = vmatprep.subr.mxu0 0.0
      %1503 = vmatpush1.msra.mxu0 0.0
      %1504 = vmatprep.subr.mxu0 0.0
      %1505 = vmatpush1.msra.mxu0 0.0
      %1506 = vmatprep.subr.mxu0 0.0
      %1507 = vmatpush1.msra.mxu0 0.0
      %1508 = vmatprep.subr.mxu0 0.0
      %1509 = vmatpush1.msra.mxu0 0.0
      %1510 = vmatprep.subr.mxu0 0.0
      %1511 = vmatpush1.msra.mxu0 0.0
      %1512 = vmatprep.subr.mxu0 0.0
      %1513 = vmatpush1.msra.mxu0 0.0
      %1514 = vmatprep.subr.mxu0 0.0
      %1515 = vmatpush1.msra.mxu0 0.0
      %1516 = vmatprep.subr.mxu0 0.0
      %1517 = vmatpush1.msra.mxu0 %v1484
      %1518 = vmatprep.subr.mxu0 0.0
      %1519 = vmatpush1.msra.mxu0 %v1483
      %1520 = vmatprep.subr.mxu0 0.0
      %1521 = vmatpush2.msra.mxu0 0.0
      %1522 = vmatprep.subr.mxu0 0.0
      %1523 = vmatpush2.msra.mxu0 0.0
      %1524 = vmatprep.subr.mxu0 0.0
      %1525 = vmatpush2.msra.mxu0 0.0
      %1526 = vmatprep.subr.mxu0 0.0
      %1527 = vmatpush2.msra.mxu0 0.0
      %1528 = vmatprep.subr.mxu0 0.0
      %1529 = vmatpush2.msra.mxu0 0.0
      %1530 = vmatprep.subr.mxu0 0.0
      %1531 = vmatpush2.msra.mxu0 0.0
      %1532 = vmatprep.subr.mxu0 0.0
      %1533 = vmatpush2.msra.mxu0 0.0
      %1534 = vmatprep.subr.mxu0 0.0
      %1535 = vmatpush2.msra.mxu0 0.0
      %1536 = vmatprep.subr.mxu0 0.0
      %1537 = vmatpush2.msra.mxu0 0.0
      %1538 = vmatprep.subr.mxu0 0.0
      %1539 = vmatpush2.msra.mxu0 0.0
      %1540 = vmatprep.subr.mxu0 0.0
      %1541 = vmatpush2.msra.mxu0 0.0
      %1542 = vmatprep.subr.mxu0 0.0
      %1543 = vmatpush2.msra.mxu0 0.0
      %1544 = vmatprep.subr.mxu0 0.0
      %1545 = vmatpush2.msra.mxu0 0.0
      %1546 = vmatprep.subr.mxu0 0.0
      %1547 = vmatpush2.msra.mxu0 0.0
      %1548 = vmatprep.subr.mxu0 0.0
      %1549 = vmatpush2.msra.mxu0 0.0
      %1550 = vmatprep.subr.mxu0 0.0
      %1551 = vmatpush2.msra.mxu0 0.0
      %1552 = vmatprep.mubr.f32.mxu0 0.0
      %1553 = vmatmul.mubr.f32.gmra.mxu0 %v1486
      %v1554 = vpop.f32.mrf.mxu0
      %v1555 = vadd.f32 0.0, %v1554
      %v1556 = vpop.f32.mrf.mxu0
      %1557 = vdwg.mxu0
      %v1558 = vadd.f32 %v1407, %v1555
      %v1559 = vmul.f32 %v1188, %v419
      %v1560 = vld [vmem:[%s9] sm:$0xff]
      %v1561 = vld [vmem:[%s9 + $0x8] sm:$0xff]
      %v1563 = vsel %vm500, %v1559, 0
      %1565 = vmatprep.subr.mxu0 0.0
      %1566 = vmatpush1.msra.mxu0 0.0
      %1567 = vmatprep.subr.mxu0 0.0
      %1568 = vmatpush1.msra.mxu0 0.0
      %1569 = vmatprep.subr.mxu0 0.0
      %1570 = vmatpush1.msra.mxu0 0.0
      %1571 = vmatprep.subr.mxu0 0.0
      %1572 = vmatpush1.msra.mxu0 0.0
      %1573 = vmatprep.subr.mxu0 0.0
      %1574 = vmatpush1.msra.mxu0 0.0
      %1575 = vmatprep.subr.mxu0 0.0
      %1576 = vmatpush1.msra.mxu0 0.0
      %1577 = vmatprep.subr.mxu0 0.0
      %1578 = vmatpush1.msra.mxu0 0.0
      %1579 = vmatprep.subr.mxu0 0.0
      %1580 = vmatpush1.msra.mxu0 0.0
      %1581 = vmatprep.subr.mxu0 0.0
      %1582 = vmatpush1.msra.mxu0 0.0
      %1583 = vmatprep.subr.mxu0 0.0
      %1584 = vmatpush1.msra.mxu0 0.0
      %1585 = vmatprep.subr.mxu0 0.0
      %1586 = vmatpush1.msra.mxu0 0.0
      %1587 = vmatprep.subr.mxu0 0.0
      %1588 = vmatpush1.msra.mxu0 0.0
      %1589 = vmatprep.subr.mxu0 0.0
      %1590 = vmatpush1.msra.mxu0 0.0
      %1591 = vmatprep.subr.mxu0 0.0
      %1592 = vmatpush1.msra.mxu0 0.0
      %1593 = vmatprep.subr.mxu0 0.0
      %1594 = vmatpush1.msra.mxu0 %v1561
      %1595 = vmatprep.subr.mxu0 0.0
      %1596 = vmatpush1.msra.mxu0 %v1560
      %1597 = vmatprep.subr.mxu0 0.0
      %1598 = vmatpush2.msra.mxu0 0.0
      %1599 = vmatprep.subr.mxu0 0.0
      %1600 = vmatpush2.msra.mxu0 0.0
      %1601 = vmatprep.subr.mxu0 0.0
      %1602 = vmatpush2.msra.mxu0 0.0
      %1603 = vmatprep.subr.mxu0 0.0
      %1604 = vmatpush2.msra.mxu0 0.0
      %1605 = vmatprep.subr.mxu0 0.0
      %1606 = vmatpush2.msra.mxu0 0.0
      %1607 = vmatprep.subr.mxu0 0.0
      %1608 = vmatpush2.msra.mxu0 0.0
      %1609 = vmatprep.subr.mxu0 0.0
      %1610 = vmatpush2.msra.mxu0 0.0
      %1611 = vmatprep.subr.mxu0 0.0
      %1612 = vmatpush2.msra.mxu0 0.0
      %1613 = vmatprep.subr.mxu0 0.0
      %1614 = vmatpush2.msra.mxu0 0.0
      %1615 = vmatprep.subr.mxu0 0.0
      %1616 = vmatpush2.msra.mxu0 0.0
      %1617 = vmatprep.subr.mxu0 0.0
      %1618 = vmatpush2.msra.mxu0 0.0
      %1619 = vmatprep.subr.mxu0 0.0
      %1620 = vmatpush2.msra.mxu0 0.0
      %1621 = vmatprep.subr.mxu0 0.0
      %1622 = vmatpush2.msra.mxu0 0.0
      %1623 = vmatprep.subr.mxu0 0.0
      %1624 = vmatpush2.msra.mxu0 0.0
      %1625 = vmatprep.subr.mxu0 0.0
      %1626 = vmatpush2.msra.mxu0 0.0
      %1627 = vmatprep.subr.mxu0 0.0
      %1628 = vmatpush2.msra.mxu0 0.0
      %1629 = vmatprep.mubr.f32.mxu0 0.0
      %1630 = vmatmul.mubr.f32.gmra.mxu0 %v1563
      %v1631 = vpop.f32.mrf.mxu0
      %v1632 = vadd.f32 0.0, %v1631
      %v1633 = vpop.f32.mrf.mxu0
      %1634 = vdwg.mxu0
      %v1635 = vadd.f32 %v1558, %v1632
      %1636 = vmatprep.subr.mxu0 0.0
      %1637 = vmatpush1.msra.mxu0 0.0
      %1638 = vmatprep.subr.mxu0 0.0
      %1639 = vmatpush1.msra.mxu0 0.0
      %1640 = vmatprep.subr.mxu0 0.0
      %1641 = vmatpush1.msra.mxu0 0.0
      %1642 = vmatprep.subr.mxu0 0.0
      %1643 = vmatpush1.msra.mxu0 0.0
      %1644 = vmatprep.subr.mxu0 0.0
      %1645 = vmatpush1.msra.mxu0 0.0
      %1646 = vmatprep.subr.mxu0 0.0
      %1647 = vmatpush1.msra.mxu0 0.0
      %1648 = vmatprep.subr.mxu0 0.0
      %1649 = vmatpush1.msra.mxu0 0.0
      %1650 = vmatprep.subr.mxu0 0.0
      %1651 = vmatpush1.msra.mxu0 0.0
      %1652 = vmatprep.subr.mxu0 0.0
      %1653 = vmatpush1.msra.mxu0 0.0
      %1654 = vmatprep.subr.mxu0 0.0
      %1655 = vmatpush1.msra.mxu0 0.0
      %1656 = vmatprep.subr.mxu0 0.0
      %1657 = vmatpush1.msra.mxu0 0.0
      %1658 = vmatprep.subr.mxu0 0.0
      %1659 = vmatpush1.msra.mxu0 0.0
      %1660 = vmatprep.subr.mxu0 0.0
      %1661 = vmatpush1.msra.mxu0 0.0
      %1662 = vmatprep.subr.mxu0 0.0
      %1663 = vmatpush1.msra.mxu0 0.0
      %1664 = vmatprep.subr.mxu0 0.0
      %1665 = vmatpush1.msra.mxu0 0.0
      %1666 = vmatprep.subr.mxu0 0.0
      %1667 = vmatpush1.msra.mxu0 %v1559
      %1668 = vmatprep.subr.mxu0 0.0
      %1669 = vmatpush2.msra.mxu0 0.0
      %1670 = vmatprep.subr.mxu0 0.0
      %1671 = vmatpush2.msra.mxu0 0.0
      %1672 = vmatprep.subr.mxu0 0.0
      %1673 = vmatpush2.msra.mxu0 0.0
      %1674 = vmatprep.subr.mxu0 0.0
      %1675 = vmatpush2.msra.mxu0 0.0
      %1676 = vmatprep.subr.mxu0 0.0
      %1677 = vmatpush2.msra.mxu0 0.0
      %1678 = vmatprep.subr.mxu0 0.0
      %1679 = vmatpush2.msra.mxu0 0.0
      %1680 = vmatprep.subr.mxu0 0.0
      %1681 = vmatpush2.msra.mxu0 0.0
      %1682 = vmatprep.subr.mxu0 0.0
      %1683 = vmatpush2.msra.mxu0 0.0
      %1684 = vmatprep.subr.mxu0 0.0
      %1685 = vmatpush2.msra.mxu0 0.0
      %1686 = vmatprep.subr.mxu0 0.0
      %1687 = vmatpush2.msra.mxu0 0.0
      %1688 = vmatprep.subr.mxu0 0.0
      %1689 = vmatpush2.msra.mxu0 0.0
      %1690 = vmatprep.subr.mxu0 0.0
      %1691 = vmatpush2.msra.mxu0 0.0
      %1692 = vmatprep.subr.mxu0 0.0
      %1693 = vmatpush2.msra.mxu0 0.0
      %1694 = vmatprep.subr.mxu0 0.0
      %1695 = vmatpush2.msra.mxu0 0.0
      %1696 = vmatprep.subr.mxu0 0.0
      %1697 = vmatpush2.msra.mxu0 0.0
      %1698 = vmatprep.subr.mxu0 0.0
      %1699 = vmatpush2.msra.mxu0 0.0
      %1700 = vmatprep.mubr.f32.mxu0 0.0
      %1701 = vmatmul.mubr.f32.gmra.mxu0 %v1192
      %v1702 = vpop.f32.mrf.mxu0
      %v1703 = vadd.f32 0.0, %v1702
      %v1704 = vpop.f32.mrf.mxu0
      %1705 = vdwg.mxu0
      %s1706 = scalar_lea.vmem %s9, 16
      %v1707 = vld [vmem:[%s1706] sm:$0xff]
      %v1708 = vld [vmem:[%s1706 + $0x8] sm:$0xff]
      %v1710 = vsel %vm500, %v1703, 0
      %1712 = vmatprep.subr.mxu0 0.0
      %1713 = vmatpush1.msra.mxu0 0.0
      %1714 = vmatprep.subr.mxu0 0.0
      %1715 = vmatpush1.msra.mxu0 0.0
      %1716 = vmatprep.subr.mxu0 0.0
      %1717 = vmatpush1.msra.mxu0 0.0
      %1718 = vmatprep.subr.mxu0 0.0
      %1719 = vmatpush1.msra.mxu0 0.0
      %1720 = vmatprep.subr.mxu0 0.0
      %1721 = vmatpush1.msra.mxu0 0.0
      %1722 = vmatprep.subr.mxu0 0.0
      %1723 = vmatpush1.msra.mxu0 0.0
      %1724 = vmatprep.subr.mxu0 0.0
      %1725 = vmatpush1.msra.mxu0 0.0
      %1726 = vmatprep.subr.mxu0 0.0
      %1727 = vmatpush1.msra.mxu0 0.0
      %1728 = vmatprep.subr.mxu0 0.0
      %1729 = vmatpush1.msra.mxu0 0.0
      %1730 = vmatprep.subr.mxu0 0.0
      %1731 = vmatpush1.msra.mxu0 0.0
      %1732 = vmatprep.subr.mxu0 0.0
      %1733 = vmatpush1.msra.mxu0 0.0
      %1734 = vmatprep.subr.mxu0 0.0
      %1735 = vmatpush1.msra.mxu0 0.0
      %1736 = vmatprep.subr.mxu0 0.0
      %1737 = vmatpush1.msra.mxu0 0.0
      %1738 = vmatprep.subr.mxu0 0.0
      %1739 = vmatpush1.msra.mxu0 0.0
      %1740 = vmatprep.subr.mxu0 0.0
      %1741 = vmatpush1.msra.mxu0 %v1708
      %1742 = vmatprep.subr.mxu0 0.0
      %1743 = vmatpush1.msra.mxu0 %v1707
      %1744 = vmatprep.subr.mxu0 0.0
      %1745 = vmatpush2.msra.mxu0 0.0
      %1746 = vmatprep.subr.mxu0 0.0
      %1747 = vmatpush2.msra.mxu0 0.0
      %1748 = vmatprep.subr.mxu0 0.0
      %1749 = vmatpush2.msra.mxu0 0.0
      %1750 = vmatprep.subr.mxu0 0.0
      %1751 = vmatpush2.msra.mxu0 0.0
      %1752 = vmatprep.subr.mxu0 0.0
      %1753 = vmatpush2.msra.mxu0 0.0
      %1754 = vmatprep.subr.mxu0 0.0
      %1755 = vmatpush2.msra.mxu0 0.0
      %1756 = vmatprep.subr.mxu0 0.0
      %1757 = vmatpush2.msra.mxu0 0.0
      %1758 = vmatprep.subr.mxu0 0.0
      %1759 = vmatpush2.msra.mxu0 0.0
      %1760 = vmatprep.subr.mxu0 0.0
      %1761 = vmatpush2.msra.mxu0 0.0
      %1762 = vmatprep.subr.mxu0 0.0
      %1763 = vmatpush2.msra.mxu0 0.0
      %1764 = vmatprep.subr.mxu0 0.0
      %1765 = vmatpush2.msra.mxu0 0.0
      %1766 = vmatprep.subr.mxu0 0.0
      %1767 = vmatpush2.msra.mxu0 0.0
      %1768 = vmatprep.subr.mxu0 0.0
      %1769 = vmatpush2.msra.mxu0 0.0
      %1770 = vmatprep.subr.mxu0 0.0
      %1771 = vmatpush2.msra.mxu0 0.0
      %1772 = vmatprep.subr.mxu0 0.0
      %1773 = vmatpush2.msra.mxu0 0.0
      %1774 = vmatprep.subr.mxu0 0.0
      %1775 = vmatpush2.msra.mxu0 0.0
      %1776 = vmatprep.mubr.f32.mxu0 0.0
      %1777 = vmatmul.mubr.f32.gmra.mxu0 %v1710
      %v1778 = vpop.f32.mrf.mxu0
      %v1779 = vadd.f32 0.0, %v1778
      %v1780 = vpop.f32.mrf.mxu0
      %1781 = vdwg.mxu0
      %v1782 = vadd.f32 %v1635, %v1779
      %1783 = vmatprep.subr.mxu0 0.0
      %1784 = vmatpush1.msra.mxu0 0.0
      %1785 = vmatprep.subr.mxu0 0.0
      %1786 = vmatpush1.msra.mxu0 0.0
      %1787 = vmatprep.subr.mxu0 0.0
      %1788 = vmatpush1.msra.mxu0 0.0
      %1789 = vmatprep.subr.mxu0 0.0
      %1790 = vmatpush1.msra.mxu0 0.0
      %1791 = vmatprep.subr.mxu0 0.0
      %1792 = vmatpush1.msra.mxu0 0.0
      %1793 = vmatprep.subr.mxu0 0.0
      %1794 = vmatpush1.msra.mxu0 0.0
      %1795 = vmatprep.subr.mxu0 0.0
      %1796 = vmatpush1.msra.mxu0 0.0
      %1797 = vmatprep.subr.mxu0 0.0
      %1798 = vmatpush1.msra.mxu0 0.0
      %1799 = vmatprep.subr.mxu0 0.0
      %1800 = vmatpush1.msra.mxu0 0.0
      %1801 = vmatprep.subr.mxu0 0.0
      %1802 = vmatpush1.msra.mxu0 0.0
      %1803 = vmatprep.subr.mxu0 0.0
      %1804 = vmatpush1.msra.mxu0 0.0
      %1805 = vmatprep.subr.mxu0 0.0
      %1806 = vmatpush1.msra.mxu0 0.0
      %1807 = vmatprep.subr.mxu0 0.0
      %1808 = vmatpush1.msra.mxu0 0.0
      %1809 = vmatprep.subr.mxu0 0.0
      %1810 = vmatpush1.msra.mxu0 0.0
      %1811 = vmatprep.subr.mxu0 0.0
      %1812 = vmatpush1.msra.mxu0 0.0
      %1813 = vmatprep.subr.mxu0 0.0
      %1814 = vmatpush1.msra.mxu0 %v1703
      %1815 = vmatprep.subr.mxu0 0.0
      %1816 = vmatpush2.msra.mxu0 0.0
      %1817 = vmatprep.subr.mxu0 0.0
      %1818 = vmatpush2.msra.mxu0 0.0
      %1819 = vmatprep.subr.mxu0 0.0
      %1820 = vmatpush2.msra.mxu0 0.0
      %1821 = vmatprep.subr.mxu0 0.0
      %1822 = vmatpush2.msra.mxu0 0.0
      %1823 = vmatprep.subr.mxu0 0.0
      %1824 = vmatpush2.msra.mxu0 0.0
      %1825 = vmatprep.subr.mxu0 0.0
      %1826 = vmatpush2.msra.mxu0 0.0
      %1827 = vmatprep.subr.mxu0 0.0
      %1828 = vmatpush2.msra.mxu0 0.0
      %1829 = vmatprep.subr.mxu0 0.0
      %1830 = vmatpush2.msra.mxu0 0.0
      %1831 = vmatprep.subr.mxu0 0.0
      %1832 = vmatpush2.msra.mxu0 0.0
      %1833 = vmatprep.subr.mxu0 0.0
      %1834 = vmatpush2.msra.mxu0 0.0
      %1835 = vmatprep.subr.mxu0 0.0
      %1836 = vmatpush2.msra.mxu0 0.0
      %1837 = vmatprep.subr.mxu0 0.0
      %1838 = vmatpush2.msra.mxu0 0.0
      %1839 = vmatprep.subr.mxu0 0.0
      %1840 = vmatpush2.msra.mxu0 0.0
      %1841 = vmatprep.subr.mxu0 0.0
      %1842 = vmatpush2.msra.mxu0 0.0
      %1843 = vmatprep.subr.mxu0 0.0
      %1844 = vmatpush2.msra.mxu0 0.0
      %1845 = vmatprep.subr.mxu0 0.0
      %1846 = vmatpush2.msra.mxu0 0.0
      %1847 = vmatprep.mubr.f32.mxu0 0.0
      %1848 = vmatmul.mubr.f32.gmra.mxu0 %v1192
      %v1849 = vpop.f32.mrf.mxu0
      %v1850 = vadd.f32 0.0, %v1849
      %v1851 = vpop.f32.mrf.mxu0
      %1852 = vdwg.mxu0
      %v1853 = vmul.f32 %v1850, 2.0
      %v1854 = vsub.f32 %v1853, %v1559
      %s1855 = scalar_lea.vmem %s9, 32
      %v1856 = vld [vmem:[%s1855] sm:$0xff]
      %v1857 = vld [vmem:[%s1855 + $0x8] sm:$0xff]
      %v1859 = vsel %vm500, %v1854, 0
      %1861 = vmatprep.subr.mxu0 0.0
      %1862 = vmatpush1.msra.mxu0 0.0
      %1863 = vmatprep.subr.mxu0 0.0
      %1864 = vmatpush1.msra.mxu0 0.0
      %1865 = vmatprep.subr.mxu0 0.0
      %1866 = vmatpush1.msra.mxu0 0.0
      %1867 = vmatprep.subr.mxu0 0.0
      %1868 = vmatpush1.msra.mxu0 0.0
      %1869 = vmatprep.subr.mxu0 0.0
      %1870 = vmatpush1.msra.mxu0 0.0
      %1871 = vmatprep.subr.mxu0 0.0
      %1872 = vmatpush1.msra.mxu0 0.0
      %1873 = vmatprep.subr.mxu0 0.0
      %1874 = vmatpush1.msra.mxu0 0.0
      %1875 = vmatprep.subr.mxu0 0.0
      %1876 = vmatpush1.msra.mxu0 0.0
      %1877 = vmatprep.subr.mxu0 0.0
      %1878 = vmatpush1.msra.mxu0 0.0
      %1879 = vmatprep.subr.mxu0 0.0
      %1880 = vmatpush1.msra.mxu0 0.0
      %1881 = vmatprep.subr.mxu0 0.0
      %1882 = vmatpush1.msra.mxu0 0.0
      %1883 = vmatprep.subr.mxu0 0.0
      %1884 = vmatpush1.msra.mxu0 0.0
      %1885 = vmatprep.subr.mxu0 0.0
      %1886 = vmatpush1.msra.mxu0 0.0
      %1887 = vmatprep.subr.mxu0 0.0
      %1888 = vmatpush1.msra.mxu0 0.0
      %1889 = vmatprep.subr.mxu0 0.0
      %1890 = vmatpush1.msra.mxu0 %v1857
      %1891 = vmatprep.subr.mxu0 0.0
      %1892 = vmatpush1.msra.mxu0 %v1856
      %1893 = vmatprep.subr.mxu0 0.0
      %1894 = vmatpush2.msra.mxu0 0.0
      %1895 = vmatprep.subr.mxu0 0.0
      %1896 = vmatpush2.msra.mxu0 0.0
      %1897 = vmatprep.subr.mxu0 0.0
      %1898 = vmatpush2.msra.mxu0 0.0
      %1899 = vmatprep.subr.mxu0 0.0
      %1900 = vmatpush2.msra.mxu0 0.0
      %1901 = vmatprep.subr.mxu0 0.0
      %1902 = vmatpush2.msra.mxu0 0.0
      %1903 = vmatprep.subr.mxu0 0.0
      %1904 = vmatpush2.msra.mxu0 0.0
      %1905 = vmatprep.subr.mxu0 0.0
      %1906 = vmatpush2.msra.mxu0 0.0
      %1907 = vmatprep.subr.mxu0 0.0
      %1908 = vmatpush2.msra.mxu0 0.0
      %1909 = vmatprep.subr.mxu0 0.0
      %1910 = vmatpush2.msra.mxu0 0.0
      %1911 = vmatprep.subr.mxu0 0.0
      %1912 = vmatpush2.msra.mxu0 0.0
      %1913 = vmatprep.subr.mxu0 0.0
      %1914 = vmatpush2.msra.mxu0 0.0
      %1915 = vmatprep.subr.mxu0 0.0
      %1916 = vmatpush2.msra.mxu0 0.0
      %1917 = vmatprep.subr.mxu0 0.0
      %1918 = vmatpush2.msra.mxu0 0.0
      %1919 = vmatprep.subr.mxu0 0.0
      %1920 = vmatpush2.msra.mxu0 0.0
      %1921 = vmatprep.subr.mxu0 0.0
      %1922 = vmatpush2.msra.mxu0 0.0
      %1923 = vmatprep.subr.mxu0 0.0
      %1924 = vmatpush2.msra.mxu0 0.0
      %1925 = vmatprep.mubr.f32.mxu0 0.0
      %1926 = vmatmul.mubr.f32.gmra.mxu0 %v1859
      %v1927 = vpop.f32.mrf.mxu0
      %v1928 = vadd.f32 0.0, %v1927
      %v1929 = vpop.f32.mrf.mxu0
      %1930 = vdwg.mxu0
      %v1931 = vadd.f32 %v1782, %v1928
      %v1932 = vld [vmem:[%s10] sm:$0x1]
      %v1934 = vlaneseq
      %v1935 = vshrl.u32 %v1934, 7
      %v1936 = vsub.s32 0, %v1935
      %v1937 = vrot.slane %v1932, %v1936
      %v1939 = vadd.f32 %v1931, %v1937
      %v1940 = vtanh.pop %v1939
      %1942 = vrot.lane.b32.xlu0 %v419, 16
      %v1943 = vpop.permute.xlu0 %1942
      %v1945 = vmul.f32 %v1188, %v1943
      %v1946 = vsub.f32 1.0, %v1188
      %1948 = vrot.lane.b32.xlu0 %v1940, 16
      %v1949 = vpop.permute.xlu0 %1948
      %v1951 = vmul.f32 %v1946, %v1949
      %v1952 = vadd.f32 %v1945, %v1951
      %1954 = vrot.lane.b32.xlu0 %v1952, 112
      %v1955 = vpop.permute.xlu0 %1954
      %1957 = vst.msk [vmem:[%s415] sm:$0xff] %vm500, %v1955
      %p1958 = scmp.lt.s32.totalorder %s22, 1
      %s1959 = scalar_select %p1958, %s22, 1
      %s1960 = smul.addr %s1959, 8
      %s1961 = scalar_lea.vmem %s11, %s1960
      // Predicated region
      $region65: #{encoder_forward.5} parent=63 // pred_check
        %p1962 = pneg %p286
      $region66: #{encoder_forward.5} parent=63 // pred_check_branch
        %1964 = sbr.rel (%p1962) target = $region68
      $region67: #{encoder_forward.5} parent=63 // pred_region
        _
      $region68: #{encoder_forward.5} parent=63 // pred_fallthru
        _
    $region64: #{encoder_forward.5} parent=5 // pred_fallthru
      _
    %p1965 = scmp.le.s32.totalorder 2, %s17
    // Predicated region
    $region69: #{encoder_forward.5} parent=5 // pred_check
      %p1966 = pneg %p1965
    $region70: #{encoder_forward.5} parent=5 // pred_check_branch
      %1968 = sbr.rel (%p1966) target = $region72
    $region71: #{encoder_forward.5} parent=5 // pred_region
      %s1969 = ssub.s32 %s17, 2
      // Predicated region
      $region73: #{encoder_forward.5} parent=71 // pred_check
        %p1970 = pneg %p292
      $region74: #{encoder_forward.5} parent=71 // pred_check_branch
        %1972 = sbr.rel (%p1970) target = $region76
      $region75: #{encoder_forward.5} parent=71 // pred_region
        %p1973 = scmp.lt.s32.totalorder %s23, 1
        %s1974 = scalar_select %p1973, %s23, 1
        %s1975 = smul.addr %s1974, 8
        %s1976 = scalar_lea.vmem %s11, %s1975
      $region76: #{encoder_forward.5} parent=71 // pred_fallthru
        _
    $region72: #{encoder_forward.5} parent=5 // pred_fallthru
      _
  $region6: #{encoder_forward.5} parent=0 // loop_footer
    %s21 = sadd.s32 1, %s17
  $region7: #{encoder_forward.5} parent=0 // loop_footer_branch
    %16 = sbr.rel target = $region3
  $region8: #{encoder_forward.5} parent=0 // loop_exit
    _

</llo_original>
